<compile_context>
chip_gen: v6e
topology: v6e:2x2x1
jax: 0.10.0
libtpu: 0.0.40
codegen_flags: <defaults>
</compile_context>

<pallas_src>
import functools

import numpy as np
import jax
import jax.numpy as jnp
from jax.experimental import pallas as pl
from jax.experimental.pallas import tpu as pltpu

SQRT_HALF = np.float32(np.sqrt(0.5))
LN_EPS = np.float32(1e-5)
F32 = jnp.float32
BF16 = jnp.bfloat16


# ----------------------------- kernel helpers ------------------------------

def _layernorm(z, gamma, beta):
    """LayerNorm over the last axis, f32 in / f32 out, centered two-pass form."""
    inv_n = np.float32(1.0 / z.shape[-1])
    m = jnp.sum(z, axis=-1, keepdims=True) * inv_n
    zc = z - m
    v = jnp.sum(zc * zc, axis=-1, keepdims=True) * inv_n
    r = jax.lax.rsqrt(v + LN_EPS)
    return zc * r * gamma + beta


def _glu(z_bf16, w_bf16, b, gamma, beta, od):
    """GLU: one bf16 MXU dot over the full 2*od width, fused LN, lane split."""
    h = jnp.dot(z_bf16, w_bf16, preferred_element_type=F32) + b
    h_n = _layernorm(h, gamma, beta)
    return h_n[:, :od] * jax.nn.sigmoid(h_n[:, od:])


# --------------------------------- kernel ----------------------------------

def decision_step_kernel(x_ref, a_ref, pri_ref,
                         wf_ref, bf_ref, lnf_g_ref, lnf_b_ref,
                         w0_ref, b0_ref, ln0_g_ref, ln0_b_ref,
                         wres_ref, bres_ref, lnres_g_ref, lnres_b_ref,
                         out_ref, loss_ref, *, valid_rows):
    od = out_ref.shape[-1]
    tb = x_ref.shape[0]

    # ---- AttentionTransformer: mask = sigmoid(LN(a @ Wf + bf) * priors) ----
    # bf16 operands on the MXU, f32 accumulation; f32 only for the epilogue.
    a_lin = (jnp.dot(a_ref[...], wf_ref[...], preferred_element_type=F32)
             + bf_ref[...])
    a_ln = _layernorm(a_lin, lnf_g_ref[...], lnf_b_ref[...])
    mask = jax.nn.sigmoid(a_ln * pri_ref[...].astype(F32))

    # ---- entropy-loss partial sum (padded tail rows masked out) -----------
    row = (jax.lax.broadcasted_iota(jnp.int32, mask.shape, 0)
           + pl.program_id(0) * tb)
    neg_ent = jnp.where(row < valid_rows, -mask * jnp.log(mask + 1e-10), 0.0)
    loss_ref[...] = jnp.broadcast_to(jnp.sum(neg_ent), loss_ref.shape)

    # ---- FeatureTransformer on (x * mask) ----------------------------------
    xm = (x_ref[...].astype(F32) * mask).astype(BF16)
    h = _glu(xm, w0_ref[...], b0_ref[...], ln0_g_ref[...], ln0_b_ref[...], od)

    n_res = wres_ref.shape[0]

    def res_body(i, h):
        g = _glu(h.astype(BF16), wres_ref[i], bres_ref[i],
                 lnres_g_ref[i], lnres_b_ref[i], od)
        return (h + g) * SQRT_HALF

    h = jax.lax.fori_loop(0, n_res, res_body, h, unroll=True)
    out_ref[...] = h.astype(out_ref.dtype)


# -------------------------------- wrapper -----------------------------------

def _round_up(n, m):
    return ((n + m - 1) // m) * m


def decision_step(x, a, priors, params, *,
                  block_batch=2048,
                  vmem_limit_bytes=48 * 1024 * 1024):
    """Run one TabNet DecisionStep.

    Activations / matmul weights are stored bf16 (cast here if needed); biases
    and LayerNorm affine params are stored f32.  block_batch=2048 keeps the
    real VMEM footprint to a few MiB (safe under v7x's 64 MiB); v5e/v6e can go
    2x larger, and on v7x prefer B large enough for >=2 (even) tiles so both
    TensorCores are fed.
    """
    B, inp_dim = x.shape
    n_a = a.shape[1]
    od = params["w0"].shape[1] // 2

    # ---- batch tile: multiple of 16 (bf16 native sublane tile), bounded by
    # block_batch; B is zero-padded to a multiple of TB (no whole-batch
    # fallback for awkward B).
    TB = min(max(16, (block_batch // 16) * 16), _round_up(B, 16))
    B_pad = _round_up(B, TB)
    num_tiles = B_pad // TB
    if B_pad != B:
        pad = ((0, B_pad - B), (0, 0))
        x, a, priors = jnp.pad(x, pad), jnp.pad(a, pad), jnp.pad(priors, pad)

    # Matmul weights stay bf16 (MXU-native); biases / LN affine converted to
    # f32 once host-side so the kernel never re-casts resident params.
    to_bf16 = lambda t: t.astype(BF16)
    to_f32 = lambda t: t.astype(F32)
    x, a, priors = to_bf16(x), to_bf16(a), to_bf16(priors)
    wf, w0, wres = (to_bf16(params["wf"]), to_bf16(params["w0"]),
                    to_bf16(params["wres"]))
    bf, lnf_g, lnf_b = (to_f32(params["bf"]), to_f32(params["lnf_g"]),
                        to_f32(params["lnf_b"]))
    b0, ln0_g, ln0_b = (to_f32(params["b0"]), to_f32(params["ln0_g"]),
                        to_f32(params["ln0_b"]))
    bres, lnres_g, lnres_b = (to_f32(params["bres"]), to_f32(params["lnres_g"]),
                              to_f32(params["lnres_b"]))

    batch_map = lambda i: (i, 0)

    def resident(arr):  # full-array block, constant index -> fetched once
        nd = arr.ndim
        return pl.BlockSpec(arr.shape, lambda i, nd=nd: (0,) * nd)

    in_specs = [
        pl.BlockSpec((TB, inp_dim), batch_map),    # x
        pl.BlockSpec((TB, n_a), batch_map),        # a
        pl.BlockSpec((TB, inp_dim), batch_map),    # priors
        resident(wf), resident(bf), resident(lnf_g), resident(lnf_b),
        resident(w0), resident(b0), resident(ln0_g), resident(ln0_b),
        resident(wres), resident(bres), resident(lnres_g), resident(lnres_b),
    ]
    out_shape = (jax.ShapeDtypeStruct((B_pad, od), BF16),
                 jax.ShapeDtypeStruct((num_tiles, 8, 128), F32))
    out_specs = (pl.BlockSpec((TB, od), batch_map),
                 pl.BlockSpec((1, 8, 128), lambda i: (i, 0, 0)))

    kernel = pl.pallas_call(
        functools.partial(decision_step_kernel, valid_rows=B),
        grid=(num_tiles,),
        in_specs=in_specs,
        out_specs=out_specs,
        out_shape=out_shape,
        compiler_params=pltpu.CompilerParams(
            dimension_semantics=("parallel",),
            vmem_limit_bytes=vmem_limit_bytes),
    )
    out_pad, loss_parts = kernel(
        x, a, priors,
        wf, bf, lnf_g, lnf_b,
        w0, b0, ln0_g, ln0_b,
        wres, bres, lnres_g, lnres_b)

    out = out_pad[:B]
    # Finish the entropy mean with the *global* (unpadded) element count.
    loss = jnp.sum(loss_parts[:, 0, 0]) * np.float32(1.0 / (B * inp_dim))
    return out, loss


# ------------------------------ pure-JAX reference ---------------------------

def decision_step_ref(x, a, priors, params):
    """Mirrors the PyTorch forward (f32 math on the provided storage values)."""
    x, a, priors = x.astype(F32), a.astype(F32), priors.astype(F32)
    p = {k: v.astype(F32) for k, v in params.items()}

    def ln(z, g, b):
        m = z.mean(-1, keepdims=True)
        v = ((z - m) ** 2).mean(-1, keepdims=True)
        return (z - m) / jnp.sqrt(v + LN_EPS) * g + b

    def glu(z, w, bias, g, beta, od):
        h = ln(z @ w + bias, g, beta)
        return h[:, :od] * jax.nn.sigmoid(h[:, od:])

    a_ln = ln(a @ p["wf"] + p["bf"], p["lnf_g"], p["lnf_b"])
    mask = jax.nn.sigmoid(a_ln * priors)
    loss = jnp.mean(-mask * jnp.log(mask + 1e-10))
    od = p["w0"].shape[1] // 2
    h = glu(x * mask, p["w0"], p["b0"], p["ln0_g"], p["ln0_b"], od)
    for i in range(p["wres"].shape[0]):
        h = (h + glu(h, p["wres"][i], p["bres"][i],
                     p["lnres_g"][i], p["lnres_b"][i], od)) * SQRT_HALF
    return h, loss


# --------------------------------- params -----------------------------------

def make_params(key, inp_dim, n_d, n_a, n_shared, n_ind):
    od = n_d + n_a
    n_res = (n_shared - 1) + n_ind
    ks = jax.random.split(key, 12)
    scale = lambda fan_in: 1.0 / np.sqrt(fan_in)
    # LayerNorm gamma/beta perturbed from (1, 0) so the affine path is exercised.
    return {
        "wf": jax.random.normal(ks[0], (n_a, inp_dim), F32) * scale(n_a),
        "bf": jax.random.normal(ks[1], (1, inp_dim), F32) * 0.1,
        "lnf_g": 1.0 + 0.1 * jax.random.normal(ks[2], (1, inp_dim), F32),
        "lnf_b": 0.1 * jax.random.normal(ks[3], (1, inp_dim), F32),
        "w0": jax.random.normal(ks[4], (inp_dim, 2 * od), F32) * scale(inp_dim),
        "b0": jax.random.normal(ks[5], (1, 2 * od), F32) * 0.1,
        "ln0_g": 1.0 + 0.1 * jax.random.normal(ks[6], (1, 2 * od), F32),
        "ln0_b": 0.1 * jax.random.normal(ks[7], (1, 2 * od), F32),
        "wres": jax.random.normal(ks[8], (n_res, od, 2 * od), F32) * scale(od),
        "bres": jax.random.normal(ks[9], (n_res, 1, 2 * od), F32) * 0.1,
        "lnres_g": 1.0 + 0.1 * jax.random.normal(ks[10], (n_res, 1, 2 * od), F32),
        "lnres_b": 0.1 * jax.random.normal(ks[11], (n_res, 1, 2 * od), F32),
    }


if __name__ == "__main__":
    # Small, module-consistent shapes; B=200 with block_batch=128 exercises a
    # 2-tile grid with a zero-padded tail (the new robust-tiling path).  In
    # production leave block_batch at its default (2048).
    B, inp_dim, n_d, n_a = 200, 32, 16, 16      # out_dim = n_d + n_a = 32
    n_shared, n_ind = 2, 2                      # n_res = 3 residual GLUs

    key = jax.random.PRNGKey(0)
    kx, ka, kw = jax.random.split(key, 3)
    x = jax.random.normal(kx, (B, inp_dim), F32)
    a = jax.random.normal(ka, (B, n_a), F32)
    priors = jnp.ones((B, inp_dim), F32)
    params = make_params(kw, inp_dim, n_d, n_a, n_shared, n_ind)

    # Pre-truncate activations and matmul weights to bf16 so the kernel and
    # the f32 reference consume identical stored values; remaining differences
    # come only from bf16 intermediate casts inside the kernel.
    xb, ab, pb = x.astype(BF16), a.astype(BF16), priors.astype(BF16)
    params_b = dict(params)
    for k in ("wf", "w0", "wres"):
        params_b[k] = params[k].astype(BF16)

    out, loss = decision_step(xb, ab, pb, params_b, block_batch=128)
    jax.block_until_ready((out, loss))

    out_ref, loss_ref = decision_step_ref(xb, ab, pb, params_b)

    assert out.shape == (B, n_d + n_a) and loss.shape == ()
    # bf16 output + bf16 intermediate casts between residual GLUs -> slightly
    # wider tolerance on the feature output than the (bit-near-exact) loss.
    assert jnp.allclose(out.astype(F32), out_ref, atol=5e-2, rtol=5e-2)
    assert jnp.allclose(loss, loss_ref, atol=2e-3, rtol=2e-3)

    print("KERNEL_OK")
</pallas_src>

<mosaic_0001>
module attributes {stable_mosaic.version = 11 : i64} {
  func.func @decision_step_kernel(%arg0: i32, %arg1: memref<128x32xbf16, #tpu.memory_space<vmem>>, %arg2: memref<128x16xbf16, #tpu.memory_space<vmem>>, %arg3: memref<128x32xbf16, #tpu.memory_space<vmem>>, %arg4: memref<16x32xbf16, #tpu.memory_space<vmem>>, %arg5: memref<1x32xf32, #tpu.memory_space<vmem>>, %arg6: memref<1x32xf32, #tpu.memory_space<vmem>>, %arg7: memref<1x32xf32, #tpu.memory_space<vmem>>, %arg8: memref<32x64xbf16, #tpu.memory_space<vmem>>, %arg9: memref<1x64xf32, #tpu.memory_space<vmem>>, %arg10: memref<1x64xf32, #tpu.memory_space<vmem>>, %arg11: memref<1x64xf32, #tpu.memory_space<vmem>>, %arg12: memref<3x32x64xbf16, #tpu.memory_space<vmem>>, %arg13: memref<3x1x64xf32, #tpu.memory_space<vmem>>, %arg14: memref<3x1x64xf32, #tpu.memory_space<vmem>>, %arg15: memref<3x1x64xf32, #tpu.memory_space<vmem>>, %arg16: memref<128x32xbf16, #tpu.memory_space<vmem>>, %arg17: memref<1x8x128xf32, #tpu.memory_space<vmem>>) attributes {dimension_semantics = [#tpu.dimension_semantics<parallel>], iteration_bounds = array<i64: 2>, scalar_prefetch = 0 : i64, scratch_operands = 0 : i64, tpu.core_type = #tpu.core_type<tc>, window_params = [{transform_indices = @transform_0, window_bounds = array<i64: 128, 32>}, {transform_indices = @transform_1, window_bounds = array<i64: 128, 16>}, {transform_indices = @transform_2, window_bounds = array<i64: 128, 32>}, {pipeline_mode = #tpu.pipeline_mode<synchronous>, transform_indices = @transform_3, window_bounds = array<i64: 16, 32>}, {pipeline_mode = #tpu.pipeline_mode<synchronous>, transform_indices = @transform_4, window_bounds = array<i64: 1, 32>}, {pipeline_mode = #tpu.pipeline_mode<synchronous>, transform_indices = @transform_5, window_bounds = array<i64: 1, 32>}, {pipeline_mode = #tpu.pipeline_mode<synchronous>, transform_indices = @transform_6, window_bounds = array<i64: 1, 32>}, {pipeline_mode = #tpu.pipeline_mode<synchronous>, transform_indices = @transform_7, window_bounds = array<i64: 32, 64>}, {pipeline_mode = #tpu.pipeline_mode<synchronous>, transform_indices = @transform_8, window_bounds = array<i64: 1, 64>}, {pipeline_mode = #tpu.pipeline_mode<synchronous>, transform_indices = @transform_9, window_bounds = array<i64: 1, 64>}, {pipeline_mode = #tpu.pipeline_mode<synchronous>, transform_indices = @transform_10, window_bounds = array<i64: 1, 64>}, {pipeline_mode = #tpu.pipeline_mode<synchronous>, transform_indices = @transform_11, window_bounds = array<i64: 3, 32, 64>}, {pipeline_mode = #tpu.pipeline_mode<synchronous>, transform_indices = @transform_12, window_bounds = array<i64: 3, 1, 64>}, {pipeline_mode = #tpu.pipeline_mode<synchronous>, transform_indices = @transform_13, window_bounds = array<i64: 3, 1, 64>}, {pipeline_mode = #tpu.pipeline_mode<synchronous>, transform_indices = @transform_14, window_bounds = array<i64: 3, 1, 64>}, {transform_indices = @transform_15, window_bounds = array<i64: 128, 32>}, {transform_indices = @transform_16, window_bounds = array<i64: 1, 8, 128>}]} {
    %c0 = arith.constant 0 : index
    %c0_0 = arith.constant 0 : index
    %0 = vector.load %arg2[%c0, %c0_0] : memref<128x16xbf16, #tpu.memory_space<vmem>>, vector<128x16xbf16>
    %c0_1 = arith.constant 0 : index
    %c0_2 = arith.constant 0 : index
    %1 = vector.load %arg4[%c0_1, %c0_2] : memref<16x32xbf16, #tpu.memory_space<vmem>>, vector<16x32xbf16>
    %cst = arith.constant dense<0.000000e+00> : vector<128x32xf32>
    %2 = tpu.matmul %0, %1, %cst {dimension_numbers = #tpu.dot_dimension_numbers<[1], [0], [0], [1], [0, 0, 1, 1], [], []>} : vector<128x16xbf16>, vector<16x32xbf16>, vector<128x32xf32> -> vector<128x32xf32>
    %c0_3 = arith.constant 0 : index
    %c0_4 = arith.constant 0 : index
    %3 = vector.load %arg5[%c0_3, %c0_4] : memref<1x32xf32, #tpu.memory_space<vmem>>, vector<1x32xf32>
    %4 = vector.broadcast %3 : vector<1x32xf32> to vector<128x32xf32>
    %5 = arith.addf %2, %4 : vector<128x32xf32>
    %c0_5 = arith.constant 0 : index
    %c0_6 = arith.constant 0 : index
    %6 = vector.load %arg6[%c0_5, %c0_6] : memref<1x32xf32, #tpu.memory_space<vmem>>, vector<1x32xf32>
    %c0_7 = arith.constant 0 : index
    %c0_8 = arith.constant 0 : index
    %7 = vector.load %arg7[%c0_7, %c0_8] : memref<1x32xf32, #tpu.memory_space<vmem>>, vector<1x32xf32>
    %cst_9 = arith.constant dense<0.000000e+00> : vector<128xf32>
    %8 = vector.multi_reduction <add>, %5, %cst_9 [1] : vector<128x32xf32> to vector<128xf32>
    %9 = vector.shape_cast %8 : vector<128xf32> to vector<128x1xf32>
    %cst_10 = arith.constant 3.125000e-02 : f32
    %10 = vector.broadcast %cst_10 : f32 to vector<128x1xf32>
    %11 = arith.mulf %9, %10 : vector<128x1xf32>
    %12 = vector.broadcast %11 : vector<128x1xf32> to vector<128x32xf32>
    %13 = arith.subf %5, %12 : vector<128x32xf32>
    %14 = arith.mulf %13, %13 : vector<128x32xf32>
    %cst_11 = arith.constant dense<0.000000e+00> : vector<128xf32>
    %15 = vector.multi_reduction <add>, %14, %cst_11 [1] : vector<128x32xf32> to vector<128xf32>
    %16 = vector.shape_cast %15 : vector<128xf32> to vector<128x1xf32>
    %cst_12 = arith.constant 3.125000e-02 : f32
    %17 = vector.broadcast %cst_12 : f32 to vector<128x1xf32>
    %18 = arith.mulf %16, %17 : vector<128x1xf32>
    %cst_13 = arith.constant 9.99999974E-6 : f32
    %19 = vector.broadcast %cst_13 : f32 to vector<128x1xf32>
    %20 = arith.addf %18, %19 : vector<128x1xf32>
    %21 = math.rsqrt %20 : vector<128x1xf32>
    %22 = vector.broadcast %21 : vector<128x1xf32> to vector<128x32xf32>
    %23 = arith.mulf %13, %22 : vector<128x32xf32>
    %24 = vector.broadcast %6 : vector<1x32xf32> to vector<128x32xf32>
    %25 = arith.mulf %23, %24 : vector<128x32xf32>
    %26 = vector.broadcast %7 : vector<1x32xf32> to vector<128x32xf32>
    %27 = arith.addf %25, %26 : vector<128x32xf32>
    %c0_14 = arith.constant 0 : index
    %c0_15 = arith.constant 0 : index
    %28 = vector.load %arg3[%c0_14, %c0_15] : memref<128x32xbf16, #tpu.memory_space<vmem>>, vector<128x32xbf16>
    %29 = arith.extf %28 : vector<128x32xbf16> to vector<128x32xf32>
    %30 = arith.mulf %27, %29 : vector<128x32xf32>
    %31 = arith.negf %30 : vector<128x32xf32>
    %32 = math.exp %31 : vector<128x32xf32>
    %cst_16 = arith.constant 1.000000e+00 : f32
    %33 = vector.broadcast %cst_16 : f32 to vector<128x32xf32>
    %34 = arith.addf %33, %32 : vector<128x32xf32>
    %35 = arith.divf %33, %34 : vector<128x32xf32>
    %36 = tpu.iota {dimensions = array<i32: 0>} : vector<128x32xi32>
    %c128_i32 = arith.constant 128 : i32
    %37 = arith.muli %arg0, %c128_i32 : i32
    %38 = vector.broadcast %37 : i32 to vector<128x32xi32>
    %39 = arith.addi %36, %38 : vector<128x32xi32>
    %c200_i32 = arith.constant 200 : i32
    %40 = vector.broadcast %c200_i32 : i32 to vector<128x32xi32>
    %41 = arith.cmpi slt, %39, %40 : vector<128x32xi32>
    %cst_17 = arith.constant 0.000000e+00 : f32
    %42 = vector.broadcast %cst_17 : f32 to vector<128x32xf32>
    %43 = arith.subf %42, %35 : vector<128x32xf32>
    %cst_18 = arith.constant 1.000000e-10 : f32
    %44 = vector.broadcast %cst_18 : f32 to vector<128x32xf32>
    %45 = arith.addf %35, %44 : vector<128x32xf32>
    %46 = math.log %45 : vector<128x32xf32>
    %47 = arith.mulf %43, %46 : vector<128x32xf32>
    %cst_19 = arith.constant 0.000000e+00 : f32
    %48 = vector.broadcast %cst_19 : f32 to vector<128x32xf32>
    %49 = arith.select %41, %47, %48 : vector<128x32xi1>, vector<128x32xf32>
    %50 = vector.shape_cast %49 : vector<128x32xf32> to vector<1x128x32xf32>
    %cst_20 = arith.constant dense<0.000000e+00> : vector<1xf32>
    %51 = vector.multi_reduction <add>, %50, %cst_20 [1, 2] : vector<1x128x32xf32> to vector<1xf32>
    %52 = vector.shape_cast %51 : vector<1xf32> to vector<1x1x1xf32>
    %53 = vector.extract %52[0, 0, 0] : f32 from vector<1x1x1xf32>
    %54 = vector.broadcast %53 : f32 to vector<1x8x128xf32>
    %c0_21 = arith.constant 0 : index
    %c0_22 = arith.constant 0 : index
    %c0_23 = arith.constant 0 : index
    %55 = vector.load %arg17[%c0_21, %c0_22, %c0_23] : memref<1x8x128xf32, #tpu.memory_space<vmem>>, vector<1x8x128xf32>
    tpu.vector_store %arg17[%c0_21, %c0_22, %c0_23], %54 {strides = array<i32>} : memref<1x8x128xf32, #tpu.memory_space<vmem>>, vector<1x8x128xf32>,
    %c0_24 = arith.constant 0 : index
    %c0_25 = arith.constant 0 : index
    %56 = vector.load %arg1[%c0_24, %c0_25] : memref<128x32xbf16, #tpu.memory_space<vmem>>, vector<128x32xbf16>
    %57 = arith.extf %56 : vector<128x32xbf16> to vector<128x32xf32>
    %58 = arith.mulf %57, %35 : vector<128x32xf32>
    %59 = arith.truncf %58 : vector<128x32xf32> to vector<128x32xbf16>
    %c0_26 = arith.constant 0 : index
    %c0_27 = arith.constant 0 : index
    %60 = vector.load %arg8[%c0_26, %c0_27] : memref<32x64xbf16, #tpu.memory_space<vmem>>, vector<32x64xbf16>
    %c0_28 = arith.constant 0 : index
    %c0_29 = arith.constant 0 : index
    %61 = vector.load %arg9[%c0_28, %c0_29] : memref<1x64xf32, #tpu.memory_space<vmem>>, vector<1x64xf32>
    %c0_30 = arith.constant 0 : index
    %c0_31 = arith.constant 0 : index
    %62 = vector.load %arg10[%c0_30, %c0_31] : memref<1x64xf32, #tpu.memory_space<vmem>>, vector<1x64xf32>
    %c0_32 = arith.constant 0 : index
    %c0_33 = arith.constant 0 : index
    %63 = vector.load %arg11[%c0_32, %c0_33] : memref<1x64xf32, #tpu.memory_space<vmem>>, vector<1x64xf32>
    %cst_34 = arith.constant dense<0.000000e+00> : vector<128x64xf32>
    %64 = tpu.matmul %59, %60, %cst_34 {dimension_numbers = #tpu.dot_dimension_numbers<[1], [0], [0], [1], [0, 0, 1, 1], [], []>} : vector<128x32xbf16>, vector<32x64xbf16>, vector<128x64xf32> -> vector<128x64xf32>
    %65 = vector.broadcast %61 : vector<1x64xf32> to vector<128x64xf32>
    %66 = arith.addf %64, %65 : vector<128x64xf32>
    %cst_35 = arith.constant dense<0.000000e+00> : vector<128xf32>
    %67 = vector.multi_reduction <add>, %66, %cst_35 [1] : vector<128x64xf32> to vector<128xf32>
    %68 = vector.shape_cast %67 : vector<128xf32> to vector<128x1xf32>
    %cst_36 = arith.constant 1.562500e-02 : f32
    %69 = vector.broadcast %cst_36 : f32 to vector<128x1xf32>
    %70 = arith.mulf %68, %69 : vector<128x1xf32>
    %71 = vector.broadcast %70 : vector<128x1xf32> to vector<128x64xf32>
    %72 = arith.subf %66, %71 : vector<128x64xf32>
    %73 = arith.mulf %72, %72 : vector<128x64xf32>
    %cst_37 = arith.constant dense<0.000000e+00> : vector<128xf32>
    %74 = vector.multi_reduction <add>, %73, %cst_37 [1] : vector<128x64xf32> to vector<128xf32>
    %75 = vector.shape_cast %74 : vector<128xf32> to vector<128x1xf32>
    %cst_38 = arith.constant 1.562500e-02 : f32
    %76 = vector.broadcast %cst_38 : f32 to vector<128x1xf32>
    %77 = arith.mulf %75, %76 : vector<128x1xf32>
    %cst_39 = arith.constant 9.99999974E-6 : f32
    %78 = vector.broadcast %cst_39 : f32 to vector<128x1xf32>
    %79 = arith.addf %77, %78 : vector<128x1xf32>
    %80 = math.rsqrt %79 : vector<128x1xf32>
    %81 = vector.broadcast %80 : vector<128x1xf32> to vector<128x64xf32>
    %82 = arith.mulf %72, %81 : vector<128x64xf32>
    %83 = vector.broadcast %62 : vector<1x64xf32> to vector<128x64xf32>
    %84 = arith.mulf %82, %83 : vector<128x64xf32>
    %85 = vector.broadcast %63 : vector<1x64xf32> to vector<128x64xf32>
    %86 = arith.addf %84, %85 : vector<128x64xf32>
    %87 = vector.extract_strided_slice %86 {offsets = [0, 0], sizes = [128, 32], strides = [1, 1]} : vector<128x64xf32> to vector<128x32xf32>
    %88 = vector.extract_strided_slice %86 {offsets = [0, 32], sizes = [128, 32], strides = [1, 1]} : vector<128x64xf32> to vector<128x32xf32>
    %89 = arith.negf %88 : vector<128x32xf32>
    %90 = math.exp %89 : vector<128x32xf32>
    %cst_40 = arith.constant 1.000000e+00 : f32
    %91 = vector.broadcast %cst_40 : f32 to vector<128x32xf32>
    %92 = arith.addf %91, %90 : vector<128x32xf32>
    %93 = arith.divf %91, %92 : vector<128x32xf32>
    %94 = arith.mulf %87, %93 : vector<128x32xf32>
    %c0_i32 = arith.constant 0 : i32
    %95 = arith.truncf %94 : vector<128x32xf32> to vector<128x32xbf16>
    %96 = arith.index_cast %c0_i32 : i32 to index
    %c0_41 = arith.constant 0 : index
    %c0_42 = arith.constant 0 : index
    %97 = vector.load %arg12[%96, %c0_41, %c0_42] : memref<3x32x64xbf16, #tpu.memory_space<vmem>>, vector<1x32x64xbf16>
    %98 = vector.shape_cast %97 : vector<1x32x64xbf16> to vector<32x64xbf16>
    %99 = arith.index_cast %c0_i32 : i32 to index
    %c0_43 = arith.constant 0 : index
    %c0_44 = arith.constant 0 : index
    %100 = vector.load %arg13[%99, %c0_43, %c0_44] : memref<3x1x64xf32, #tpu.memory_space<vmem>>, vector<1x1x64xf32>
    %101 = vector.shape_cast %100 : vector<1x1x64xf32> to vector<1x64xf32>
    %102 = arith.index_cast %c0_i32 : i32 to index
    %c0_45 = arith.constant 0 : index
    %c0_46 = arith.constant 0 : index
    %103 = vector.load %arg14[%102, %c0_45, %c0_46] : memref<3x1x64xf32, #tpu.memory_space<vmem>>, vector<1x1x64xf32>
    %104 = vector.shape_cast %103 : vector<1x1x64xf32> to vector<1x64xf32>
    %105 = arith.index_cast %c0_i32 : i32 to index
    %c0_47 = arith.constant 0 : index
    %c0_48 = arith.constant 0 : index
    %106 = vector.load %arg15[%105, %c0_47, %c0_48] : memref<3x1x64xf32, #tpu.memory_space<vmem>>, vector<1x1x64xf32>
    %107 = vector.shape_cast %106 : vector<1x1x64xf32> to vector<1x64xf32>
    %cst_49 = arith.constant dense<0.000000e+00> : vector<128x64xf32>
    %108 = tpu.matmul %95, %98, %cst_49 {dimension_numbers = #tpu.dot_dimension_numbers<[1], [0], [0], [1], [0, 0, 1, 1], [], []>} : vector<128x32xbf16>, vector<32x64xbf16>, vector<128x64xf32> -> vector<128x64xf32>
    %109 = vector.broadcast %101 : vector<1x64xf32> to vector<128x64xf32>
    %110 = arith.addf %108, %109 : vector<128x64xf32>
    %cst_50 = arith.constant dense<0.000000e+00> : vector<128xf32>
    %111 = vector.multi_reduction <add>, %110, %cst_50 [1] : vector<128x64xf32> to vector<128xf32>
    %112 = vector.shape_cast %111 : vector<128xf32> to vector<128x1xf32>
    %cst_51 = arith.constant 1.562500e-02 : f32
    %113 = vector.broadcast %cst_51 : f32 to vector<128x1xf32>
    %114 = arith.mulf %112, %113 : vector<128x1xf32>
    %115 = vector.broadcast %114 : vector<128x1xf32> to vector<128x64xf32>
    %116 = arith.subf %110, %115 : vector<128x64xf32>
    %117 = arith.mulf %116, %116 : vector<128x64xf32>
    %cst_52 = arith.constant dense<0.000000e+00> : vector<128xf32>
    %118 = vector.multi_reduction <add>, %117, %cst_52 [1] : vector<128x64xf32> to vector<128xf32>
    %119 = vector.shape_cast %118 : vector<128xf32> to vector<128x1xf32>
    %cst_53 = arith.constant 1.562500e-02 : f32
    %120 = vector.broadcast %cst_53 : f32 to vector<128x1xf32>
    %121 = arith.mulf %119, %120 : vector<128x1xf32>
    %cst_54 = arith.constant 9.99999974E-6 : f32
    %122 = vector.broadcast %cst_54 : f32 to vector<128x1xf32>
    %123 = arith.addf %121, %122 : vector<128x1xf32>
    %124 = math.rsqrt %123 : vector<128x1xf32>
    %125 = vector.broadcast %124 : vector<128x1xf32> to vector<128x64xf32>
    %126 = arith.mulf %116, %125 : vector<128x64xf32>
    %127 = vector.broadcast %104 : vector<1x64xf32> to vector<128x64xf32>
    %128 = arith.mulf %126, %127 : vector<128x64xf32>
    %129 = vector.broadcast %107 : vector<1x64xf32> to vector<128x64xf32>
    %130 = arith.addf %128, %129 : vector<128x64xf32>
    %131 = vector.extract_strided_slice %130 {offsets = [0, 0], sizes = [128, 32], strides = [1, 1]} : vector<128x64xf32> to vector<128x32xf32>
    %132 = vector.extract_strided_slice %130 {offsets = [0, 32], sizes = [128, 32], strides = [1, 1]} : vector<128x64xf32> to vector<128x32xf32>
    %133 = arith.negf %132 : vector<128x32xf32>
    %134 = math.exp %133 : vector<128x32xf32>
    %cst_55 = arith.constant 1.000000e+00 : f32
    %135 = vector.broadcast %cst_55 : f32 to vector<128x32xf32>
    %136 = arith.addf %135, %134 : vector<128x32xf32>
    %137 = arith.divf %135, %136 : vector<128x32xf32>
    %138 = arith.mulf %131, %137 : vector<128x32xf32>
    %139 = arith.addf %94, %138 : vector<128x32xf32>
    %cst_56 = arith.constant 0.707106769 : f32
    %140 = vector.broadcast %cst_56 : f32 to vector<128x32xf32>
    %141 = arith.mulf %139, %140 : vector<128x32xf32>
    %c1_i32 = arith.constant 1 : i32
    %142 = arith.truncf %141 : vector<128x32xf32> to vector<128x32xbf16>
    %143 = arith.index_cast %c1_i32 : i32 to index
    %c0_57 = arith.constant 0 : index
    %c0_58 = arith.constant 0 : index
    %144 = vector.load %arg12[%143, %c0_57, %c0_58] : memref<3x32x64xbf16, #tpu.memory_space<vmem>>, vector<1x32x64xbf16>
    %145 = vector.shape_cast %144 : vector<1x32x64xbf16> to vector<32x64xbf16>
    %146 = arith.index_cast %c1_i32 : i32 to index
    %c0_59 = arith.constant 0 : index
    %c0_60 = arith.constant 0 : index
    %147 = vector.load %arg13[%146, %c0_59, %c0_60] : memref<3x1x64xf32, #tpu.memory_space<vmem>>, vector<1x1x64xf32>
    %148 = vector.shape_cast %147 : vector<1x1x64xf32> to vector<1x64xf32>
    %149 = arith.index_cast %c1_i32 : i32 to index
    %c0_61 = arith.constant 0 : index
    %c0_62 = arith.constant 0 : index
    %150 = vector.load %arg14[%149, %c0_61, %c0_62] : memref<3x1x64xf32, #tpu.memory_space<vmem>>, vector<1x1x64xf32>
    %151 = vector.shape_cast %150 : vector<1x1x64xf32> to vector<1x64xf32>
    %152 = arith.index_cast %c1_i32 : i32 to index
    %c0_63 = arith.constant 0 : index
    %c0_64 = arith.constant 0 : index
    %153 = vector.load %arg15[%152, %c0_63, %c0_64] : memref<3x1x64xf32, #tpu.memory_space<vmem>>, vector<1x1x64xf32>
    %154 = vector.shape_cast %153 : vector<1x1x64xf32> to vector<1x64xf32>
    %cst_65 = arith.constant dense<0.000000e+00> : vector<128x64xf32>
    %155 = tpu.matmul %142, %145, %cst_65 {dimension_numbers = #tpu.dot_dimension_numbers<[1], [0], [0], [1], [0, 0, 1, 1], [], []>} : vector<128x32xbf16>, vector<32x64xbf16>, vector<128x64xf32> -> vector<128x64xf32>
    %156 = vector.broadcast %148 : vector<1x64xf32> to vector<128x64xf32>
    %157 = arith.addf %155, %156 : vector<128x64xf32>
    %cst_66 = arith.constant dense<0.000000e+00> : vector<128xf32>
    %158 = vector.multi_reduction <add>, %157, %cst_66 [1] : vector<128x64xf32> to vector<128xf32>
    %159 = vector.shape_cast %158 : vector<128xf32> to vector<128x1xf32>
    %cst_67 = arith.constant 1.562500e-02 : f32
    %160 = vector.broadcast %cst_67 : f32 to vector<128x1xf32>
    %161 = arith.mulf %159, %160 : vector<128x1xf32>
    %162 = vector.broadcast %161 : vector<128x1xf32> to vector<128x64xf32>
    %163 = arith.subf %157, %162 : vector<128x64xf32>
    %164 = arith.mulf %163, %163 : vector<128x64xf32>
    %cst_68 = arith.constant dense<0.000000e+00> : vector<128xf32>
    %165 = vector.multi_reduction <add>, %164, %cst_68 [1] : vector<128x64xf32> to vector<128xf32>
    %166 = vector.shape_cast %165 : vector<128xf32> to vector<128x1xf32>
    %cst_69 = arith.constant 1.562500e-02 : f32
    %167 = vector.broadcast %cst_69 : f32 to vector<128x1xf32>
    %168 = arith.mulf %166, %167 : vector<128x1xf32>
    %cst_70 = arith.constant 9.99999974E-6 : f32
    %169 = vector.broadcast %cst_70 : f32 to vector<128x1xf32>
    %170 = arith.addf %168, %169 : vector<128x1xf32>
    %171 = math.rsqrt %170 : vector<128x1xf32>
    %172 = vector.broadcast %171 : vector<128x1xf32> to vector<128x64xf32>
    %173 = arith.mulf %163, %172 : vector<128x64xf32>
    %174 = vector.broadcast %151 : vector<1x64xf32> to vector<128x64xf32>
    %175 = arith.mulf %173, %174 : vector<128x64xf32>
    %176 = vector.broadcast %154 : vector<1x64xf32> to vector<128x64xf32>
    %177 = arith.addf %175, %176 : vector<128x64xf32>
    %178 = vector.extract_strided_slice %177 {offsets = [0, 0], sizes = [128, 32], strides = [1, 1]} : vector<128x64xf32> to vector<128x32xf32>
    %179 = vector.extract_strided_slice %177 {offsets = [0, 32], sizes = [128, 32], strides = [1, 1]} : vector<128x64xf32> to vector<128x32xf32>
    %180 = arith.negf %179 : vector<128x32xf32>
    %181 = math.exp %180 : vector<128x32xf32>
    %cst_71 = arith.constant 1.000000e+00 : f32
    %182 = vector.broadcast %cst_71 : f32 to vector<128x32xf32>
    %183 = arith.addf %182, %181 : vector<128x32xf32>
    %184 = arith.divf %182, %183 : vector<128x32xf32>
    %185 = arith.mulf %178, %184 : vector<128x32xf32>
    %186 = arith.addf %141, %185 : vector<128x32xf32>
    %cst_72 = arith.constant 0.707106769 : f32
    %187 = vector.broadcast %cst_72 : f32 to vector<128x32xf32>
    %188 = arith.mulf %186, %187 : vector<128x32xf32>
    %c2_i32 = arith.constant 2 : i32
    %189 = arith.truncf %188 : vector<128x32xf32> to vector<128x32xbf16>
    %190 = arith.index_cast %c2_i32 : i32 to index
    %c0_73 = arith.constant 0 : index
    %c0_74 = arith.constant 0 : index
    %191 = vector.load %arg12[%190, %c0_73, %c0_74] : memref<3x32x64xbf16, #tpu.memory_space<vmem>>, vector<1x32x64xbf16>
    %192 = vector.shape_cast %191 : vector<1x32x64xbf16> to vector<32x64xbf16>
    %193 = arith.index_cast %c2_i32 : i32 to index
    %c0_75 = arith.constant 0 : index
    %c0_76 = arith.constant 0 : index
    %194 = vector.load %arg13[%193, %c0_75, %c0_76] : memref<3x1x64xf32, #tpu.memory_space<vmem>>, vector<1x1x64xf32>
    %195 = vector.shape_cast %194 : vector<1x1x64xf32> to vector<1x64xf32>
    %196 = arith.index_cast %c2_i32 : i32 to index
    %c0_77 = arith.constant 0 : index
    %c0_78 = arith.constant 0 : index
    %197 = vector.load %arg14[%196, %c0_77, %c0_78] : memref<3x1x64xf32, #tpu.memory_space<vmem>>, vector<1x1x64xf32>
    %198 = vector.shape_cast %197 : vector<1x1x64xf32> to vector<1x64xf32>
    %199 = arith.index_cast %c2_i32 : i32 to index
    %c0_79 = arith.constant 0 : index
    %c0_80 = arith.constant 0 : index
    %200 = vector.load %arg15[%199, %c0_79, %c0_80] : memref<3x1x64xf32, #tpu.memory_space<vmem>>, vector<1x1x64xf32>
    %201 = vector.shape_cast %200 : vector<1x1x64xf32> to vector<1x64xf32>
    %cst_81 = arith.constant dense<0.000000e+00> : vector<128x64xf32>
    %202 = tpu.matmul %189, %192, %cst_81 {dimension_numbers = #tpu.dot_dimension_numbers<[1], [0], [0], [1], [0, 0, 1, 1], [], []>} : vector<128x32xbf16>, vector<32x64xbf16>, vector<128x64xf32> -> vector<128x64xf32>
    %203 = vector.broadcast %195 : vector<1x64xf32> to vector<128x64xf32>
    %204 = arith.addf %202, %203 : vector<128x64xf32>
    %cst_82 = arith.constant dense<0.000000e+00> : vector<128xf32>
    %205 = vector.multi_reduction <add>, %204, %cst_82 [1] : vector<128x64xf32> to vector<128xf32>
    %206 = vector.shape_cast %205 : vector<128xf32> to vector<128x1xf32>
    %cst_83 = arith.constant 1.562500e-02 : f32
    %207 = vector.broadcast %cst_83 : f32 to vector<128x1xf32>
    %208 = arith.mulf %206, %207 : vector<128x1xf32>
    %209 = vector.broadcast %208 : vector<128x1xf32> to vector<128x64xf32>
    %210 = arith.subf %204, %209 : vector<128x64xf32>
    %211 = arith.mulf %210, %210 : vector<128x64xf32>
    %cst_84 = arith.constant dense<0.000000e+00> : vector<128xf32>
    %212 = vector.multi_reduction <add>, %211, %cst_84 [1] : vector<128x64xf32> to vector<128xf32>
    %213 = vector.shape_cast %212 : vector<128xf32> to vector<128x1xf32>
    %cst_85 = arith.constant 1.562500e-02 : f32
    %214 = vector.broadcast %cst_85 : f32 to vector<128x1xf32>
    %215 = arith.mulf %213, %214 : vector<128x1xf32>
    %cst_86 = arith.constant 9.99999974E-6 : f32
    %216 = vector.broadcast %cst_86 : f32 to vector<128x1xf32>
    %217 = arith.addf %215, %216 : vector<128x1xf32>
    %218 = math.rsqrt %217 : vector<128x1xf32>
    %219 = vector.broadcast %218 : vector<128x1xf32> to vector<128x64xf32>
    %220 = arith.mulf %210, %219 : vector<128x64xf32>
    %221 = vector.broadcast %198 : vector<1x64xf32> to vector<128x64xf32>
    %222 = arith.mulf %220, %221 : vector<128x64xf32>
    %223 = vector.broadcast %201 : vector<1x64xf32> to vector<128x64xf32>
    %224 = arith.addf %222, %223 : vector<128x64xf32>
    %225 = vector.extract_strided_slice %224 {offsets = [0, 0], sizes = [128, 32], strides = [1, 1]} : vector<128x64xf32> to vector<128x32xf32>
    %226 = vector.extract_strided_slice %224 {offsets = [0, 32], sizes = [128, 32], strides = [1, 1]} : vector<128x64xf32> to vector<128x32xf32>
    %227 = arith.negf %226 : vector<128x32xf32>
    %228 = math.exp %227 : vector<128x32xf32>
    %cst_87 = arith.constant 1.000000e+00 : f32
    %229 = vector.broadcast %cst_87 : f32 to vector<128x32xf32>
    %230 = arith.addf %229, %228 : vector<128x32xf32>
    %231 = arith.divf %229, %230 : vector<128x32xf32>
    %232 = arith.mulf %225, %231 : vector<128x32xf32>
    %233 = arith.addf %188, %232 : vector<128x32xf32>
    %cst_88 = arith.constant 0.707106769 : f32
    %234 = vector.broadcast %cst_88 : f32 to vector<128x32xf32>
    %235 = arith.mulf %233, %234 : vector<128x32xf32>
    %c3_i32 = arith.constant 3 : i32
    %236 = arith.truncf %235 : vector<128x32xf32> to vector<128x32xbf16>
    %c0_89 = arith.constant 0 : index
    %c0_90 = arith.constant 0 : index
    %237 = vector.load %arg16[%c0_89, %c0_90] : memref<128x32xbf16, #tpu.memory_space<vmem>>, vector<128x32xbf16>
    tpu.vector_store %arg16[%c0_89, %c0_90], %236 {strides = array<i32>} : memref<128x32xbf16, #tpu.memory_space<vmem>>, vector<128x32xbf16>,
    return
  }
  func.func @transform_0(%arg0: i32) -> (i32, i32) {
    %c0_i32 = arith.constant 0 : i32
    %c0_i32_0 = arith.constant 0 : i32
    return %arg0, %c0_i32 : i32, i32
  }
  func.func @transform_1(%arg0: i32) -> (i32, i32) {
    %c0_i32 = arith.constant 0 : i32
    %c0_i32_0 = arith.constant 0 : i32
    return %arg0, %c0_i32 : i32, i32
  }
  func.func @transform_2(%arg0: i32) -> (i32, i32) {
    %c0_i32 = arith.constant 0 : i32
    %c0_i32_0 = arith.constant 0 : i32
    return %arg0, %c0_i32 : i32, i32
  }
  func.func @transform_3(%arg0: i32) -> (i32, i32) {
    %c0_i32 = arith.constant 0 : i32
    %c0_i32_0 = arith.constant 0 : i32
    %c0_i32_1 = arith.constant 0 : i32
    return %c0_i32, %c0_i32_0 : i32, i32
  }
  func.func @transform_4(%arg0: i32) -> (i32, i32) {
    %c0_i32 = arith.constant 0 : i32
    %c0_i32_0 = arith.constant 0 : i32
    %c0_i32_1 = arith.constant 0 : i32
    return %c0_i32, %c0_i32_0 : i32, i32
  }
  func.func @transform_5(%arg0: i32) -> (i32, i32) {
    %c0_i32 = arith.constant 0 : i32
    %c0_i32_0 = arith.constant 0 : i32
    %c0_i32_1 = arith.constant 0 : i32
    return %c0_i32, %c0_i32_0 : i32, i32
  }
  func.func @transform_6(%arg0: i32) -> (i32, i32) {
    %c0_i32 = arith.constant 0 : i32
    %c0_i32_0 = arith.constant 0 : i32
    %c0_i32_1 = arith.constant 0 : i32
    return %c0_i32, %c0_i32_0 : i32, i32
  }
  func.func @transform_7(%arg0: i32) -> (i32, i32) {
    %c0_i32 = arith.constant 0 : i32
    %c0_i32_0 = arith.constant 0 : i32
    %c0_i32_1 = arith.constant 0 : i32
    return %c0_i32, %c0_i32_0 : i32, i32
  }
  func.func @transform_8(%arg0: i32) -> (i32, i32) {
    %c0_i32 = arith.constant 0 : i32
    %c0_i32_0 = arith.constant 0 : i32
    %c0_i32_1 = arith.constant 0 : i32
    return %c0_i32, %c0_i32_0 : i32, i32
  }
  func.func @transform_9(%arg0: i32) -> (i32, i32) {
    %c0_i32 = arith.constant 0 : i32
    %c0_i32_0 = arith.constant 0 : i32
    %c0_i32_1 = arith.constant 0 : i32
    return %c0_i32, %c0_i32_0 : i32, i32
  }
  func.func @transform_10(%arg0: i32) -> (i32, i32) {
    %c0_i32 = arith.constant 0 : i32
    %c0_i32_0 = arith.constant 0 : i32
    %c0_i32_1 = arith.constant 0 : i32
    return %c0_i32, %c0_i32_0 : i32, i32
  }
  func.func @transform_11(%arg0: i32) -> (i32, i32, i32) {
    %c0_i32 = arith.constant 0 : i32
    %c0_i32_0 = arith.constant 0 : i32
    %c0_i32_1 = arith.constant 0 : i32
    %c0_i32_2 = arith.constant 0 : i32
    return %c0_i32, %c0_i32_0, %c0_i32_1 : i32, i32, i32
  }
  func.func @transform_12(%arg0: i32) -> (i32, i32, i32) {
    %c0_i32 = arith.constant 0 : i32
    %c0_i32_0 = arith.constant 0 : i32
    %c0_i32_1 = arith.constant 0 : i32
    %c0_i32_2 = arith.constant 0 : i32
    return %c0_i32, %c0_i32_0, %c0_i32_1 : i32, i32, i32
  }
  func.func @transform_13(%arg0: i32) -> (i32, i32, i32) {
    %c0_i32 = arith.constant 0 : i32
    %c0_i32_0 = arith.constant 0 : i32
    %c0_i32_1 = arith.constant 0 : i32
    %c0_i32_2 = arith.constant 0 : i32
    return %c0_i32, %c0_i32_0, %c0_i32_1 : i32, i32, i32
  }
  func.func @transform_14(%arg0: i32) -> (i32, i32, i32) {
    %c0_i32 = arith.constant 0 : i32
    %c0_i32_0 = arith.constant 0 : i32
    %c0_i32_1 = arith.constant 0 : i32
    %c0_i32_2 = arith.constant 0 : i32
    return %c0_i32, %c0_i32_0, %c0_i32_1 : i32, i32, i32
  }
  func.func @transform_15(%arg0: i32) -> (i32, i32) {
    %c0_i32 = arith.constant 0 : i32
    %c0_i32_0 = arith.constant 0 : i32
    return %arg0, %c0_i32 : i32, i32
  }
  func.func @transform_16(%arg0: i32) -> (i32, i32, i32) {
    %c0_i32 = arith.constant 0 : i32
    %c0_i32_0 = arith.constant 0 : i32
    %c0_i32_1 = arith.constant 0 : i32
    return %arg0, %c0_i32, %c0_i32_0 : i32, i32, i32
  }
}

</mosaic_0001>

<llo_original>
// kernel: tpu_custom_call.1
$region0: #{tpu_custom_call.1}
  #allocation0 [shape = 'u32[]', space=smem, size = 0x4, offset = 0x4, fixed_abs, tag = 'smem constant byte address 0x4 - core index']
  #allocation1 [shape = 'u32[144,128]{1,0:T(1,128)}', space=vmem, size = 0x12000, scoped, tag = 'internal scratch']
  %s0 = inlined_call_operand.vmem [shape: bf16[256,32], index: 0, kind: input, shape index: {}]
  %s1 = inlined_call_operand.vmem [shape: bf16[256,16], index: 1, kind: input, shape index: {}]
  %s2 = inlined_call_operand.vmem [shape: bf16[256,32], index: 2, kind: input, shape index: {}]
  %s3 = inlined_call_operand.vmem [shape: bf16[16,32], index: 3, kind: input, shape index: {}]
  %s4 = inlined_call_operand.vmem [shape: f32[1,32], index: 4, kind: input, shape index: {}]
  %s5 = inlined_call_operand.vmem [shape: f32[1,32], index: 5, kind: input, shape index: {}]
  %s6 = inlined_call_operand.vmem [shape: f32[1,32], index: 6, kind: input, shape index: {}]
  %s7 = inlined_call_operand.vmem [shape: bf16[32,64], index: 7, kind: input, shape index: {}]
  %s8 = inlined_call_operand.vmem [shape: f32[1,64], index: 8, kind: input, shape index: {}]
  %s9 = inlined_call_operand.vmem [shape: f32[1,64], index: 9, kind: input, shape index: {}]
  %s10 = inlined_call_operand.vmem [shape: f32[1,64], index: 10, kind: input, shape index: {}]
  %s11 = inlined_call_operand.vmem [shape: bf16[3,32,64], index: 11, kind: input, shape index: {}]
  %s12 = inlined_call_operand.vmem [shape: f32[3,1,64], index: 12, kind: input, shape index: {}]
  %s13 = inlined_call_operand.vmem [shape: f32[3,1,64], index: 13, kind: input, shape index: {}]
  %s14 = inlined_call_operand.vmem [shape: f32[3,1,64], index: 14, kind: input, shape index: {}]
  %s15 = inlined_call_operand.vmem [shape: bf16[256,32], index: 15, kind: output, shape index: {0}]
  %s16 = inlined_call_operand.hbm [shape: f32[2,8,128], index: 16, kind: output, shape index: {1}]
  %17 = xla_tuple %s15, %s16
  %s18 = sld [smem:[#allocation0]]
  $region101: #{tpu_custom_call.1} parent=0
    _
  %s20 = ssub.s32 1, %s18
  %s21 = scalar_select 0, %s20, %s18
  $region1: #{tpu_custom_call.1} parent=0
    #allocation2 [shape = 'u8[8192]{0}', space=vmem, size = 0x2000, scoped, tag = 'output window, operand 1']
    #allocation3 [shape = 's32[2]{0}', space=sflag, size = 0x8, scoped, tag = 'scoped memory for tpu_custom_call.1']
    %22 = vsyncpa [#allocation3], 0
    %s23 = scalar_lea.sflag [#allocation3], 1
    %24 = vsyncpa %s23, 0
    loop: start=0, step=1, limit=4
    $region2: #{tpu_custom_call.1} parent=1 // loop_pre_header
      _
    $region3: #{tpu_custom_call.1} parent=1 // loop_header
      %s26 = sphi 0, %s30
      %p27 = scmp.ge.s32.totalorder %s26, 4
      %s36 = sphi 0, %s38
      %s39 = sphi 0, %s36
      %s40 = sphi 0, %s39
      %s56 = sphi 0, %s40
      %s62 = sphi 0, %s64
      %s65 = sphi 0, %s62
      %s66 = sphi 0, %s65
      %s82 = sphi 0, %s66
      %s88 = sphi 0, %s90
      %s91 = sphi 0, %s88
      %s92 = sphi 0, %s91
      %s108 = sphi 0, %s92
      %s112 = sphi 0, %s112
      %s114 = sphi 0, %s112
      %s115 = sphi 0, %s114
      %s129 = sphi 0, %s115
      %s133 = sphi 0, %s133
      %s135 = sphi 0, %s133
      %s136 = sphi 0, %s135
      %s150 = sphi 0, %s136
      %s154 = sphi 0, %s154
      %s156 = sphi 0, %s154
      %s157 = sphi 0, %s156
      %s171 = sphi 0, %s157
      %s175 = sphi 0, %s175
      %s177 = sphi 0, %s175
      %s178 = sphi 0, %s177
      %s192 = sphi 0, %s178
      %s196 = sphi 0, %s196
      %s198 = sphi 0, %s196
      %s199 = sphi 0, %s198
      %s213 = sphi 0, %s199
      %s217 = sphi 0, %s217
      %s219 = sphi 0, %s217
      %s220 = sphi 0, %s219
      %s234 = sphi 0, %s220
      %s238 = sphi 0, %s238
      %s240 = sphi 0, %s238
      %s241 = sphi 0, %s240
      %s255 = sphi 0, %s241
      %s259 = sphi 0, %s259
      %s261 = sphi 0, %s259
      %s262 = sphi 0, %s261
      %s276 = sphi 0, %s262
      %s280 = sphi 0, %s280
      %s282 = sphi 0, %s280
      %s283 = sphi 0, %s282
      %s297 = sphi 0, %s283
      %s301 = sphi 0, %s301
      %s303 = sphi 0, %s301
      %s304 = sphi 0, %s303
      %s318 = sphi 0, %s304
      %s322 = sphi 0, %s322
      %s324 = sphi 0, %s322
      %s325 = sphi 0, %s324
      %s339 = sphi 0, %s325
      %s343 = sphi 0, %s343
      %s345 = sphi 0, %s343
      %s346 = sphi 0, %s345
      %s360 = sphi 0, %s346
      %s366 = sphi 0, %s368
      %s369 = sphi 0, %s366
      %s370 = sphi 0, %s369
      %s386 = sphi 0, %s370
      %s392 = sphi 0, %s394
      %s395 = sphi 0, %s392
      %s396 = sphi 0, %s395
      %s412 = sphi 0, %s396
    $region4: #{tpu_custom_call.1} parent=1 // loop_header_branch
      %29 = sbr.rel (%p27) target = $region8
    $region5: #{tpu_custom_call.1} parent=1 // loop_body
      %s31 = ssub.s32 %s26, 1
      %s32 = ssub.s32 %s26, 2
      %s33 = sadd.s32 %s26, 1
      %s34 = ssub.s32 %s26, %s33
      %p35 = scmp.eq.s32.totalorder %s34, 0
      %s37 = sadd.s32 %s36, 1
      %s38 = scalar_select %p35, %s36, %s37
      %p41 = pneg %p35
      %p42 = scmp.eq.s32.totalorder %s26, 1
      %p43 = por %p41, %p42
      %p44 = scmp.ne.s32.totalorder %s36, %s39
      %p45 = scmp.eq.s32.totalorder %s26, 0
      %p46 = por %p44, %p45
      %p47 = scmp.ne.s32.totalorder %s36, %s39
      %p48 = scmp.eq.s32.totalorder %s31, 1
      %p49 = por %p47, %p48
      %p50 = scmp.ne.s32.totalorder %s39, %s40
      %p51 = scmp.eq.s32.totalorder %s31, 0
      %p52 = por %p50, %p51
      %p53 = scmp.ne.s32.totalorder %s39, %s40
      %p54 = scmp.eq.s32.totalorder %s32, 1
      %p55 = por %p53, %p54
      %p57 = scmp.ne.s32.totalorder %s40, %s56
      %p58 = scmp.eq.s32.totalorder %s32, 0
      %p59 = por %p57, %p58
      %s60 = ssub.s32 %s26, %s33
      %p61 = scmp.eq.s32.totalorder %s60, 0
      %s63 = sadd.s32 %s62, 1
      %s64 = scalar_select %p61, %s62, %s63
      %p67 = pneg %p61
      %p68 = scmp.eq.s32.totalorder %s26, 1
      %p69 = por %p67, %p68
      %p70 = scmp.ne.s32.totalorder %s62, %s65
      %p71 = scmp.eq.s32.totalorder %s26, 0
      %p72 = por %p70, %p71
      %p73 = scmp.ne.s32.totalorder %s62, %s65
      %p74 = scmp.eq.s32.totalorder %s31, 1
      %p75 = por %p73, %p74
      %p76 = scmp.ne.s32.totalorder %s65, %s66
      %p77 = scmp.eq.s32.totalorder %s31, 0
      %p78 = por %p76, %p77
      %p79 = scmp.ne.s32.totalorder %s65, %s66
      %p80 = scmp.eq.s32.totalorder %s32, 1
      %p81 = por %p79, %p80
      %p83 = scmp.ne.s32.totalorder %s66, %s82
      %p84 = scmp.eq.s32.totalorder %s32, 0
      %p85 = por %p83, %p84
      %s86 = ssub.s32 %s26, %s33
      %p87 = scmp.eq.s32.totalorder %s86, 0
      %s89 = sadd.s32 %s88, 1
      %s90 = scalar_select %p87, %s88, %s89
      %p93 = pneg %p87
      %p94 = scmp.eq.s32.totalorder %s26, 1
      %p95 = por %p93, %p94
      %p96 = scmp.ne.s32.totalorder %s88, %s91
      %p97 = scmp.eq.s32.totalorder %s26, 0
      %p98 = por %p96, %p97
      %p99 = scmp.ne.s32.totalorder %s88, %s91
      %p100 = scmp.eq.s32.totalorder %s31, 1
      %p101 = por %p99, %p100
      %p102 = scmp.ne.s32.totalorder %s91, %s92
      %p103 = scmp.eq.s32.totalorder %s31, 0
      %p104 = por %p102, %p103
      %p105 = scmp.ne.s32.totalorder %s91, %s92
      %p106 = scmp.eq.s32.totalorder %s32, 1
      %p107 = por %p105, %p106
      %p109 = scmp.ne.s32.totalorder %s92, %s108
      %p110 = scmp.eq.s32.totalorder %s32, 0
      %p111 = por %p109, %p110
      %s113 = sadd.s32 %s112, 1
      %p116 = scmp.eq.s32.totalorder %s26, 1
      %p117 = scmp.ne.s32.totalorder %s112, %s114
      %p118 = scmp.eq.s32.totalorder %s26, 0
      %p119 = por %p117, %p118
      %p120 = scmp.ne.s32.totalorder %s112, %s114
      %p121 = scmp.eq.s32.totalorder %s31, 1
      %p122 = por %p120, %p121
      %p123 = scmp.ne.s32.totalorder %s114, %s115
      %p124 = scmp.eq.s32.totalorder %s31, 0
      %p125 = por %p123, %p124
      %p126 = scmp.ne.s32.totalorder %s114, %s115
      %p127 = scmp.eq.s32.totalorder %s32, 1
      %p128 = por %p126, %p127
      %p130 = scmp.ne.s32.totalorder %s115, %s129
      %p131 = scmp.eq.s32.totalorder %s32, 0
      %p132 = por %p130, %p131
      %s134 = sadd.s32 %s133, 1
      %p137 = scmp.eq.s32.totalorder %s26, 1
      %p138 = scmp.ne.s32.totalorder %s133, %s135
      %p139 = scmp.eq.s32.totalorder %s26, 0
      %p140 = por %p138, %p139
      %p141 = scmp.ne.s32.totalorder %s133, %s135
      %p142 = scmp.eq.s32.totalorder %s31, 1
      %p143 = por %p141, %p142
      %p144 = scmp.ne.s32.totalorder %s135, %s136
      %p145 = scmp.eq.s32.totalorder %s31, 0
      %p146 = por %p144, %p145
      %p147 = scmp.ne.s32.totalorder %s135, %s136
      %p148 = scmp.eq.s32.totalorder %s32, 1
      %p149 = por %p147, %p148
      %p151 = scmp.ne.s32.totalorder %s136, %s150
      %p152 = scmp.eq.s32.totalorder %s32, 0
      %p153 = por %p151, %p152
      %s155 = sadd.s32 %s154, 1
      %p158 = scmp.eq.s32.totalorder %s26, 1
      %p159 = scmp.ne.s32.totalorder %s154, %s156
      %p160 = scmp.eq.s32.totalorder %s26, 0
      %p161 = por %p159, %p160
      %p162 = scmp.ne.s32.totalorder %s154, %s156
      %p163 = scmp.eq.s32.totalorder %s31, 1
      %p164 = por %p162, %p163
      %p165 = scmp.ne.s32.totalorder %s156, %s157
      %p166 = scmp.eq.s32.totalorder %s31, 0
      %p167 = por %p165, %p166
      %p168 = scmp.ne.s32.totalorder %s156, %s157
      %p169 = scmp.eq.s32.totalorder %s32, 1
      %p170 = por %p168, %p169
      %p172 = scmp.ne.s32.totalorder %s157, %s171
      %p173 = scmp.eq.s32.totalorder %s32, 0
      %p174 = por %p172, %p173
      %s176 = sadd.s32 %s175, 1
      %p179 = scmp.eq.s32.totalorder %s26, 1
      %p180 = scmp.ne.s32.totalorder %s175, %s177
      %p181 = scmp.eq.s32.totalorder %s26, 0
      %p182 = por %p180, %p181
      %p183 = scmp.ne.s32.totalorder %s175, %s177
      %p184 = scmp.eq.s32.totalorder %s31, 1
      %p185 = por %p183, %p184
      %p186 = scmp.ne.s32.totalorder %s177, %s178
      %p187 = scmp.eq.s32.totalorder %s31, 0
      %p188 = por %p186, %p187
      %p189 = scmp.ne.s32.totalorder %s177, %s178
      %p190 = scmp.eq.s32.totalorder %s32, 1
      %p191 = por %p189, %p190
      %p193 = scmp.ne.s32.totalorder %s178, %s192
      %p194 = scmp.eq.s32.totalorder %s32, 0
      %p195 = por %p193, %p194
      %s197 = sadd.s32 %s196, 1
      %p200 = scmp.eq.s32.totalorder %s26, 1
      %p201 = scmp.ne.s32.totalorder %s196, %s198
      %p202 = scmp.eq.s32.totalorder %s26, 0
      %p203 = por %p201, %p202
      %p204 = scmp.ne.s32.totalorder %s196, %s198
      %p205 = scmp.eq.s32.totalorder %s31, 1
      %p206 = por %p204, %p205
      %p207 = scmp.ne.s32.totalorder %s198, %s199
      %p208 = scmp.eq.s32.totalorder %s31, 0
      %p209 = por %p207, %p208
      %p210 = scmp.ne.s32.totalorder %s198, %s199
      %p211 = scmp.eq.s32.totalorder %s32, 1
      %p212 = por %p210, %p211
      %p214 = scmp.ne.s32.totalorder %s199, %s213
      %p215 = scmp.eq.s32.totalorder %s32, 0
      %p216 = por %p214, %p215
      %s218 = sadd.s32 %s217, 1
      %p221 = scmp.eq.s32.totalorder %s26, 1
      %p222 = scmp.ne.s32.totalorder %s217, %s219
      %p223 = scmp.eq.s32.totalorder %s26, 0
      %p224 = por %p222, %p223
      %p225 = scmp.ne.s32.totalorder %s217, %s219
      %p226 = scmp.eq.s32.totalorder %s31, 1
      %p227 = por %p225, %p226
      %p228 = scmp.ne.s32.totalorder %s219, %s220
      %p229 = scmp.eq.s32.totalorder %s31, 0
      %p230 = por %p228, %p229
      %p231 = scmp.ne.s32.totalorder %s219, %s220
      %p232 = scmp.eq.s32.totalorder %s32, 1
      %p233 = por %p231, %p232
      %p235 = scmp.ne.s32.totalorder %s220, %s234
      %p236 = scmp.eq.s32.totalorder %s32, 0
      %p237 = por %p235, %p236
      %s239 = sadd.s32 %s238, 1
      %p242 = scmp.eq.s32.totalorder %s26, 1
      %p243 = scmp.ne.s32.totalorder %s238, %s240
      %p244 = scmp.eq.s32.totalorder %s26, 0
      %p245 = por %p243, %p244
      %p246 = scmp.ne.s32.totalorder %s238, %s240
      %p247 = scmp.eq.s32.totalorder %s31, 1
      %p248 = por %p246, %p247
      %p249 = scmp.ne.s32.totalorder %s240, %s241
      %p250 = scmp.eq.s32.totalorder %s31, 0
      %p251 = por %p249, %p250
      %p252 = scmp.ne.s32.totalorder %s240, %s241
      %p253 = scmp.eq.s32.totalorder %s32, 1
      %p254 = por %p252, %p253
      %p256 = scmp.ne.s32.totalorder %s241, %s255
      %p257 = scmp.eq.s32.totalorder %s32, 0
      %p258 = por %p256, %p257
      %s260 = sadd.s32 %s259, 1
      %p263 = scmp.eq.s32.totalorder %s26, 1
      %p264 = scmp.ne.s32.totalorder %s259, %s261
      %p265 = scmp.eq.s32.totalorder %s26, 0
      %p266 = por %p264, %p265
      %p267 = scmp.ne.s32.totalorder %s259, %s261
      %p268 = scmp.eq.s32.totalorder %s31, 1
      %p269 = por %p267, %p268
      %p270 = scmp.ne.s32.totalorder %s261, %s262
      %p271 = scmp.eq.s32.totalorder %s31, 0
      %p272 = por %p270, %p271
      %p273 = scmp.ne.s32.totalorder %s261, %s262
      %p274 = scmp.eq.s32.totalorder %s32, 1
      %p275 = por %p273, %p274
      %p277 = scmp.ne.s32.totalorder %s262, %s276
      %p278 = scmp.eq.s32.totalorder %s32, 0
      %p279 = por %p277, %p278
      %s281 = sadd.s32 %s280, 1
      %p284 = scmp.eq.s32.totalorder %s26, 1
      %p285 = scmp.ne.s32.totalorder %s280, %s282
      %p286 = scmp.eq.s32.totalorder %s26, 0
      %p287 = por %p285, %p286
      %p288 = scmp.ne.s32.totalorder %s280, %s282
      %p289 = scmp.eq.s32.totalorder %s31, 1
      %p290 = por %p288, %p289
      %p291 = scmp.ne.s32.totalorder %s282, %s283
      %p292 = scmp.eq.s32.totalorder %s31, 0
      %p293 = por %p291, %p292
      %p294 = scmp.ne.s32.totalorder %s282, %s283
      %p295 = scmp.eq.s32.totalorder %s32, 1
      %p296 = por %p294, %p295
      %p298 = scmp.ne.s32.totalorder %s283, %s297
      %p299 = scmp.eq.s32.totalorder %s32, 0
      %p300 = por %p298, %p299
      %s302 = sadd.s32 %s301, 1
      %p305 = scmp.eq.s32.totalorder %s26, 1
      %p306 = scmp.ne.s32.totalorder %s301, %s303
      %p307 = scmp.eq.s32.totalorder %s26, 0
      %p308 = por %p306, %p307
      %p309 = scmp.ne.s32.totalorder %s301, %s303
      %p310 = scmp.eq.s32.totalorder %s31, 1
      %p311 = por %p309, %p310
      %p312 = scmp.ne.s32.totalorder %s303, %s304
      %p313 = scmp.eq.s32.totalorder %s31, 0
      %p314 = por %p312, %p313
      %p315 = scmp.ne.s32.totalorder %s303, %s304
      %p316 = scmp.eq.s32.totalorder %s32, 1
      %p317 = por %p315, %p316
      %p319 = scmp.ne.s32.totalorder %s304, %s318
      %p320 = scmp.eq.s32.totalorder %s32, 0
      %p321 = por %p319, %p320
      %s323 = sadd.s32 %s322, 1
      %p326 = scmp.eq.s32.totalorder %s26, 1
      %p327 = scmp.ne.s32.totalorder %s322, %s324
      %p328 = scmp.eq.s32.totalorder %s26, 0
      %p329 = por %p327, %p328
      %p330 = scmp.ne.s32.totalorder %s322, %s324
      %p331 = scmp.eq.s32.totalorder %s31, 1
      %p332 = por %p330, %p331
      %p333 = scmp.ne.s32.totalorder %s324, %s325
      %p334 = scmp.eq.s32.totalorder %s31, 0
      %p335 = por %p333, %p334
      %p336 = scmp.ne.s32.totalorder %s324, %s325
      %p337 = scmp.eq.s32.totalorder %s32, 1
      %p338 = por %p336, %p337
      %p340 = scmp.ne.s32.totalorder %s325, %s339
      %p341 = scmp.eq.s32.totalorder %s32, 0
      %p342 = por %p340, %p341
      %s344 = sadd.s32 %s343, 1
      %p347 = scmp.eq.s32.totalorder %s26, 1
      %p348 = scmp.ne.s32.totalorder %s343, %s345
      %p349 = scmp.eq.s32.totalorder %s26, 0
      %p350 = por %p348, %p349
      %p351 = scmp.ne.s32.totalorder %s343, %s345
      %p352 = scmp.eq.s32.totalorder %s31, 1
      %p353 = por %p351, %p352
      %p354 = scmp.ne.s32.totalorder %s345, %s346
      %p355 = scmp.eq.s32.totalorder %s31, 0
      %p356 = por %p354, %p355
      %p357 = scmp.ne.s32.totalorder %s345, %s346
      %p358 = scmp.eq.s32.totalorder %s32, 1
      %p359 = por %p357, %p358
      %p361 = scmp.ne.s32.totalorder %s346, %s360
      %p362 = scmp.eq.s32.totalorder %s32, 0
      %p363 = por %p361, %p362
      %s364 = ssub.s32 %s26, %s33
      %p365 = scmp.eq.s32.totalorder %s364, 0
      %s367 = sadd.s32 %s366, 1
      %s368 = scalar_select %p365, %s366, %s367
      %p371 = pneg %p365
      %p372 = scmp.eq.s32.totalorder %s26, 1
      %p373 = por %p371, %p372
      %p374 = scmp.ne.s32.totalorder %s366, %s369
      %p375 = scmp.eq.s32.totalorder %s26, 0
      %p376 = por %p374, %p375
      %p377 = scmp.ne.s32.totalorder %s366, %s369
      %p378 = scmp.eq.s32.totalorder %s31, 1
      %p379 = por %p377, %p378
      %p380 = scmp.ne.s32.totalorder %s369, %s370
      %p381 = scmp.eq.s32.totalorder %s31, 0
      %p382 = por %p380, %p381
      %p383 = scmp.ne.s32.totalorder %s369, %s370
      %p384 = scmp.eq.s32.totalorder %s32, 1
      %p385 = por %p383, %p384
      %p387 = scmp.ne.s32.totalorder %s370, %s386
      %p388 = scmp.eq.s32.totalorder %s32, 0
      %p389 = por %p387, %p388
      %s390 = ssub.s32 %s26, %s33
      %p391 = scmp.eq.s32.totalorder %s390, 0
      %s393 = sadd.s32 %s392, 1
      %s394 = scalar_select %p391, %s392, %s393
      %p397 = pneg %p391
      %p398 = scmp.eq.s32.totalorder %s26, 1
      %p399 = por %p397, %p398
      %p400 = scmp.ne.s32.totalorder %s392, %s395
      %p401 = scmp.eq.s32.totalorder %s26, 0
      %p402 = por %p400, %p401
      %p403 = scmp.ne.s32.totalorder %s392, %s395
      %p404 = scmp.eq.s32.totalorder %s31, 1
      %p405 = por %p403, %p404
      %p406 = scmp.ne.s32.totalorder %s395, %s396
      %p407 = scmp.eq.s32.totalorder %s31, 0
      %p408 = por %p406, %p407
      %p409 = scmp.ne.s32.totalorder %s395, %s396
      %p410 = scmp.eq.s32.totalorder %s32, 1
      %p411 = por %p409, %p410
      %p413 = scmp.ne.s32.totalorder %s396, %s412
      %p414 = scmp.eq.s32.totalorder %s32, 0
      %p415 = por %p413, %p414
      %p416 = scmp.le.s32.totalorder 1, %s26
      %p417 = scmp.lt.s32.totalorder %s26, 3
      %p418 = pnand %p416, %p417
      %p419 = pneg %p418
      // Predicated region
      $region9: #{tpu_custom_call.1} parent=5 // pred_check
        _
      $region10: #{tpu_custom_call.1} parent=5 // pred_check_branch
        %421 = sbr.rel (%p418) target = $region12
      $region11: #{tpu_custom_call.1} parent=5 // pred_region
        %s422 = ssub.s32 %s26, 1
        // Predicated region
        $region13: #{tpu_custom_call.1} parent=11 // pred_check
          %p423 = pneg %p125
        $region14: #{tpu_custom_call.1} parent=11 // pred_check_branch
          %425 = sbr.rel (%p423) target = $region16
        $region15: #{tpu_custom_call.1} parent=11 // pred_region
          _
        $region16: #{tpu_custom_call.1} parent=11 // pred_fallthru
          _
        // Predicated region
        $region17: #{tpu_custom_call.1} parent=11 // pred_check
          %p426 = pneg %p146
        $region18: #{tpu_custom_call.1} parent=11 // pred_check_branch
          %428 = sbr.rel (%p426) target = $region20
        $region19: #{tpu_custom_call.1} parent=11 // pred_region
          _
        $region20: #{tpu_custom_call.1} parent=11 // pred_fallthru
          _
        // Predicated region
        $region21: #{tpu_custom_call.1} parent=11 // pred_check
          %p429 = pneg %p167
        $region22: #{tpu_custom_call.1} parent=11 // pred_check_branch
          %431 = sbr.rel (%p429) target = $region24
        $region23: #{tpu_custom_call.1} parent=11 // pred_region
          _
        $region24: #{tpu_custom_call.1} parent=11 // pred_fallthru
          _
        // Predicated region
        $region25: #{tpu_custom_call.1} parent=11 // pred_check
          %p432 = pneg %p188
        $region26: #{tpu_custom_call.1} parent=11 // pred_check_branch
          %434 = sbr.rel (%p432) target = $region28
        $region27: #{tpu_custom_call.1} parent=11 // pred_region
          _
        $region28: #{tpu_custom_call.1} parent=11 // pred_fallthru
          _
        // Predicated region
        $region29: #{tpu_custom_call.1} parent=11 // pred_check
          %p435 = pneg %p209
        $region30: #{tpu_custom_call.1} parent=11 // pred_check_branch
          %437 = sbr.rel (%p435) target = $region32
        $region31: #{tpu_custom_call.1} parent=11 // pred_region
          _
        $region32: #{tpu_custom_call.1} parent=11 // pred_fallthru
          _
        // Predicated region
        $region33: #{tpu_custom_call.1} parent=11 // pred_check
          %p438 = pneg %p230
        $region34: #{tpu_custom_call.1} parent=11 // pred_check_branch
          %440 = sbr.rel (%p438) target = $region36
        $region35: #{tpu_custom_call.1} parent=11 // pred_region
          _
        $region36: #{tpu_custom_call.1} parent=11 // pred_fallthru
          _
        // Predicated region
        $region37: #{tpu_custom_call.1} parent=11 // pred_check
          %p441 = pneg %p251
        $region38: #{tpu_custom_call.1} parent=11 // pred_check_branch
          %443 = sbr.rel (%p441) target = $region40
        $region39: #{tpu_custom_call.1} parent=11 // pred_region
          _
        $region40: #{tpu_custom_call.1} parent=11 // pred_fallthru
          _
        // Predicated region
        $region41: #{tpu_custom_call.1} parent=11 // pred_check
          %p444 = pneg %p272
        $region42: #{tpu_custom_call.1} parent=11 // pred_check_branch
          %446 = sbr.rel (%p444) target = $region44
        $region43: #{tpu_custom_call.1} parent=11 // pred_region
          _
        $region44: #{tpu_custom_call.1} parent=11 // pred_fallthru
          _
        // Predicated region
        $region45: #{tpu_custom_call.1} parent=11 // pred_check
          %p447 = pneg %p293
        $region46: #{tpu_custom_call.1} parent=11 // pred_check_branch
          %449 = sbr.rel (%p447) target = $region48
        $region47: #{tpu_custom_call.1} parent=11 // pred_region
          _
        $region48: #{tpu_custom_call.1} parent=11 // pred_fallthru
          _
        // Predicated region
        $region49: #{tpu_custom_call.1} parent=11 // pred_check
          %p450 = pneg %p314
        $region50: #{tpu_custom_call.1} parent=11 // pred_check_branch
          %452 = sbr.rel (%p450) target = $region52
        $region51: #{tpu_custom_call.1} parent=11 // pred_region
          _
        $region52: #{tpu_custom_call.1} parent=11 // pred_fallthru
          _
        // Predicated region
        $region53: #{tpu_custom_call.1} parent=11 // pred_check
          %p453 = pneg %p335
        $region54: #{tpu_custom_call.1} parent=11 // pred_check_branch
          %455 = sbr.rel (%p453) target = $region56
        $region55: #{tpu_custom_call.1} parent=11 // pred_region
          _
        $region56: #{tpu_custom_call.1} parent=11 // pred_fallthru
          _
        // Predicated region
        $region57: #{tpu_custom_call.1} parent=11 // pred_check
          %p456 = pneg %p356
        $region58: #{tpu_custom_call.1} parent=11 // pred_check_branch
          %458 = sbr.rel (%p456) target = $region60
        $region59: #{tpu_custom_call.1} parent=11 // pred_region
          _
        $region60: #{tpu_custom_call.1} parent=11 // pred_fallthru
          _
      $region12: #{tpu_custom_call.1} parent=5 // pred_fallthru
        _
      %p459 = scmp.lt.s32.totalorder %s26, 2
      // Predicated region
      $region61: #{tpu_custom_call.1} parent=5 // pred_check
        %p460 = pneg %p459
      $region62: #{tpu_custom_call.1} parent=5 // pred_check_branch
        %462 = sbr.rel (%p460) target = $region64
      $region63: #{tpu_custom_call.1} parent=5 // pred_region
        // Predicated region
        $region65: #{tpu_custom_call.1} parent=63 // pred_check
          %p463 = pneg %p46
        $region66: #{tpu_custom_call.1} parent=63 // pred_check_branch
          %465 = sbr.rel (%p463) target = $region68
        $region67: #{tpu_custom_call.1} parent=63 // pred_region
          %s466 = smul.u32 16, %s26
          %p467 = scmp.lt.s32.totalorder %s466, 31
          %s468 = scalar_select %p467, %s466, 31
          %s469 = smul.addr %s468, 4
          %s470 = scalar_lea.vmem %s0, %s469
          %s471 = smul.u32 16, %s26
        $region68: #{tpu_custom_call.1} parent=63 // pred_fallthru
          _
        // Predicated region
        $region69: #{tpu_custom_call.1} parent=63 // pred_check
          %p472 = pneg %p72
        $region70: #{tpu_custom_call.1} parent=63 // pred_check_branch
          %474 = sbr.rel (%p472) target = $region72
        $region71: #{tpu_custom_call.1} parent=63 // pred_region
          %s475 = smul.u32 16, %s26
          %p476 = scmp.lt.s32.totalorder %s475, 31
          %s477 = scalar_select %p476, %s475, 31
          %s478 = smul.addr %s477, 4
          %s479 = scalar_lea.vmem %s1, %s478
          %s480 = smul.u32 16, %s26
        $region72: #{tpu_custom_call.1} parent=63 // pred_fallthru
          _
        // Predicated region
        $region73: #{tpu_custom_call.1} parent=63 // pred_check
          %p481 = pneg %p98
        $region74: #{tpu_custom_call.1} parent=63 // pred_check_branch
          %483 = sbr.rel (%p481) target = $region76
        $region75: #{tpu_custom_call.1} parent=63 // pred_region
          %s484 = smul.u32 16, %s26
          %p485 = scmp.lt.s32.totalorder %s484, 31
          %s486 = scalar_select %p485, %s484, 31
          %s487 = smul.addr %s486, 4
          %s488 = scalar_lea.vmem %s2, %s487
          %s489 = smul.u32 16, %s26
        $region76: #{tpu_custom_call.1} parent=63 // pred_fallthru
          _
      $region64: #{tpu_custom_call.1} parent=5 // pred_fallthru
        _
      %p490 = scmp.le.s32.totalorder 1, %s26
      %p491 = scmp.lt.s32.totalorder %s26, 3
      %p492 = pnand %p490, %p491
      %p493 = pneg %p492
      // Predicated region
      $region77: #{tpu_custom_call.1} parent=5 // pred_check
        _
      $region78: #{tpu_custom_call.1} parent=5 // pred_check_branch
        %495 = sbr.rel (%p492) target = $region80
      $region79: #{tpu_custom_call.1} parent=5 // pred_region
        %s496 = ssub.s32 %s26, 1
        %s497 = smul.u32 16, %s31
        %p498 = scmp.lt.s32.totalorder %s497, 31
        %s499 = scalar_select %p498, %s497, 31
        %s500 = smul.addr %s499, 4
        %s501 = scalar_lea.vmem %s0, %s500
        %p502 = pneg %p52
        %p503 = pneg %p49
        %s504 = smul.u32 16, %s31
        %p505 = scmp.lt.s32.totalorder %s504, 31
        %s506 = scalar_select %p505, %s504, 31
        %s507 = smul.addr %s506, 4
        %s508 = scalar_lea.vmem %s1, %s507
        %p509 = pneg %p78
        %p510 = pneg %p75
        %s511 = smul.u32 16, %s31
        %p512 = scmp.lt.s32.totalorder %s511, 31
        %s513 = scalar_select %p512, %s511, 31
        %s514 = smul.addr %s513, 4
        %s515 = scalar_lea.vmem %s2, %s514
        %p516 = pneg %p104
        %p517 = pneg %p101
        %p518 = pneg %p125
        %p519 = pneg %p122
        %p520 = pneg %p146
        %p521 = pneg %p143
        %p522 = pneg %p167
        %p523 = pneg %p164
        %p524 = pneg %p188
        %p525 = pneg %p185
        %p526 = pneg %p209
        %p527 = pneg %p206
        %p528 = pneg %p230
        %p529 = pneg %p227
        %p530 = pneg %p251
        %p531 = pneg %p248
        %p532 = pneg %p272
        %p533 = pneg %p269
        %p534 = pneg %p293
        %p535 = pneg %p290
        %p536 = pneg %p314
        %p537 = pneg %p311
        %p538 = pneg %p335
        %p539 = pneg %p332
        %p540 = pneg %p356
        %p541 = pneg %p353
        %p542 = pneg %p382
        %p543 = pneg %p379
        %s544 = smul.u32 16, %s31
        %p545 = scmp.lt.s32.totalorder %s544, 31
        %s546 = scalar_select %p545, %s544, 31
        %s547 = smul.addr %s546, 4
        %s548 = scalar_lea.vmem %s15, %s547
        %p549 = pneg %p408
        %p550 = pneg %p405
        %s551 = sand.u32 %s395, 1
        %s552 = scalar_lea.sflag [#allocation3], %s551
        %s553 = sand.u32 %s395, 1
        %s554 = smul.addr %s553, 8
        %s555 = scalar_lea.vmem [#allocation2], %s554
        %s556 = smul.u32 16, %s31
        %p557 = scmp.lt.s32.totalorder %s556, 31
        %s558 = scalar_select %p557, %s556, 31
        %s559 = smul.addr %s558, 4
        %s560 = scalar_lea.vmem %s0, %s559
        %s561 = smul.u32 16, %s31
        %s562 = smul.u32 16, %s31
        %p563 = scmp.lt.s32.totalorder %s562, 31
        %s564 = scalar_select %p563, %s562, 31
        %s565 = smul.addr %s564, 4
        %s566 = scalar_lea.vmem %s1, %s565
        %s567 = smul.u32 16, %s31
        %s568 = smul.u32 16, %s31
        %p569 = scmp.lt.s32.totalorder %s568, 31
        %s570 = scalar_select %p569, %s568, 31
        %s571 = smul.addr %s570, 4
        %s572 = scalar_lea.vmem %s2, %s571
        %s573 = smul.u32 16, %s31
        %s574 = smul.u32 16, %s31
        %p575 = scmp.lt.s32.totalorder %s574, 31
        %s576 = scalar_select %p575, %s574, 31
        %s577 = smul.addr %s576, 4
        %s578 = scalar_lea.vmem %s15, %s577
        %s579 = smul.u32 16, %s31
        %v581 = vld [vmem:[%s566] sm:$0xf]
        %v582 = vld [vmem:[%s566 + $0x4] sm:$0xf]
        %v583 = vld [vmem:[%s566 + $0x8] sm:$0xf]
        %v584 = vld [vmem:[%s566 + $0xc] sm:$0xf]
        %v585 = vld [vmem:[%s566 + $0x10] sm:$0xf]
        %v586 = vld [vmem:[%s566 + $0x14] sm:$0xf]
        %v587 = vld [vmem:[%s566 + $0x18] sm:$0xf]
        %v588 = vld [vmem:[%s566 + $0x1c] sm:$0xf]
        %v589 = vld [vmem:[%s566 + $0x20] sm:$0xf]
        %v590 = vld [vmem:[%s566 + $0x24] sm:$0xf]
        %v591 = vld [vmem:[%s566 + $0x28] sm:$0xf]
        %v592 = vld [vmem:[%s566 + $0x2c] sm:$0xf]
        %v593 = vld [vmem:[%s566 + $0x30] sm:$0xf]
        %v594 = vld [vmem:[%s566 + $0x34] sm:$0xf]
        %v595 = vld [vmem:[%s566 + $0x38] sm:$0xf]
        %v596 = vld [vmem:[%s566 + $0x3c] sm:$0xf]
        %v597 = vld [vmem:[%s3] sm:$0xf]
        %v598 = vld [vmem:[%s3 + $0x4] sm:$0xf]
        %v599 = vld [vmem:[%s4] sm:$0x1]
        %v601 = vlaneseq
        %v602 = vshrl.u32 %v601, 7
        %v603 = vsub.s32 0, %v602
        %v604 = vrot.slane %v599, %v603
        %v622 = vunpack.c.l.b16 %v581
        %v623 = vunpack.c.l.b16 %v582
        %v624 = vunpack.c.l.b16 %v583
        %v625 = vunpack.c.l.b16 %v584
        %v626 = vunpack.c.l.b16 %v585
        %v627 = vunpack.c.l.b16 %v586
        %v628 = vunpack.c.l.b16 %v587
        %v629 = vunpack.c.l.b16 %v588
        %v630 = vunpack.c.l.b16 %v589
        %v631 = vunpack.c.l.b16 %v590
        %v632 = vunpack.c.l.b16 %v591
        %v633 = vunpack.c.l.b16 %v592
        %v634 = vunpack.c.l.b16 %v593
        %v635 = vunpack.c.l.b16 %v594
        %v636 = vunpack.c.l.b16 %v595
        %v637 = vunpack.c.l.b16 %v596
        %v638 = vpack.c.b16 %v623, %v622
        %v639 = vpack.c.b16 %v625, %v624
        %v640 = vpack.c.b16 %v627, %v626
        %v641 = vpack.c.b16 %v629, %v628
        %v642 = vpack.c.b16 %v631, %v630
        %v643 = vpack.c.b16 %v633, %v632
        %v644 = vpack.c.b16 %v635, %v634
        %v645 = vpack.c.b16 %v637, %v636
        %v648 = vunpack.c.l.b16 %v597
        %v649 = vunpack.c.l.b16 %v598
        %v650 = vpack.c.b16 %v649, %v648
        %vm652 = vcmask 130048
        %v654 = vsel %vm652, %v638, 0
        %v657 = vsel %vm652, %v639, 0
        %v660 = vsel %vm652, %v640, 0
        %v663 = vsel %vm652, %v641, 0
        %v666 = vsel %vm652, %v642, 0
        %v669 = vsel %vm652, %v643, 0
        %v672 = vsel %vm652, %v644, 0
        %v675 = vsel %vm652, %v645, 0
        %677 = vmatprep.subr.bf16.mxu0 0
        %678 = vmatpush1.bf16.msra.mxu0 0
        %679 = vmatprep.subr.bf16.mxu0 0
        %680 = vmatpush1.bf16.msra.mxu0 0
        %681 = vmatprep.subr.bf16.mxu0 0
        %682 = vmatpush1.bf16.msra.mxu0 0
        %683 = vmatprep.subr.bf16.mxu0 0
        %684 = vmatpush1.bf16.msra.mxu0 0
        %685 = vmatprep.subr.bf16.mxu0 0
        %686 = vmatpush1.bf16.msra.mxu0 0
        %687 = vmatprep.subr.bf16.mxu0 0
        %688 = vmatpush1.bf16.msra.mxu0 0
        %689 = vmatprep.subr.bf16.mxu0 0
        %690 = vmatpush1.bf16.msra.mxu0 0
        %691 = vmatprep.subr.bf16.mxu0 0
        %692 = vmatpush1.bf16.msra.mxu0 %v650
        %693 = vmatprep.subr.bf16.mxu0 0
        %694 = vmatpush2.bf16.msra.mxu0 0
        %695 = vmatprep.subr.bf16.mxu0 0
        %696 = vmatpush2.bf16.msra.mxu0 0
        %697 = vmatprep.subr.bf16.mxu0 0
        %698 = vmatpush2.bf16.msra.mxu0 0
        %699 = vmatprep.subr.bf16.mxu0 0
        %700 = vmatpush2.bf16.msra.mxu0 0
        %701 = vmatprep.subr.bf16.mxu0 0
        %702 = vmatpush2.bf16.msra.mxu0 0
        %703 = vmatprep.subr.bf16.mxu0 0
        %704 = vmatpush2.bf16.msra.mxu0 0
        %705 = vmatprep.subr.bf16.mxu0 0
        %706 = vmatpush2.bf16.msra.mxu0 0
        %707 = vmatprep.subr.bf16.mxu0 0
        %708 = vmatpush2.bf16.msra.mxu0 0
        %709 = vmatprep.mubr.bf16.mxu0 0
        %710 = vmatmul.mubr.bf16.gmra.mxu0 %v654
        %v711 = vpop.f32.mrf.mxu0
        %v712 = vadd.f32 %v604, %v711
        %v713 = vpop.f32.mrf.mxu0
        %v714 = vpop.f32.mrf.mxu0
        %v715 = vadd.f32 %v604, %v714
        %v716 = vpop.f32.mrf.mxu0
        %717 = vmatprep.mubr.bf16.mxu0 0
        %718 = vmatmul.mubr.bf16.gmra.mxu0 %v657
        %v719 = vpop.f32.mrf.mxu0
        %v720 = vadd.f32 %v604, %v719
        %v721 = vpop.f32.mrf.mxu0
        %v722 = vpop.f32.mrf.mxu0
        %v723 = vadd.f32 %v604, %v722
        %v724 = vpop.f32.mrf.mxu0
        %725 = vmatprep.mubr.bf16.mxu0 0
        %726 = vmatmul.mubr.bf16.gmra.mxu0 %v660
        %v727 = vpop.f32.mrf.mxu0
        %v728 = vadd.f32 %v604, %v727
        %v729 = vpop.f32.mrf.mxu0
        %v730 = vpop.f32.mrf.mxu0
        %v731 = vadd.f32 %v604, %v730
        %v732 = vpop.f32.mrf.mxu0
        %733 = vmatprep.mubr.bf16.mxu0 0
        %734 = vmatmul.mubr.bf16.gmra.mxu0 %v663
        %v735 = vpop.f32.mrf.mxu0
        %v736 = vadd.f32 %v604, %v735
        %v737 = vpop.f32.mrf.mxu0
        %v738 = vpop.f32.mrf.mxu0
        %v739 = vadd.f32 %v604, %v738
        %v740 = vpop.f32.mrf.mxu0
        %741 = vmatprep.mubr.bf16.mxu0 0
        %742 = vmatmul.mubr.bf16.gmra.mxu0 %v666
        %v743 = vpop.f32.mrf.mxu0
        %v744 = vadd.f32 %v604, %v743
        %v745 = vpop.f32.mrf.mxu0
        %v746 = vpop.f32.mrf.mxu0
        %v747 = vadd.f32 %v604, %v746
        %v748 = vpop.f32.mrf.mxu0
        %749 = vmatprep.mubr.bf16.mxu0 0
        %750 = vmatmul.mubr.bf16.gmra.mxu0 %v669
        %v751 = vpop.f32.mrf.mxu0
        %v752 = vadd.f32 %v604, %v751
        %v753 = vpop.f32.mrf.mxu0
        %v754 = vpop.f32.mrf.mxu0
        %v755 = vadd.f32 %v604, %v754
        %v756 = vpop.f32.mrf.mxu0
        %757 = vmatprep.mubr.bf16.mxu0 0
        %758 = vmatmul.mubr.bf16.gmra.mxu0 %v672
        %v759 = vpop.f32.mrf.mxu0
        %v760 = vadd.f32 %v604, %v759
        %v761 = vpop.f32.mrf.mxu0
        %v762 = vpop.f32.mrf.mxu0
        %v763 = vadd.f32 %v604, %v762
        %v764 = vpop.f32.mrf.mxu0
        %765 = vmatprep.mubr.bf16.mxu0 0
        %766 = vmatmul.mubr.bf16.gmra.mxu0 %v675
        %v767 = vpop.f32.mrf.mxu0
        %v768 = vadd.f32 %v604, %v767
        %v769 = vpop.f32.mrf.mxu0
        %v770 = vpop.f32.mrf.mxu0
        %v771 = vadd.f32 %v604, %v770
        %v772 = vpop.f32.mrf.mxu0
        %773 = vdwg.mxu0
        %v774 = vld [vmem:[%s5] sm:$0x1]
        %v775 = vld [vmem:[%s6] sm:$0x1]
        %vm776 = vcmask 261120
        %v777 = vsel %vm776, %v712, 0.0
        %778 = vadd.xlane.f32.xlu0 %v777
        %v779 = vpop.xlane.xlu0 %778
        %v780 = vsel %vm776, %v715, 0.0
        %781 = vadd.xlane.f32.xlu0 %v780
        %v782 = vpop.xlane.xlu0 %781
        %v783 = vsel %vm776, %v720, 0.0
        %784 = vadd.xlane.f32.xlu0 %v783
        %v785 = vpop.xlane.xlu0 %784
        %v786 = vsel %vm776, %v723, 0.0
        %787 = vadd.xlane.f32.xlu0 %v786
        %v788 = vpop.xlane.xlu0 %787
        %v789 = vsel %vm776, %v728, 0.0
        %790 = vadd.xlane.f32.xlu0 %v789
        %v791 = vpop.xlane.xlu0 %790
        %v792 = vsel %vm776, %v731, 0.0
        %793 = vadd.xlane.f32.xlu0 %v792
        %v794 = vpop.xlane.xlu0 %793
        %v795 = vsel %vm776, %v736, 0.0
        %796 = vadd.xlane.f32.xlu0 %v795
        %v797 = vpop.xlane.xlu0 %796
        %v798 = vsel %vm776, %v739, 0.0
        %799 = vadd.xlane.f32.xlu0 %v798
        %v800 = vpop.xlane.xlu0 %799
        %v801 = vsel %vm776, %v744, 0.0
        %802 = vadd.xlane.f32.xlu0 %v801
        %v803 = vpop.xlane.xlu0 %802
        %v804 = vsel %vm776, %v747, 0.0
        %805 = vadd.xlane.f32.xlu0 %v804
        %v806 = vpop.xlane.xlu0 %805
        %v807 = vsel %vm776, %v752, 0.0
        %808 = vadd.xlane.f32.xlu0 %v807
        %v809 = vpop.xlane.xlu0 %808
        %v810 = vsel %vm776, %v755, 0.0
        %811 = vadd.xlane.f32.xlu0 %v810
        %v812 = vpop.xlane.xlu0 %811
        %v813 = vsel %vm776, %v760, 0.0
        %814 = vadd.xlane.f32.xlu0 %v813
        %v815 = vpop.xlane.xlu0 %814
        %v816 = vsel %vm776, %v763, 0.0
        %817 = vadd.xlane.f32.xlu0 %v816
        %v818 = vpop.xlane.xlu0 %817
        %v819 = vsel %vm776, %v768, 0.0
        %820 = vadd.xlane.f32.xlu0 %v819
        %v821 = vpop.xlane.xlu0 %820
        %v822 = vsel %vm776, %v771, 0.0
        %823 = vadd.xlane.f32.xlu0 %v822
        %v824 = vpop.xlane.xlu0 %823
        %v825 = vmul.f32 %v779, 0.03125
        %v826 = vmul.f32 %v782, 0.03125
        %v827 = vmul.f32 %v785, 0.03125
        %v828 = vmul.f32 %v788, 0.03125
        %v829 = vmul.f32 %v791, 0.03125
        %v830 = vmul.f32 %v794, 0.03125
        %v831 = vmul.f32 %v797, 0.03125
        %v832 = vmul.f32 %v800, 0.03125
        %v833 = vmul.f32 %v803, 0.03125
        %v834 = vmul.f32 %v806, 0.03125
        %v835 = vmul.f32 %v809, 0.03125
        %v836 = vmul.f32 %v812, 0.03125
        %v837 = vmul.f32 %v815, 0.03125
        %v838 = vmul.f32 %v818, 0.03125
        %v839 = vmul.f32 %v821, 0.03125
        %v840 = vmul.f32 %v824, 0.03125
        %v841 = vsub.f32 %v712, %v825
        %v842 = vsub.f32 %v715, %v826
        %v843 = vsub.f32 %v720, %v827
        %v844 = vsub.f32 %v723, %v828
        %v845 = vsub.f32 %v728, %v829
        %v846 = vsub.f32 %v731, %v830
        %v847 = vsub.f32 %v736, %v831
        %v848 = vsub.f32 %v739, %v832
        %v849 = vsub.f32 %v744, %v833
        %v850 = vsub.f32 %v747, %v834
        %v851 = vsub.f32 %v752, %v835
        %v852 = vsub.f32 %v755, %v836
        %v853 = vsub.f32 %v760, %v837
        %v854 = vsub.f32 %v763, %v838
        %v855 = vsub.f32 %v768, %v839
        %v856 = vsub.f32 %v771, %v840
        %v857 = vmul.f32 %v841, %v841
        %v858 = vmul.f32 %v842, %v842
        %v859 = vmul.f32 %v843, %v843
        %v860 = vmul.f32 %v844, %v844
        %v861 = vmul.f32 %v845, %v845
        %v862 = vmul.f32 %v846, %v846
        %v863 = vmul.f32 %v847, %v847
        %v864 = vmul.f32 %v848, %v848
        %v865 = vmul.f32 %v849, %v849
        %v866 = vmul.f32 %v850, %v850
        %v867 = vmul.f32 %v851, %v851
        %v868 = vmul.f32 %v852, %v852
        %v869 = vmul.f32 %v853, %v853
        %v870 = vmul.f32 %v854, %v854
        %v871 = vmul.f32 %v855, %v855
        %v872 = vmul.f32 %v856, %v856
        %v873 = vsel %vm776, %v857, 0.0
        %874 = vadd.xlane.f32.xlu0 %v873
        %v875 = vpop.xlane.xlu0 %874
        %v876 = vsel %vm776, %v858, 0.0
        %877 = vadd.xlane.f32.xlu0 %v876
        %v878 = vpop.xlane.xlu0 %877
        %v879 = vsel %vm776, %v859, 0.0
        %880 = vadd.xlane.f32.xlu0 %v879
        %v881 = vpop.xlane.xlu0 %880
        %v882 = vsel %vm776, %v860, 0.0
        %883 = vadd.xlane.f32.xlu0 %v882
        %v884 = vpop.xlane.xlu0 %883
        %v885 = vsel %vm776, %v861, 0.0
        %886 = vadd.xlane.f32.xlu0 %v885
        %v887 = vpop.xlane.xlu0 %886
        %v888 = vsel %vm776, %v862, 0.0
        %889 = vadd.xlane.f32.xlu0 %v888
        %v890 = vpop.xlane.xlu0 %889
        %v891 = vsel %vm776, %v863, 0.0
        %892 = vadd.xlane.f32.xlu0 %v891
        %v893 = vpop.xlane.xlu0 %892
        %v894 = vsel %vm776, %v864, 0.0
        %895 = vadd.xlane.f32.xlu0 %v894
        %v896 = vpop.xlane.xlu0 %895
        %v897 = vsel %vm776, %v865, 0.0
        %898 = vadd.xlane.f32.xlu0 %v897
        %v899 = vpop.xlane.xlu0 %898
        %v900 = vsel %vm776, %v866, 0.0
        %901 = vadd.xlane.f32.xlu0 %v900
        %v902 = vpop.xlane.xlu0 %901
        %v903 = vsel %vm776, %v867, 0.0
        %904 = vadd.xlane.f32.xlu0 %v903
        %v905 = vpop.xlane.xlu0 %904
        %v906 = vsel %vm776, %v868, 0.0
        %907 = vadd.xlane.f32.xlu0 %v906
        %v908 = vpop.xlane.xlu0 %907
        %v909 = vsel %vm776, %v869, 0.0
        %910 = vadd.xlane.f32.xlu0 %v909
        %v911 = vpop.xlane.xlu0 %910
        %v912 = vsel %vm776, %v870, 0.0
        %913 = vadd.xlane.f32.xlu0 %v912
        %v914 = vpop.xlane.xlu0 %913
        %v915 = vsel %vm776, %v871, 0.0
        %916 = vadd.xlane.f32.xlu0 %v915
        %v917 = vpop.xlane.xlu0 %916
        %v918 = vsel %vm776, %v872, 0.0
        %919 = vadd.xlane.f32.xlu0 %v918
        %v920 = vpop.xlane.xlu0 %919
        %v921 = vmul.f32 %v875, 0.03125
        %v922 = vmul.f32 %v878, 0.03125
        %v923 = vmul.f32 %v881, 0.03125
        %v924 = vmul.f32 %v884, 0.03125
        %v925 = vmul.f32 %v887, 0.03125
        %v926 = vmul.f32 %v890, 0.03125
        %v927 = vmul.f32 %v893, 0.03125
        %v928 = vmul.f32 %v896, 0.03125
        %v929 = vmul.f32 %v899, 0.03125
        %v930 = vmul.f32 %v902, 0.03125
        %v931 = vmul.f32 %v905, 0.03125
        %v932 = vmul.f32 %v908, 0.03125
        %v933 = vmul.f32 %v911, 0.03125
        %v934 = vmul.f32 %v914, 0.03125
        %v935 = vmul.f32 %v917, 0.03125
        %v936 = vmul.f32 %v920, 0.03125
        %v937 = vadd.f32 %v921, 1e-05
        %v938 = vadd.f32 %v922, 1e-05
        %v939 = vadd.f32 %v923, 1e-05
        %v940 = vadd.f32 %v924, 1e-05
        %v941 = vadd.f32 %v925, 1e-05
        %v942 = vadd.f32 %v926, 1e-05
        %v943 = vadd.f32 %v927, 1e-05
        %v944 = vadd.f32 %v928, 1e-05
        %v945 = vadd.f32 %v929, 1e-05
        %v946 = vadd.f32 %v930, 1e-05
        %v947 = vadd.f32 %v931, 1e-05
        %v948 = vadd.f32 %v932, 1e-05
        %v949 = vadd.f32 %v933, 1e-05
        %v950 = vadd.f32 %v934, 1e-05
        %v951 = vadd.f32 %v935, 1e-05
        %v952 = vadd.f32 %v936, 1e-05
        %v953 = vrsqrt.pop %v937
        %v954 = vrsqrt.pop %v938
        %v955 = vrsqrt.pop %v939
        %v956 = vrsqrt.pop %v940
        %v957 = vrsqrt.pop %v941
        %v958 = vrsqrt.pop %v942
        %v959 = vrsqrt.pop %v943
        %v960 = vrsqrt.pop %v944
        %v961 = vrsqrt.pop %v945
        %v962 = vrsqrt.pop %v946
        %v963 = vrsqrt.pop %v947
        %v964 = vrsqrt.pop %v948
        %v965 = vrsqrt.pop %v949
        %v966 = vrsqrt.pop %v950
        %v967 = vrsqrt.pop %v951
        %v968 = vrsqrt.pop %v952
        %v969 = vmul.f32 %v841, %v953
        %v970 = vmul.f32 %v842, %v954
        %v971 = vmul.f32 %v843, %v955
        %v972 = vmul.f32 %v844, %v956
        %v973 = vmul.f32 %v845, %v957
        %v974 = vmul.f32 %v846, %v958
        %v975 = vmul.f32 %v847, %v959
        %v976 = vmul.f32 %v848, %v960
        %v977 = vmul.f32 %v849, %v961
        %v978 = vmul.f32 %v850, %v962
        %v979 = vmul.f32 %v851, %v963
        %v980 = vmul.f32 %v852, %v964
        %v981 = vmul.f32 %v853, %v965
        %v982 = vmul.f32 %v854, %v966
        %v983 = vmul.f32 %v855, %v967
        %v984 = vmul.f32 %v856, %v968
        %v986 = vlaneseq
        %v987 = vshrl.u32 %v986, 7
        %v988 = vsub.s32 0, %v987
        %v989 = vrot.slane %v774, %v988
        %v991 = vmul.f32 %v969, %v989
        %v992 = vmul.f32 %v970, %v989
        %v993 = vmul.f32 %v971, %v989
        %v994 = vmul.f32 %v972, %v989
        %v995 = vmul.f32 %v973, %v989
        %v996 = vmul.f32 %v974, %v989
        %v997 = vmul.f32 %v975, %v989
        %v998 = vmul.f32 %v976, %v989
        %v999 = vmul.f32 %v977, %v989
        %v1000 = vmul.f32 %v978, %v989
        %v1001 = vmul.f32 %v979, %v989
        %v1002 = vmul.f32 %v980, %v989
        %v1003 = vmul.f32 %v981, %v989
        %v1004 = vmul.f32 %v982, %v989
        %v1005 = vmul.f32 %v983, %v989
        %v1006 = vmul.f32 %v984, %v989
        %v1008 = vlaneseq
        %v1009 = vshrl.u32 %v1008, 7
        %v1010 = vsub.s32 0, %v1009
        %v1011 = vrot.slane %v775, %v1010
        %v1013 = vadd.f32 %v991, %v1011
        %v1014 = vadd.f32 %v992, %v1011
        %v1015 = vadd.f32 %v993, %v1011
        %v1016 = vadd.f32 %v994, %v1011
        %v1017 = vadd.f32 %v995, %v1011
        %v1018 = vadd.f32 %v996, %v1011
        %v1019 = vadd.f32 %v997, %v1011
        %v1020 = vadd.f32 %v998, %v1011
        %v1021 = vadd.f32 %v999, %v1011
        %v1022 = vadd.f32 %v1000, %v1011
        %v1023 = vadd.f32 %v1001, %v1011
        %v1024 = vadd.f32 %v1002, %v1011
        %v1025 = vadd.f32 %v1003, %v1011
        %v1026 = vadd.f32 %v1004, %v1011
        %v1027 = vadd.f32 %v1005, %v1011
        %v1028 = vadd.f32 %v1006, %v1011
        %v1029 = vld [vmem:[%s572] sm:$0xf]
        %v1030 = vld [vmem:[%s572 + $0x4] sm:$0xf]
        %v1031 = vld [vmem:[%s572 + $0x8] sm:$0xf]
        %v1032 = vld [vmem:[%s572 + $0xc] sm:$0xf]
        %v1033 = vld [vmem:[%s572 + $0x10] sm:$0xf]
        %v1034 = vld [vmem:[%s572 + $0x14] sm:$0xf]
        %v1035 = vld [vmem:[%s572 + $0x18] sm:$0xf]
        %v1036 = vld [vmem:[%s572 + $0x1c] sm:$0xf]
        %v1037 = vld [vmem:[%s572 + $0x20] sm:$0xf]
        %v1038 = vld [vmem:[%s572 + $0x24] sm:$0xf]
        %v1039 = vld [vmem:[%s572 + $0x28] sm:$0xf]
        %v1040 = vld [vmem:[%s572 + $0x2c] sm:$0xf]
        %v1041 = vld [vmem:[%s572 + $0x30] sm:$0xf]
        %v1042 = vld [vmem:[%s572 + $0x34] sm:$0xf]
        %v1043 = vld [vmem:[%s572 + $0x38] sm:$0xf]
        %v1044 = vld [vmem:[%s572 + $0x3c] sm:$0xf]
        %v1045 = vunpack.c.l.bf16 %v1029
        %v1046 = vunpack.c.l.bf16 %v1030
        %v1047 = vunpack.c.l.bf16 %v1031
        %v1048 = vunpack.c.l.bf16 %v1032
        %v1049 = vunpack.c.l.bf16 %v1033
        %v1050 = vunpack.c.l.bf16 %v1034
        %v1051 = vunpack.c.l.bf16 %v1035
        %v1052 = vunpack.c.l.bf16 %v1036
        %v1053 = vunpack.c.l.bf16 %v1037
        %v1054 = vunpack.c.l.bf16 %v1038
        %v1055 = vunpack.c.l.bf16 %v1039
        %v1056 = vunpack.c.l.bf16 %v1040
        %v1057 = vunpack.c.l.bf16 %v1041
        %v1058 = vunpack.c.l.bf16 %v1042
        %v1059 = vunpack.c.l.bf16 %v1043
        %v1060 = vunpack.c.l.bf16 %v1044
        %v1061 = vmul.f32 %v1013, %v1045
        %v1062 = vmul.f32 %v1014, %v1046
        %v1063 = vmul.f32 %v1015, %v1047
        %v1064 = vmul.f32 %v1016, %v1048
        %v1065 = vmul.f32 %v1017, %v1049
        %v1066 = vmul.f32 %v1018, %v1050
        %v1067 = vmul.f32 %v1019, %v1051
        %v1068 = vmul.f32 %v1020, %v1052
        %v1069 = vmul.f32 %v1021, %v1053
        %v1070 = vmul.f32 %v1022, %v1054
        %v1071 = vmul.f32 %v1023, %v1055
        %v1072 = vmul.f32 %v1024, %v1056
        %v1073 = vmul.f32 %v1025, %v1057
        %v1074 = vmul.f32 %v1026, %v1058
        %v1075 = vmul.f32 %v1027, %v1059
        %v1076 = vmul.f32 %v1028, %v1060
        %v1077 = vxor.u32 %v1061, 2147483648
        %v1078 = vxor.u32 %v1062, 2147483648
        %v1079 = vxor.u32 %v1063, 2147483648
        %v1080 = vxor.u32 %v1064, 2147483648
        %v1081 = vxor.u32 %v1065, 2147483648
        %v1082 = vxor.u32 %v1066, 2147483648
        %v1083 = vxor.u32 %v1067, 2147483648
        %v1084 = vxor.u32 %v1068, 2147483648
        %v1085 = vxor.u32 %v1069, 2147483648
        %v1086 = vxor.u32 %v1070, 2147483648
        %v1087 = vxor.u32 %v1071, 2147483648
        %v1088 = vxor.u32 %v1072, 2147483648
        %v1089 = vxor.u32 %v1073, 2147483648
        %v1090 = vxor.u32 %v1074, 2147483648
        %v1091 = vxor.u32 %v1075, 2147483648
        %v1092 = vxor.u32 %v1076, 2147483648
        %v1093 = vmul.f32 %v1077, 1.442695
        %v1094 = vpow.pop %v1093
        %v1095 = vmul.f32 %v1078, 1.442695
        %v1096 = vpow.pop %v1095
        %v1097 = vmul.f32 %v1079, 1.442695
        %v1098 = vpow.pop %v1097
        %v1099 = vmul.f32 %v1080, 1.442695
        %v1100 = vpow.pop %v1099
        %v1101 = vmul.f32 %v1081, 1.442695
        %v1102 = vpow.pop %v1101
        %v1103 = vmul.f32 %v1082, 1.442695
        %v1104 = vpow.pop %v1103
        %v1105 = vmul.f32 %v1083, 1.442695
        %v1106 = vpow.pop %v1105
        %v1107 = vmul.f32 %v1084, 1.442695
        %v1108 = vpow.pop %v1107
        %v1109 = vmul.f32 %v1085, 1.442695
        %v1110 = vpow.pop %v1109
        %v1111 = vmul.f32 %v1086, 1.442695
        %v1112 = vpow.pop %v1111
        %v1113 = vmul.f32 %v1087, 1.442695
        %v1114 = vpow.pop %v1113
        %v1115 = vmul.f32 %v1088, 1.442695
        %v1116 = vpow.pop %v1115
        %v1117 = vmul.f32 %v1089, 1.442695
        %v1118 = vpow.pop %v1117
        %v1119 = vmul.f32 %v1090, 1.442695
        %v1120 = vpow.pop %v1119
        %v1121 = vmul.f32 %v1091, 1.442695
        %v1122 = vpow.pop %v1121
        %v1123 = vmul.f32 %v1092, 1.442695
        %v1124 = vpow.pop %v1123
        %v1125 = vadd.f32 %v1094, 1.0
        %v1126 = vadd.f32 %v1096, 1.0
        %v1127 = vadd.f32 %v1098, 1.0
        %v1128 = vadd.f32 %v1100, 1.0
        %v1129 = vadd.f32 %v1102, 1.0
        %v1130 = vadd.f32 %v1104, 1.0
        %v1131 = vadd.f32 %v1106, 1.0
        %v1132 = vadd.f32 %v1108, 1.0
        %v1133 = vadd.f32 %v1110, 1.0
        %v1134 = vadd.f32 %v1112, 1.0
        %v1135 = vadd.f32 %v1114, 1.0
        %v1136 = vadd.f32 %v1116, 1.0
        %v1137 = vadd.f32 %v1118, 1.0
        %v1138 = vadd.f32 %v1120, 1.0
        %v1139 = vadd.f32 %v1122, 1.0
        %v1140 = vadd.f32 %v1124, 1.0
        %v1141 = vrcp.pop %v1125
        %v1142 = vmul.f32 1.0, %v1141
        %v1143 = vrcp.pop %v1126
        %v1144 = vmul.f32 1.0, %v1143
        %v1145 = vrcp.pop %v1127
        %v1146 = vmul.f32 1.0, %v1145
        %v1147 = vrcp.pop %v1128
        %v1148 = vmul.f32 1.0, %v1147
        %v1149 = vrcp.pop %v1129
        %v1150 = vmul.f32 1.0, %v1149
        %v1151 = vrcp.pop %v1130
        %v1152 = vmul.f32 1.0, %v1151
        %v1153 = vrcp.pop %v1131
        %v1154 = vmul.f32 1.0, %v1153
        %v1155 = vrcp.pop %v1132
        %v1156 = vmul.f32 1.0, %v1155
        %v1157 = vrcp.pop %v1133
        %v1158 = vmul.f32 1.0, %v1157
        %v1159 = vrcp.pop %v1134
        %v1160 = vmul.f32 1.0, %v1159
        %v1161 = vrcp.pop %v1135
        %v1162 = vmul.f32 1.0, %v1161
        %v1163 = vrcp.pop %v1136
        %v1164 = vmul.f32 1.0, %v1163
        %v1165 = vrcp.pop %v1137
        %v1166 = vmul.f32 1.0, %v1165
        %v1167 = vrcp.pop %v1138
        %v1168 = vmul.f32 1.0, %v1167
        %v1169 = vrcp.pop %v1139
        %v1170 = vmul.f32 1.0, %v1169
        %v1171 = vrcp.pop %v1140
        %v1172 = vmul.f32 1.0, %v1171
        %v1173 = vlaneseq
        %v1174 = vshrl.u32 %v1173, 7
        %v1175 = vadd.s32 %v1174, 8
        %v1176 = vadd.s32 %v1174, 16
        %v1177 = vadd.s32 %v1174, 24
        %v1178 = vadd.s32 %v1174, 32
        %v1179 = vadd.s32 %v1174, 40
        %v1180 = vadd.s32 %v1174, 48
        %v1181 = vadd.s32 %v1174, 56
        %v1182 = vadd.s32 %v1174, 64
        %v1183 = vadd.s32 %v1174, 72
        %v1184 = vadd.s32 %v1174, 80
        %v1185 = vadd.s32 %v1174, 88
        %v1186 = vadd.s32 %v1174, 96
        %v1187 = vadd.s32 %v1174, 104
        %v1188 = vadd.s32 %v1174, 112
        %v1189 = vadd.s32 %v1174, 120
        %s1190 = smul.u32 %s31, 128
        %v1191 = vstv %s1190
        %v1192 = vadd.s32 %v1174, %v1191
        %v1193 = vadd.s32 %v1175, %v1191
        %v1194 = vadd.s32 %v1176, %v1191
        %v1195 = vadd.s32 %v1177, %v1191
        %v1196 = vadd.s32 %v1178, %v1191
        %v1197 = vadd.s32 %v1179, %v1191
        %v1198 = vadd.s32 %v1180, %v1191
        %v1199 = vadd.s32 %v1181, %v1191
        %v1200 = vadd.s32 %v1182, %v1191
        %v1201 = vadd.s32 %v1183, %v1191
        %v1202 = vadd.s32 %v1184, %v1191
        %v1203 = vadd.s32 %v1185, %v1191
        %v1204 = vadd.s32 %v1186, %v1191
        %v1205 = vadd.s32 %v1187, %v1191
        %v1206 = vadd.s32 %v1188, %v1191
        %v1207 = vadd.s32 %v1189, %v1191
        %vm1208 = vcmp.lt.s32.totalorder %v1192, 200
        %vm1209 = vcmp.lt.s32.totalorder %v1193, 200
        %vm1210 = vcmp.lt.s32.totalorder %v1194, 200
        %vm1211 = vcmp.lt.s32.totalorder %v1195, 200
        %vm1212 = vcmp.lt.s32.totalorder %v1196, 200
        %vm1213 = vcmp.lt.s32.totalorder %v1197, 200
        %vm1214 = vcmp.lt.s32.totalorder %v1198, 200
        %vm1215 = vcmp.lt.s32.totalorder %v1199, 200
        %vm1216 = vcmp.lt.s32.totalorder %v1200, 200
        %vm1217 = vcmp.lt.s32.totalorder %v1201, 200
        %vm1218 = vcmp.lt.s32.totalorder %v1202, 200
        %vm1219 = vcmp.lt.s32.totalorder %v1203, 200
        %vm1220 = vcmp.lt.s32.totalorder %v1204, 200
        %vm1221 = vcmp.lt.s32.totalorder %v1205, 200
        %vm1222 = vcmp.lt.s32.totalorder %v1206, 200
        %vm1223 = vcmp.lt.s32.totalorder %v1207, 200
        %v1224 = vsub.f32 0.0, %v1142
        %v1225 = vsub.f32 0.0, %v1144
        %v1226 = vsub.f32 0.0, %v1146
        %v1227 = vsub.f32 0.0, %v1148
        %v1228 = vsub.f32 0.0, %v1150
        %v1229 = vsub.f32 0.0, %v1152
        %v1230 = vsub.f32 0.0, %v1154
        %v1231 = vsub.f32 0.0, %v1156
        %v1232 = vsub.f32 0.0, %v1158
        %v1233 = vsub.f32 0.0, %v1160
        %v1234 = vsub.f32 0.0, %v1162
        %v1235 = vsub.f32 0.0, %v1164
        %v1236 = vsub.f32 0.0, %v1166
        %v1237 = vsub.f32 0.0, %v1168
        %v1238 = vsub.f32 0.0, %v1170
        %v1239 = vsub.f32 0.0, %v1172
        %v1240 = vadd.f32 %v1142, 1e-10
        %v1241 = vadd.f32 %v1144, 1e-10
        %v1242 = vadd.f32 %v1146, 1e-10
        %v1243 = vadd.f32 %v1148, 1e-10
        %v1244 = vadd.f32 %v1150, 1e-10
        %v1245 = vadd.f32 %v1152, 1e-10
        %v1246 = vadd.f32 %v1154, 1e-10
        %v1247 = vadd.f32 %v1156, 1e-10
        %v1248 = vadd.f32 %v1158, 1e-10
        %v1249 = vadd.f32 %v1160, 1e-10
        %v1250 = vadd.f32 %v1162, 1e-10
        %v1251 = vadd.f32 %v1164, 1e-10
        %v1252 = vadd.f32 %v1166, 1e-10
        %v1253 = vadd.f32 %v1168, 1e-10
        %v1254 = vadd.f32 %v1170, 1e-10
        %v1255 = vadd.f32 %v1172, 1e-10
        %v1256 = vlog2.pop %v1240
        %v1257 = vmul.f32 %v1256, 0.6931472
        %v1258 = vlog2.pop %v1241
        %v1259 = vmul.f32 %v1258, 0.6931472
        %v1260 = vlog2.pop %v1242
        %v1261 = vmul.f32 %v1260, 0.6931472
        %v1262 = vlog2.pop %v1243
        %v1263 = vmul.f32 %v1262, 0.6931472
        %v1264 = vlog2.pop %v1244
        %v1265 = vmul.f32 %v1264, 0.6931472
        %v1266 = vlog2.pop %v1245
        %v1267 = vmul.f32 %v1266, 0.6931472
        %v1268 = vlog2.pop %v1246
        %v1269 = vmul.f32 %v1268, 0.6931472
        %v1270 = vlog2.pop %v1247
        %v1271 = vmul.f32 %v1270, 0.6931472
        %v1272 = vlog2.pop %v1248
        %v1273 = vmul.f32 %v1272, 0.6931472
        %v1274 = vlog2.pop %v1249
        %v1275 = vmul.f32 %v1274, 0.6931472
        %v1276 = vlog2.pop %v1250
        %v1277 = vmul.f32 %v1276, 0.6931472
        %v1278 = vlog2.pop %v1251
        %v1279 = vmul.f32 %v1278, 0.6931472
        %v1280 = vlog2.pop %v1252
        %v1281 = vmul.f32 %v1280, 0.6931472
        %v1282 = vlog2.pop %v1253
        %v1283 = vmul.f32 %v1282, 0.6931472
        %v1284 = vlog2.pop %v1254
        %v1285 = vmul.f32 %v1284, 0.6931472
        %v1286 = vlog2.pop %v1255
        %v1287 = vmul.f32 %v1286, 0.6931472
        %v1288 = vmul.f32 %v1224, %v1257
        %v1289 = vmul.f32 %v1225, %v1259
        %v1290 = vmul.f32 %v1226, %v1261
        %v1291 = vmul.f32 %v1227, %v1263
        %v1292 = vmul.f32 %v1228, %v1265
        %v1293 = vmul.f32 %v1229, %v1267
        %v1294 = vmul.f32 %v1230, %v1269
        %v1295 = vmul.f32 %v1231, %v1271
        %v1296 = vmul.f32 %v1232, %v1273
        %v1297 = vmul.f32 %v1233, %v1275
        %v1298 = vmul.f32 %v1234, %v1277
        %v1299 = vmul.f32 %v1235, %v1279
        %v1300 = vmul.f32 %v1236, %v1281
        %v1301 = vmul.f32 %v1237, %v1283
        %v1302 = vmul.f32 %v1238, %v1285
        %v1303 = vmul.f32 %v1239, %v1287
        %v1304 = vsel %vm1208, %v1288, 0.0
        %v1305 = vsel %vm1209, %v1289, 0.0
        %v1306 = vsel %vm1210, %v1290, 0.0
        %v1307 = vsel %vm1211, %v1291, 0.0
        %v1308 = vsel %vm1212, %v1292, 0.0
        %v1309 = vsel %vm1213, %v1293, 0.0
        %v1310 = vsel %vm1214, %v1294, 0.0
        %v1311 = vsel %vm1215, %v1295, 0.0
        %v1312 = vsel %vm1216, %v1296, 0.0
        %v1313 = vsel %vm1217, %v1297, 0.0
        %v1314 = vsel %vm1218, %v1298, 0.0
        %v1315 = vsel %vm1219, %v1299, 0.0
        %v1316 = vsel %vm1220, %v1300, 0.0
        %v1317 = vsel %vm1221, %v1301, 0.0
        %v1318 = vsel %vm1222, %v1302, 0.0
        %v1319 = vsel %vm1223, %v1303, 0.0
        %v1320 = vsel %vm776, %v1304, 0.0
        %v1321 = vsel %vm776, %v1305, 0.0
        %v1322 = vadd.f32 %v1320, %v1321
        %v1323 = vsel %vm776, %v1306, 0.0
        %v1324 = vadd.f32 %v1322, %v1323
        %v1325 = vsel %vm776, %v1307, 0.0
        %v1326 = vadd.f32 %v1324, %v1325
        %v1327 = vsel %vm776, %v1308, 0.0
        %v1328 = vadd.f32 %v1326, %v1327
        %v1329 = vsel %vm776, %v1309, 0.0
        %v1330 = vadd.f32 %v1328, %v1329
        %v1331 = vsel %vm776, %v1310, 0.0
        %v1332 = vadd.f32 %v1330, %v1331
        %v1333 = vsel %vm776, %v1311, 0.0
        %v1334 = vadd.f32 %v1332, %v1333
        %v1335 = vsel %vm776, %v1312, 0.0
        %v1336 = vadd.f32 %v1334, %v1335
        %v1337 = vsel %vm776, %v1313, 0.0
        %v1338 = vadd.f32 %v1336, %v1337
        %v1339 = vsel %vm776, %v1314, 0.0
        %v1340 = vadd.f32 %v1338, %v1339
        %v1341 = vsel %vm776, %v1315, 0.0
        %v1342 = vadd.f32 %v1340, %v1341
        %v1343 = vsel %vm776, %v1316, 0.0
        %v1344 = vadd.f32 %v1342, %v1343
        %v1345 = vsel %vm776, %v1317, 0.0
        %v1346 = vadd.f32 %v1344, %v1345
        %v1347 = vsel %vm776, %v1318, 0.0
        %v1348 = vadd.f32 %v1346, %v1347
        %v1349 = vsel %vm776, %v1319, 0.0
        %v1350 = vadd.f32 %v1348, %v1349
        %1351 = vadd.xlane.f32.xlu0 %v1350
        %v1352 = vpop.xlane.xlu0 %1351
        %v1353 = vrot.slane %v1352, 4
        %v1354 = vadd.f32 %v1352, %v1353
        %v1355 = vrot.slane %v1354, 2
        %v1356 = vadd.f32 %v1354, %v1355
        %v1357 = vrot.slane %v1356, 1
        %v1358 = vadd.f32 %v1356, %v1357
        %s1359 = vtos %v1358
        %v1360 = vstv %s1359
        %1361 = vst [vmem:[%s555] sm:$0xff] %v1360
        %v1362 = vld [vmem:[%s560] sm:$0xf]
        %v1363 = vld [vmem:[%s560 + $0x4] sm:$0xf]
        %v1364 = vld [vmem:[%s560 + $0x8] sm:$0xf]
        %v1365 = vld [vmem:[%s560 + $0xc] sm:$0xf]
        %v1366 = vld [vmem:[%s560 + $0x10] sm:$0xf]
        %v1367 = vld [vmem:[%s560 + $0x14] sm:$0xf]
        %v1368 = vld [vmem:[%s560 + $0x18] sm:$0xf]
        %v1369 = vld [vmem:[%s560 + $0x1c] sm:$0xf]
        %v1370 = vld [vmem:[%s560 + $0x20] sm:$0xf]
        %v1371 = vld [vmem:[%s560 + $0x24] sm:$0xf]
        %v1372 = vld [vmem:[%s560 + $0x28] sm:$0xf]
        %v1373 = vld [vmem:[%s560 + $0x2c] sm:$0xf]
        %v1374 = vld [vmem:[%s560 + $0x30] sm:$0xf]
        %v1375 = vld [vmem:[%s560 + $0x34] sm:$0xf]
        %v1376 = vld [vmem:[%s560 + $0x38] sm:$0xf]
        %v1377 = vld [vmem:[%s560 + $0x3c] sm:$0xf]
        %v1378 = vunpack.c.l.bf16 %v1362
        %v1379 = vunpack.c.l.bf16 %v1363
        %v1380 = vunpack.c.l.bf16 %v1364
        %v1381 = vunpack.c.l.bf16 %v1365
        %v1382 = vunpack.c.l.bf16 %v1366
        %v1383 = vunpack.c.l.bf16 %v1367
        %v1384 = vunpack.c.l.bf16 %v1368
        %v1385 = vunpack.c.l.bf16 %v1369
        %v1386 = vunpack.c.l.bf16 %v1370
        %v1387 = vunpack.c.l.bf16 %v1371
        %v1388 = vunpack.c.l.bf16 %v1372
        %v1389 = vunpack.c.l.bf16 %v1373
        %v1390 = vunpack.c.l.bf16 %v1374
        %v1391 = vunpack.c.l.bf16 %v1375
        %v1392 = vunpack.c.l.bf16 %v1376
        %v1393 = vunpack.c.l.bf16 %v1377
        %v1394 = vmul.f32 %v1378, %v1142
        %v1395 = vmul.f32 %v1379, %v1144
        %v1396 = vmul.f32 %v1380, %v1146
        %v1397 = vmul.f32 %v1381, %v1148
        %v1398 = vmul.f32 %v1382, %v1150
        %v1399 = vmul.f32 %v1383, %v1152
        %v1400 = vmul.f32 %v1384, %v1154
        %v1401 = vmul.f32 %v1385, %v1156
        %v1402 = vmul.f32 %v1386, %v1158
        %v1403 = vmul.f32 %v1387, %v1160
        %v1404 = vmul.f32 %v1388, %v1162
        %v1405 = vmul.f32 %v1389, %v1164
        %v1406 = vmul.f32 %v1390, %v1166
        %v1407 = vmul.f32 %v1391, %v1168
        %v1408 = vmul.f32 %v1392, %v1170
        %v1409 = vmul.f32 %v1393, %v1172
        %v1410 = vpack.c.bf16 %v1395, %v1394
        %v1411 = vpack.c.bf16 %v1397, %v1396
        %v1412 = vpack.c.bf16 %v1399, %v1398
        %v1413 = vpack.c.bf16 %v1401, %v1400
        %v1414 = vpack.c.bf16 %v1403, %v1402
        %v1415 = vpack.c.bf16 %v1405, %v1404
        %v1416 = vpack.c.bf16 %v1407, %v1406
        %v1417 = vpack.c.bf16 %v1409, %v1408
        %v1418 = vld [vmem:[%s7] sm:$0xf]
        %v1419 = vld [vmem:[%s7 + $0x4] sm:$0xf]
        %v1420 = vld [vmem:[%s7 + $0x8] sm:$0xf]
        %v1421 = vld [vmem:[%s7 + $0xc] sm:$0xf]
        %v1422 = vld [vmem:[%s8] sm:$0x1]
        %v1423 = vld [vmem:[%s9] sm:$0x1]
        %v1424 = vld [vmem:[%s10] sm:$0x1]
        %v1426 = vlaneseq
        %v1427 = vshrl.u32 %v1426, 7
        %v1428 = vsub.s32 0, %v1427
        %v1429 = vrot.slane %v1422, %v1428
        %v1435 = vunpack.c.l.b16 %v1418
        %v1436 = vunpack.c.l.b16 %v1419
        %v1437 = vunpack.c.l.b16 %v1420
        %v1438 = vunpack.c.l.b16 %v1421
        %v1439 = vpack.c.b16 %v1436, %v1435
        %v1440 = vpack.c.b16 %v1438, %v1437
        %v1444 = vsel %vm776, %v1410, 0
        %v1447 = vsel %vm776, %v1411, 0
        %v1450 = vsel %vm776, %v1412, 0
        %v1453 = vsel %vm776, %v1413, 0
        %v1456 = vsel %vm776, %v1414, 0
        %v1459 = vsel %vm776, %v1415, 0
        %v1462 = vsel %vm776, %v1416, 0
        %v1465 = vsel %vm776, %v1417, 0
        %1467 = vmatprep.subr.bf16.mxu0 0
        %1468 = vmatpush1.bf16.msra.mxu0 0
        %1469 = vmatprep.subr.bf16.mxu0 0
        %1470 = vmatpush1.bf16.msra.mxu0 0
        %1471 = vmatprep.subr.bf16.mxu0 0
        %1472 = vmatpush1.bf16.msra.mxu0 0
        %1473 = vmatprep.subr.bf16.mxu0 0
        %1474 = vmatpush1.bf16.msra.mxu0 0
        %1475 = vmatprep.subr.bf16.mxu0 0
        %1476 = vmatpush1.bf16.msra.mxu0 0
        %1477 = vmatprep.subr.bf16.mxu0 0
        %1478 = vmatpush1.bf16.msra.mxu0 0
        %1479 = vmatprep.subr.bf16.mxu0 0
        %1480 = vmatpush1.bf16.msra.mxu0 %v1440
        %1481 = vmatprep.subr.bf16.mxu0 0
        %1482 = vmatpush1.bf16.msra.mxu0 %v1439
        %1483 = vmatprep.subr.bf16.mxu0 0
        %1484 = vmatpush2.bf16.msra.mxu0 0
        %1485 = vmatprep.subr.bf16.mxu0 0
        %1486 = vmatpush2.bf16.msra.mxu0 0
        %1487 = vmatprep.subr.bf16.mxu0 0
        %1488 = vmatpush2.bf16.msra.mxu0 0
        %1489 = vmatprep.subr.bf16.mxu0 0
        %1490 = vmatpush2.bf16.msra.mxu0 0
        %1491 = vmatprep.subr.bf16.mxu0 0
        %1492 = vmatpush2.bf16.msra.mxu0 0
        %1493 = vmatprep.subr.bf16.mxu0 0
        %1494 = vmatpush2.bf16.msra.mxu0 0
        %1495 = vmatprep.subr.bf16.mxu0 0
        %1496 = vmatpush2.bf16.msra.mxu0 0
        %1497 = vmatprep.subr.bf16.mxu0 0
        %1498 = vmatpush2.bf16.msra.mxu0 0
        %1499 = vmatprep.mubr.bf16.mxu0 0
        %1500 = vmatmul.mubr.bf16.gmra.mxu0 %v1444
        %v1501 = vpop.f32.mrf.mxu0
        %v1502 = vadd.f32 %v1429, %v1501
        %v1503 = vpop.f32.mrf.mxu0
        %v1504 = vpop.f32.mrf.mxu0
        %v1505 = vadd.f32 %v1429, %v1504
        %v1506 = vpop.f32.mrf.mxu0
        %1507 = vmatprep.mubr.bf16.mxu0 0
        %1508 = vmatmul.mubr.bf16.gmra.mxu0 %v1447
        %v1509 = vpop.f32.mrf.mxu0
        %v1510 = vadd.f32 %v1429, %v1509
        %v1511 = vpop.f32.mrf.mxu0
        %v1512 = vpop.f32.mrf.mxu0
        %v1513 = vadd.f32 %v1429, %v1512
        %v1514 = vpop.f32.mrf.mxu0
        %1515 = vmatprep.mubr.bf16.mxu0 0
        %1516 = vmatmul.mubr.bf16.gmra.mxu0 %v1450
        %v1517 = vpop.f32.mrf.mxu0
        %v1518 = vadd.f32 %v1429, %v1517
        %v1519 = vpop.f32.mrf.mxu0
        %v1520 = vpop.f32.mrf.mxu0
        %v1521 = vadd.f32 %v1429, %v1520
        %v1522 = vpop.f32.mrf.mxu0
        %1523 = vmatprep.mubr.bf16.mxu0 0
        %1524 = vmatmul.mubr.bf16.gmra.mxu0 %v1453
        %v1525 = vpop.f32.mrf.mxu0
        %v1526 = vadd.f32 %v1429, %v1525
        %v1527 = vpop.f32.mrf.mxu0
        %v1528 = vpop.f32.mrf.mxu0
        %v1529 = vadd.f32 %v1429, %v1528
        %v1530 = vpop.f32.mrf.mxu0
        %1531 = vmatprep.mubr.bf16.mxu0 0
        %1532 = vmatmul.mubr.bf16.gmra.mxu0 %v1456
        %v1533 = vpop.f32.mrf.mxu0
        %v1534 = vadd.f32 %v1429, %v1533
        %v1535 = vpop.f32.mrf.mxu0
        %v1536 = vpop.f32.mrf.mxu0
        %v1537 = vadd.f32 %v1429, %v1536
        %v1538 = vpop.f32.mrf.mxu0
        %1539 = vmatprep.mubr.bf16.mxu0 0
        %1540 = vmatmul.mubr.bf16.gmra.mxu0 %v1459
        %v1541 = vpop.f32.mrf.mxu0
        %v1542 = vadd.f32 %v1429, %v1541
        %v1543 = vpop.f32.mrf.mxu0
        %v1544 = vpop.f32.mrf.mxu0
        %v1545 = vadd.f32 %v1429, %v1544
        %v1546 = vpop.f32.mrf.mxu0
        %1547 = vmatprep.mubr.bf16.mxu0 0
        %1548 = vmatmul.mubr.bf16.gmra.mxu0 %v1462
        %v1549 = vpop.f32.mrf.mxu0
        %v1550 = vadd.f32 %v1429, %v1549
        %v1551 = vpop.f32.mrf.mxu0
        %v1552 = vpop.f32.mrf.mxu0
        %v1553 = vadd.f32 %v1429, %v1552
        %v1554 = vpop.f32.mrf.mxu0
        %1555 = vmatprep.mubr.bf16.mxu0 0
        %1556 = vmatmul.mubr.bf16.gmra.mxu0 %v1465
        %v1557 = vpop.f32.mrf.mxu0
        %v1558 = vadd.f32 %v1429, %v1557
        %v1559 = vpop.f32.mrf.mxu0
        %v1560 = vpop.f32.mrf.mxu0
        %v1561 = vadd.f32 %v1429, %v1560
        %v1562 = vpop.f32.mrf.mxu0
        %1563 = vdwg.mxu0
        %vm1564 = vcmask 523264
        %v1565 = vsel %vm1564, %v1502, 0.0
        %1566 = vadd.xlane.f32.xlu0 %v1565
        %v1567 = vpop.xlane.xlu0 %1566
        %v1568 = vsel %vm1564, %v1505, 0.0
        %1569 = vadd.xlane.f32.xlu0 %v1568
        %v1570 = vpop.xlane.xlu0 %1569
        %v1571 = vsel %vm1564, %v1510, 0.0
        %1572 = vadd.xlane.f32.xlu0 %v1571
        %v1573 = vpop.xlane.xlu0 %1572
        %v1574 = vsel %vm1564, %v1513, 0.0
        %1575 = vadd.xlane.f32.xlu0 %v1574
        %v1576 = vpop.xlane.xlu0 %1575
        %v1577 = vsel %vm1564, %v1518, 0.0
        %1578 = vadd.xlane.f32.xlu0 %v1577
        %v1579 = vpop.xlane.xlu0 %1578
        %v1580 = vsel %vm1564, %v1521, 0.0
        %1581 = vadd.xlane.f32.xlu0 %v1580
        %v1582 = vpop.xlane.xlu0 %1581
        %v1583 = vsel %vm1564, %v1526, 0.0
        %1584 = vadd.xlane.f32.xlu0 %v1583
        %v1585 = vpop.xlane.xlu0 %1584
        %v1586 = vsel %vm1564, %v1529, 0.0
        %1587 = vadd.xlane.f32.xlu0 %v1586
        %v1588 = vpop.xlane.xlu0 %1587
        %v1589 = vsel %vm1564, %v1534, 0.0
        %1590 = vadd.xlane.f32.xlu0 %v1589
        %v1591 = vpop.xlane.xlu0 %1590
        %v1592 = vsel %vm1564, %v1537, 0.0
        %1593 = vadd.xlane.f32.xlu0 %v1592
        %v1594 = vpop.xlane.xlu0 %1593
        %v1595 = vsel %vm1564, %v1542, 0.0
        %1596 = vadd.xlane.f32.xlu0 %v1595
        %v1597 = vpop.xlane.xlu0 %1596
        %v1598 = vsel %vm1564, %v1545, 0.0
        %1599 = vadd.xlane.f32.xlu0 %v1598
        %v1600 = vpop.xlane.xlu0 %1599
        %v1601 = vsel %vm1564, %v1550, 0.0
        %1602 = vadd.xlane.f32.xlu0 %v1601
        %v1603 = vpop.xlane.xlu0 %1602
        %v1604 = vsel %vm1564, %v1553, 0.0
        %1605 = vadd.xlane.f32.xlu0 %v1604
        %v1606 = vpop.xlane.xlu0 %1605
        %v1607 = vsel %vm1564, %v1558, 0.0
        %1608 = vadd.xlane.f32.xlu0 %v1607
        %v1609 = vpop.xlane.xlu0 %1608
        %v1610 = vsel %vm1564, %v1561, 0.0
        %1611 = vadd.xlane.f32.xlu0 %v1610
        %v1612 = vpop.xlane.xlu0 %1611
        %v1613 = vmul.f32 %v1567, 0.015625
        %v1614 = vmul.f32 %v1570, 0.015625
        %v1615 = vmul.f32 %v1573, 0.015625
        %v1616 = vmul.f32 %v1576, 0.015625
        %v1617 = vmul.f32 %v1579, 0.015625
        %v1618 = vmul.f32 %v1582, 0.015625
        %v1619 = vmul.f32 %v1585, 0.015625
        %v1620 = vmul.f32 %v1588, 0.015625
        %v1621 = vmul.f32 %v1591, 0.015625
        %v1622 = vmul.f32 %v1594, 0.015625
        %v1623 = vmul.f32 %v1597, 0.015625
        %v1624 = vmul.f32 %v1600, 0.015625
        %v1625 = vmul.f32 %v1603, 0.015625
        %v1626 = vmul.f32 %v1606, 0.015625
        %v1627 = vmul.f32 %v1609, 0.015625
        %v1628 = vmul.f32 %v1612, 0.015625
        %v1629 = vsub.f32 %v1502, %v1613
        %v1630 = vsub.f32 %v1505, %v1614
        %v1631 = vsub.f32 %v1510, %v1615
        %v1632 = vsub.f32 %v1513, %v1616
        %v1633 = vsub.f32 %v1518, %v1617
        %v1634 = vsub.f32 %v1521, %v1618
        %v1635 = vsub.f32 %v1526, %v1619
        %v1636 = vsub.f32 %v1529, %v1620
        %v1637 = vsub.f32 %v1534, %v1621
        %v1638 = vsub.f32 %v1537, %v1622
        %v1639 = vsub.f32 %v1542, %v1623
        %v1640 = vsub.f32 %v1545, %v1624
        %v1641 = vsub.f32 %v1550, %v1625
        %v1642 = vsub.f32 %v1553, %v1626
        %v1643 = vsub.f32 %v1558, %v1627
        %v1644 = vsub.f32 %v1561, %v1628
        %v1645 = vmul.f32 %v1629, %v1629
        %v1646 = vmul.f32 %v1630, %v1630
        %v1647 = vmul.f32 %v1631, %v1631
        %v1648 = vmul.f32 %v1632, %v1632
        %v1649 = vmul.f32 %v1633, %v1633
        %v1650 = vmul.f32 %v1634, %v1634
        %v1651 = vmul.f32 %v1635, %v1635
        %v1652 = vmul.f32 %v1636, %v1636
        %v1653 = vmul.f32 %v1637, %v1637
        %v1654 = vmul.f32 %v1638, %v1638
        %v1655 = vmul.f32 %v1639, %v1639
        %v1656 = vmul.f32 %v1640, %v1640
        %v1657 = vmul.f32 %v1641, %v1641
        %v1658 = vmul.f32 %v1642, %v1642
        %v1659 = vmul.f32 %v1643, %v1643
        %v1660 = vmul.f32 %v1644, %v1644
        %v1661 = vsel %vm1564, %v1645, 0.0
        %1662 = vadd.xlane.f32.xlu0 %v1661
        %v1663 = vpop.xlane.xlu0 %1662
        %v1664 = vsel %vm1564, %v1646, 0.0
        %1665 = vadd.xlane.f32.xlu0 %v1664
        %v1666 = vpop.xlane.xlu0 %1665
        %v1667 = vsel %vm1564, %v1647, 0.0
        %1668 = vadd.xlane.f32.xlu0 %v1667
        %v1669 = vpop.xlane.xlu0 %1668
        %v1670 = vsel %vm1564, %v1648, 0.0
        %1671 = vadd.xlane.f32.xlu0 %v1670
        %v1672 = vpop.xlane.xlu0 %1671
        %v1673 = vsel %vm1564, %v1649, 0.0
        %1674 = vadd.xlane.f32.xlu0 %v1673
        %v1675 = vpop.xlane.xlu0 %1674
        %v1676 = vsel %vm1564, %v1650, 0.0
        %1677 = vadd.xlane.f32.xlu0 %v1676
        %v1678 = vpop.xlane.xlu0 %1677
        %v1679 = vsel %vm1564, %v1651, 0.0
        %1680 = vadd.xlane.f32.xlu0 %v1679
        %v1681 = vpop.xlane.xlu0 %1680
        %v1682 = vsel %vm1564, %v1652, 0.0
        %1683 = vadd.xlane.f32.xlu0 %v1682
        %v1684 = vpop.xlane.xlu0 %1683
        %v1685 = vsel %vm1564, %v1653, 0.0
        %1686 = vadd.xlane.f32.xlu0 %v1685
        %v1687 = vpop.xlane.xlu0 %1686
        %v1688 = vsel %vm1564, %v1654, 0.0
        %1689 = vadd.xlane.f32.xlu0 %v1688
        %v1690 = vpop.xlane.xlu0 %1689
        %v1691 = vsel %vm1564, %v1655, 0.0
        %1692 = vadd.xlane.f32.xlu0 %v1691
        %v1693 = vpop.xlane.xlu0 %1692
        %v1694 = vsel %vm1564, %v1656, 0.0
        %1695 = vadd.xlane.f32.xlu0 %v1694
        %v1696 = vpop.xlane.xlu0 %1695
        %v1697 = vsel %vm1564, %v1657, 0.0
        %1698 = vadd.xlane.f32.xlu0 %v1697
        %v1699 = vpop.xlane.xlu0 %1698
        %v1700 = vsel %vm1564, %v1658, 0.0
        %1701 = vadd.xlane.f32.xlu0 %v1700
        %v1702 = vpop.xlane.xlu0 %1701
        %v1703 = vsel %vm1564, %v1659, 0.0
        %1704 = vadd.xlane.f32.xlu0 %v1703
        %v1705 = vpop.xlane.xlu0 %1704
        %v1706 = vsel %vm1564, %v1660, 0.0
        %1707 = vadd.xlane.f32.xlu0 %v1706
        %v1708 = vpop.xlane.xlu0 %1707
        %v1709 = vmul.f32 %v1663, 0.015625
        %v1710 = vmul.f32 %v1666, 0.015625
        %v1711 = vmul.f32 %v1669, 0.015625
        %v1712 = vmul.f32 %v1672, 0.015625
        %v1713 = vmul.f32 %v1675, 0.015625
        %v1714 = vmul.f32 %v1678, 0.015625
        %v1715 = vmul.f32 %v1681, 0.015625
        %v1716 = vmul.f32 %v1684, 0.015625
        %v1717 = vmul.f32 %v1687, 0.015625
        %v1718 = vmul.f32 %v1690, 0.015625
        %v1719 = vmul.f32 %v1693, 0.015625
        %v1720 = vmul.f32 %v1696, 0.015625
        %v1721 = vmul.f32 %v1699, 0.015625
        %v1722 = vmul.f32 %v1702, 0.015625
        %v1723 = vmul.f32 %v1705, 0.015625
        %v1724 = vmul.f32 %v1708, 0.015625
        %v1725 = vadd.f32 %v1709, 1e-05
        %v1726 = vadd.f32 %v1710, 1e-05
        %v1727 = vadd.f32 %v1711, 1e-05
        %v1728 = vadd.f32 %v1712, 1e-05
        %v1729 = vadd.f32 %v1713, 1e-05
        %v1730 = vadd.f32 %v1714, 1e-05
        %v1731 = vadd.f32 %v1715, 1e-05
        %v1732 = vadd.f32 %v1716, 1e-05
        %v1733 = vadd.f32 %v1717, 1e-05
        %v1734 = vadd.f32 %v1718, 1e-05
        %v1735 = vadd.f32 %v1719, 1e-05
        %v1736 = vadd.f32 %v1720, 1e-05
        %v1737 = vadd.f32 %v1721, 1e-05
        %v1738 = vadd.f32 %v1722, 1e-05
        %v1739 = vadd.f32 %v1723, 1e-05
        %v1740 = vadd.f32 %v1724, 1e-05
        %v1741 = vrsqrt.pop %v1725
        %v1742 = vrsqrt.pop %v1726
        %v1743 = vrsqrt.pop %v1727
        %v1744 = vrsqrt.pop %v1728
        %v1745 = vrsqrt.pop %v1729
        %v1746 = vrsqrt.pop %v1730
        %v1747 = vrsqrt.pop %v1731
        %v1748 = vrsqrt.pop %v1732
        %v1749 = vrsqrt.pop %v1733
        %v1750 = vrsqrt.pop %v1734
        %v1751 = vrsqrt.pop %v1735
        %v1752 = vrsqrt.pop %v1736
        %v1753 = vrsqrt.pop %v1737
        %v1754 = vrsqrt.pop %v1738
        %v1755 = vrsqrt.pop %v1739
        %v1756 = vrsqrt.pop %v1740
        %v1757 = vmul.f32 %v1629, %v1741
        %v1758 = vmul.f32 %v1630, %v1742
        %v1759 = vmul.f32 %v1631, %v1743
        %v1760 = vmul.f32 %v1632, %v1744
        %v1761 = vmul.f32 %v1633, %v1745
        %v1762 = vmul.f32 %v1634, %v1746
        %v1763 = vmul.f32 %v1635, %v1747
        %v1764 = vmul.f32 %v1636, %v1748
        %v1765 = vmul.f32 %v1637, %v1749
        %v1766 = vmul.f32 %v1638, %v1750
        %v1767 = vmul.f32 %v1639, %v1751
        %v1768 = vmul.f32 %v1640, %v1752
        %v1769 = vmul.f32 %v1641, %v1753
        %v1770 = vmul.f32 %v1642, %v1754
        %v1771 = vmul.f32 %v1643, %v1755
        %v1772 = vmul.f32 %v1644, %v1756
        %v1774 = vlaneseq
        %v1775 = vshrl.u32 %v1774, 7
        %v1776 = vsub.s32 0, %v1775
        %v1777 = vrot.slane %v1423, %v1776
        %v1779 = vmul.f32 %v1757, %v1777
        %v1780 = vmul.f32 %v1758, %v1777
        %v1781 = vmul.f32 %v1759, %v1777
        %v1782 = vmul.f32 %v1760, %v1777
        %v1783 = vmul.f32 %v1761, %v1777
        %v1784 = vmul.f32 %v1762, %v1777
        %v1785 = vmul.f32 %v1763, %v1777
        %v1786 = vmul.f32 %v1764, %v1777
        %v1787 = vmul.f32 %v1765, %v1777
        %v1788 = vmul.f32 %v1766, %v1777
        %v1789 = vmul.f32 %v1767, %v1777
        %v1790 = vmul.f32 %v1768, %v1777
        %v1791 = vmul.f32 %v1769, %v1777
        %v1792 = vmul.f32 %v1770, %v1777
        %v1793 = vmul.f32 %v1771, %v1777
        %v1794 = vmul.f32 %v1772, %v1777
        %v1796 = vlaneseq
        %v1797 = vshrl.u32 %v1796, 7
        %v1798 = vsub.s32 0, %v1797
        %v1799 = vrot.slane %v1424, %v1798
        %v1801 = vadd.f32 %v1779, %v1799
        %v1802 = vadd.f32 %v1780, %v1799
        %v1803 = vadd.f32 %v1781, %v1799
        %v1804 = vadd.f32 %v1782, %v1799
        %v1805 = vadd.f32 %v1783, %v1799
        %v1806 = vadd.f32 %v1784, %v1799
        %v1807 = vadd.f32 %v1785, %v1799
        %v1808 = vadd.f32 %v1786, %v1799
        %v1809 = vadd.f32 %v1787, %v1799
        %v1810 = vadd.f32 %v1788, %v1799
        %v1811 = vadd.f32 %v1789, %v1799
        %v1812 = vadd.f32 %v1790, %v1799
        %v1813 = vadd.f32 %v1791, %v1799
        %v1814 = vadd.f32 %v1792, %v1799
        %v1815 = vadd.f32 %v1793, %v1799
        %v1816 = vadd.f32 %v1794, %v1799
        %v1817 = vxor.u32 %v1801, 2147483648
        %v1818 = vxor.u32 %v1802, 2147483648
        %v1819 = vxor.u32 %v1803, 2147483648
        %v1820 = vxor.u32 %v1804, 2147483648
        %v1821 = vxor.u32 %v1805, 2147483648
        %v1822 = vxor.u32 %v1806, 2147483648
        %v1823 = vxor.u32 %v1807, 2147483648
        %v1824 = vxor.u32 %v1808, 2147483648
        %v1825 = vxor.u32 %v1809, 2147483648
        %v1826 = vxor.u32 %v1810, 2147483648
        %v1827 = vxor.u32 %v1811, 2147483648
        %v1828 = vxor.u32 %v1812, 2147483648
        %v1829 = vxor.u32 %v1813, 2147483648
        %v1830 = vxor.u32 %v1814, 2147483648
        %v1831 = vxor.u32 %v1815, 2147483648
        %v1832 = vxor.u32 %v1816, 2147483648
        %v1833 = vmul.f32 %v1817, 1.442695
        %v1834 = vpow.pop %v1833
        %v1835 = vmul.f32 %v1818, 1.442695
        %v1836 = vpow.pop %v1835
        %v1837 = vmul.f32 %v1819, 1.442695
        %v1838 = vpow.pop %v1837
        %v1839 = vmul.f32 %v1820, 1.442695
        %v1840 = vpow.pop %v1839
        %v1841 = vmul.f32 %v1821, 1.442695
        %v1842 = vpow.pop %v1841
        %v1843 = vmul.f32 %v1822, 1.442695
        %v1844 = vpow.pop %v1843
        %v1845 = vmul.f32 %v1823, 1.442695
        %v1846 = vpow.pop %v1845
        %v1847 = vmul.f32 %v1824, 1.442695
        %v1848 = vpow.pop %v1847
        %v1849 = vmul.f32 %v1825, 1.442695
        %v1850 = vpow.pop %v1849
        %v1851 = vmul.f32 %v1826, 1.442695
        %v1852 = vpow.pop %v1851
        %v1853 = vmul.f32 %v1827, 1.442695
        %v1854 = vpow.pop %v1853
        %v1855 = vmul.f32 %v1828, 1.442695
        %v1856 = vpow.pop %v1855
        %v1857 = vmul.f32 %v1829, 1.442695
        %v1858 = vpow.pop %v1857
        %v1859 = vmul.f32 %v1830, 1.442695
        %v1860 = vpow.pop %v1859
        %v1861 = vmul.f32 %v1831, 1.442695
        %v1862 = vpow.pop %v1861
        %v1863 = vmul.f32 %v1832, 1.442695
        %v1864 = vpow.pop %v1863
        %v1865 = vadd.f32 %v1834, 1.0
        %v1866 = vadd.f32 %v1836, 1.0
        %v1867 = vadd.f32 %v1838, 1.0
        %v1868 = vadd.f32 %v1840, 1.0
        %v1869 = vadd.f32 %v1842, 1.0
        %v1870 = vadd.f32 %v1844, 1.0
        %v1871 = vadd.f32 %v1846, 1.0
        %v1872 = vadd.f32 %v1848, 1.0
        %v1873 = vadd.f32 %v1850, 1.0
        %v1874 = vadd.f32 %v1852, 1.0
        %v1875 = vadd.f32 %v1854, 1.0
        %v1876 = vadd.f32 %v1856, 1.0
        %v1877 = vadd.f32 %v1858, 1.0
        %v1878 = vadd.f32 %v1860, 1.0
        %v1879 = vadd.f32 %v1862, 1.0
        %v1880 = vadd.f32 %v1864, 1.0
        %v1881 = vrcp.pop %v1865
        %v1882 = vmul.f32 1.0, %v1881
        %v1883 = vrcp.pop %v1866
        %v1884 = vmul.f32 1.0, %v1883
        %v1885 = vrcp.pop %v1867
        %v1886 = vmul.f32 1.0, %v1885
        %v1887 = vrcp.pop %v1868
        %v1888 = vmul.f32 1.0, %v1887
        %v1889 = vrcp.pop %v1869
        %v1890 = vmul.f32 1.0, %v1889
        %v1891 = vrcp.pop %v1870
        %v1892 = vmul.f32 1.0, %v1891
        %v1893 = vrcp.pop %v1871
        %v1894 = vmul.f32 1.0, %v1893
        %v1895 = vrcp.pop %v1872
        %v1896 = vmul.f32 1.0, %v1895
        %v1897 = vrcp.pop %v1873
        %v1898 = vmul.f32 1.0, %v1897
        %v1899 = vrcp.pop %v1874
        %v1900 = vmul.f32 1.0, %v1899
        %v1901 = vrcp.pop %v1875
        %v1902 = vmul.f32 1.0, %v1901
        %v1903 = vrcp.pop %v1876
        %v1904 = vmul.f32 1.0, %v1903
        %v1905 = vrcp.pop %v1877
        %v1906 = vmul.f32 1.0, %v1905
        %v1907 = vrcp.pop %v1878
        %v1908 = vmul.f32 1.0, %v1907
        %v1909 = vrcp.pop %v1879
        %v1910 = vmul.f32 1.0, %v1909
        %v1911 = vrcp.pop %v1880
        %v1912 = vmul.f32 1.0, %v1911
        %1929 = vrot.lane.b32.xlu0 %v1882, 96
        %v1930 = vpop.permute.xlu0 %1929
        %1931 = vrot.lane.b32.xlu0 %v1884, 96
        %v1932 = vpop.permute.xlu0 %1931
        %1933 = vrot.lane.b32.xlu0 %v1886, 96
        %v1934 = vpop.permute.xlu0 %1933
        %1935 = vrot.lane.b32.xlu0 %v1888, 96
        %v1936 = vpop.permute.xlu0 %1935
        %1937 = vrot.lane.b32.xlu0 %v1890, 96
        %v1938 = vpop.permute.xlu0 %1937
        %1939 = vrot.lane.b32.xlu0 %v1892, 96
        %v1940 = vpop.permute.xlu0 %1939
        %1941 = vrot.lane.b32.xlu0 %v1894, 96
        %v1942 = vpop.permute.xlu0 %1941
        %1943 = vrot.lane.b32.xlu0 %v1896, 96
        %v1944 = vpop.permute.xlu0 %1943
        %1945 = vrot.lane.b32.xlu0 %v1898, 96
        %v1946 = vpop.permute.xlu0 %1945
        %1947 = vrot.lane.b32.xlu0 %v1900, 96
        %v1948 = vpop.permute.xlu0 %1947
        %1949 = vrot.lane.b32.xlu0 %v1902, 96
        %v1950 = vpop.permute.xlu0 %1949
        %1951 = vrot.lane.b32.xlu0 %v1904, 96
        %v1952 = vpop.permute.xlu0 %1951
        %1953 = vrot.lane.b32.xlu0 %v1906, 96
        %v1954 = vpop.permute.xlu0 %1953
        %1955 = vrot.lane.b32.xlu0 %v1908, 96
        %v1956 = vpop.permute.xlu0 %1955
        %1957 = vrot.lane.b32.xlu0 %v1910, 96
        %v1958 = vpop.permute.xlu0 %1957
        %1959 = vrot.lane.b32.xlu0 %v1912, 96
        %v1960 = vpop.permute.xlu0 %1959
        %v1977 = vmul.f32 %v1801, %v1930
        %v1978 = vmul.f32 %v1802, %v1932
        %v1979 = vmul.f32 %v1803, %v1934
        %v1980 = vmul.f32 %v1804, %v1936
        %v1981 = vmul.f32 %v1805, %v1938
        %v1982 = vmul.f32 %v1806, %v1940
        %v1983 = vmul.f32 %v1807, %v1942
        %v1984 = vmul.f32 %v1808, %v1944
        %v1985 = vmul.f32 %v1809, %v1946
        %v1986 = vmul.f32 %v1810, %v1948
        %v1987 = vmul.f32 %v1811, %v1950
        %v1988 = vmul.f32 %v1812, %v1952
        %v1989 = vmul.f32 %v1813, %v1954
        %v1990 = vmul.f32 %v1814, %v1956
        %v1991 = vmul.f32 %v1815, %v1958
        %v1992 = vmul.f32 %v1816, %v1960
        %v1993 = vpack.c.bf16 %v1978, %v1977
        %v1994 = vpack.c.bf16 %v1980, %v1979
        %v1995 = vpack.c.bf16 %v1982, %v1981
        %v1996 = vpack.c.bf16 %v1984, %v1983
        %v1997 = vpack.c.bf16 %v1986, %v1985
        %v1998 = vpack.c.bf16 %v1988, %v1987
        %v1999 = vpack.c.bf16 %v1990, %v1989
        %v2000 = vpack.c.bf16 %v1992, %v1991
        %v2001 = vld [vmem:[%s11] sm:$0xf]
        %v2002 = vld [vmem:[%s11 + $0x4] sm:$0xf]
        %v2003 = vld [vmem:[%s11 + $0x8] sm:$0xf]
        %v2004 = vld [vmem:[%s11 + $0xc] sm:$0xf]
        %v2005 = vld [vmem:[%s12] sm:$0x1]
        %v2006 = vld [vmem:[%s13] sm:$0x1]
        %v2007 = vld [vmem:[%s14] sm:$0x1]
        %v2009 = vlaneseq
        %v2010 = vshrl.u32 %v2009, 7
        %v2011 = vsub.s32 0, %v2010
        %v2012 = vrot.slane %v2005, %v2011
        %v2018 = vunpack.c.l.b16 %v2001
        %v2019 = vunpack.c.l.b16 %v2002
        %v2020 = vunpack.c.l.b16 %v2003
        %v2021 = vunpack.c.l.b16 %v2004
        %v2022 = vpack.c.b16 %v2019, %v2018
        %v2023 = vpack.c.b16 %v2021, %v2020
        %v2027 = vsel %vm776, %v1993, 0
        %v2030 = vsel %vm776, %v1994, 0
        %v2033 = vsel %vm776, %v1995, 0
        %v2036 = vsel %vm776, %v1996, 0
        %v2039 = vsel %vm776, %v1997, 0
        %v2042 = vsel %vm776, %v1998, 0
        %v2045 = vsel %vm776, %v1999, 0
        %v2048 = vsel %vm776, %v2000, 0
        %2050 = vmatprep.subr.bf16.mxu0 0
        %2051 = vmatpush1.bf16.msra.mxu0 0
        %2052 = vmatprep.subr.bf16.mxu0 0
        %2053 = vmatpush1.bf16.msra.mxu0 0
        %2054 = vmatprep.subr.bf16.mxu0 0
        %2055 = vmatpush1.bf16.msra.mxu0 0
        %2056 = vmatprep.subr.bf16.mxu0 0
        %2057 = vmatpush1.bf16.msra.mxu0 0
        %2058 = vmatprep.subr.bf16.mxu0 0
        %2059 = vmatpush1.bf16.msra.mxu0 0
        %2060 = vmatprep.subr.bf16.mxu0 0
        %2061 = vmatpush1.bf16.msra.mxu0 0
        %2062 = vmatprep.subr.bf16.mxu0 0
        %2063 = vmatpush1.bf16.msra.mxu0 %v2023
        %2064 = vmatprep.subr.bf16.mxu0 0
        %2065 = vmatpush1.bf16.msra.mxu0 %v2022
        %2066 = vmatprep.subr.bf16.mxu0 0
        %2067 = vmatpush2.bf16.msra.mxu0 0
        %2068 = vmatprep.subr.bf16.mxu0 0
        %2069 = vmatpush2.bf16.msra.mxu0 0
        %2070 = vmatprep.subr.bf16.mxu0 0
        %2071 = vmatpush2.bf16.msra.mxu0 0
        %2072 = vmatprep.subr.bf16.mxu0 0
        %2073 = vmatpush2.bf16.msra.mxu0 0
        %2074 = vmatprep.subr.bf16.mxu0 0
        %2075 = vmatpush2.bf16.msra.mxu0 0
        %2076 = vmatprep.subr.bf16.mxu0 0
        %2077 = vmatpush2.bf16.msra.mxu0 0
        %2078 = vmatprep.subr.bf16.mxu0 0
        %2079 = vmatpush2.bf16.msra.mxu0 0
        %2080 = vmatprep.subr.bf16.mxu0 0
        %2081 = vmatpush2.bf16.msra.mxu0 0
        %2082 = vmatprep.mubr.bf16.mxu0 0
        %2083 = vmatmul.mubr.bf16.gmra.mxu0 %v2027
        %v2084 = vpop.f32.mrf.mxu0
        %v2085 = vadd.f32 %v2012, %v2084
        %v2086 = vpop.f32.mrf.mxu0
        %v2087 = vpop.f32.mrf.mxu0
        %v2088 = vadd.f32 %v2012, %v2087
        %v2089 = vpop.f32.mrf.mxu0
        %2090 = vmatprep.mubr.bf16.mxu0 0
        %2091 = vmatmul.mubr.bf16.gmra.mxu0 %v2030
        %v2092 = vpop.f32.mrf.mxu0
        %v2093 = vadd.f32 %v2012, %v2092
        %v2094 = vpop.f32.mrf.mxu0
        %v2095 = vpop.f32.mrf.mxu0
        %v2096 = vadd.f32 %v2012, %v2095
        %v2097 = vpop.f32.mrf.mxu0
        %2098 = vmatprep.mubr.bf16.mxu0 0
        %2099 = vmatmul.mubr.bf16.gmra.mxu0 %v2033
        %v2100 = vpop.f32.mrf.mxu0
        %v2101 = vadd.f32 %v2012, %v2100
        %v2102 = vpop.f32.mrf.mxu0
        %v2103 = vpop.f32.mrf.mxu0
        %v2104 = vadd.f32 %v2012, %v2103
        %v2105 = vpop.f32.mrf.mxu0
        %2106 = vmatprep.mubr.bf16.mxu0 0
        %2107 = vmatmul.mubr.bf16.gmra.mxu0 %v2036
        %v2108 = vpop.f32.mrf.mxu0
        %v2109 = vadd.f32 %v2012, %v2108
        %v2110 = vpop.f32.mrf.mxu0
        %v2111 = vpop.f32.mrf.mxu0
        %v2112 = vadd.f32 %v2012, %v2111
        %v2113 = vpop.f32.mrf.mxu0
        %2114 = vmatprep.mubr.bf16.mxu0 0
        %2115 = vmatmul.mubr.bf16.gmra.mxu0 %v2039
        %v2116 = vpop.f32.mrf.mxu0
        %v2117 = vadd.f32 %v2012, %v2116
        %v2118 = vpop.f32.mrf.mxu0
        %v2119 = vpop.f32.mrf.mxu0
        %v2120 = vadd.f32 %v2012, %v2119
        %v2121 = vpop.f32.mrf.mxu0
        %2122 = vmatprep.mubr.bf16.mxu0 0
        %2123 = vmatmul.mubr.bf16.gmra.mxu0 %v2042
        %v2124 = vpop.f32.mrf.mxu0
        %v2125 = vadd.f32 %v2012, %v2124
        %v2126 = vpop.f32.mrf.mxu0
        %v2127 = vpop.f32.mrf.mxu0
        %v2128 = vadd.f32 %v2012, %v2127
        %v2129 = vpop.f32.mrf.mxu0
        %2130 = vmatprep.mubr.bf16.mxu0 0
        %2131 = vmatmul.mubr.bf16.gmra.mxu0 %v2045
        %v2132 = vpop.f32.mrf.mxu0
        %v2133 = vadd.f32 %v2012, %v2132
        %v2134 = vpop.f32.mrf.mxu0
        %v2135 = vpop.f32.mrf.mxu0
        %v2136 = vadd.f32 %v2012, %v2135
        %v2137 = vpop.f32.mrf.mxu0
        %2138 = vmatprep.mubr.bf16.mxu0 0
        %2139 = vmatmul.mubr.bf16.gmra.mxu0 %v2048
        %v2140 = vpop.f32.mrf.mxu0
        %v2141 = vadd.f32 %v2012, %v2140
        %v2142 = vpop.f32.mrf.mxu0
        %v2143 = vpop.f32.mrf.mxu0
        %v2144 = vadd.f32 %v2012, %v2143
        %v2145 = vpop.f32.mrf.mxu0
        %2146 = vdwg.mxu0
        %v2147 = vsel %vm1564, %v2085, 0.0
        %2148 = vadd.xlane.f32.xlu0 %v2147
        %v2149 = vpop.xlane.xlu0 %2148
        %v2150 = vsel %vm1564, %v2088, 0.0
        %2151 = vadd.xlane.f32.xlu0 %v2150
        %v2152 = vpop.xlane.xlu0 %2151
        %v2153 = vsel %vm1564, %v2093, 0.0
        %2154 = vadd.xlane.f32.xlu0 %v2153
        %v2155 = vpop.xlane.xlu0 %2154
        %v2156 = vsel %vm1564, %v2096, 0.0
        %2157 = vadd.xlane.f32.xlu0 %v2156
        %v2158 = vpop.xlane.xlu0 %2157
        %v2159 = vsel %vm1564, %v2101, 0.0
        %2160 = vadd.xlane.f32.xlu0 %v2159
        %v2161 = vpop.xlane.xlu0 %2160
        %v2162 = vsel %vm1564, %v2104, 0.0
        %2163 = vadd.xlane.f32.xlu0 %v2162
        %v2164 = vpop.xlane.xlu0 %2163
        %v2165 = vsel %vm1564, %v2109, 0.0
        %2166 = vadd.xlane.f32.xlu0 %v2165
        %v2167 = vpop.xlane.xlu0 %2166
        %v2168 = vsel %vm1564, %v2112, 0.0
        %2169 = vadd.xlane.f32.xlu0 %v2168
        %v2170 = vpop.xlane.xlu0 %2169
        %v2171 = vsel %vm1564, %v2117, 0.0
        %2172 = vadd.xlane.f32.xlu0 %v2171
        %v2173 = vpop.xlane.xlu0 %2172
        %v2174 = vsel %vm1564, %v2120, 0.0
        %2175 = vadd.xlane.f32.xlu0 %v2174
        %v2176 = vpop.xlane.xlu0 %2175
        %v2177 = vsel %vm1564, %v2125, 0.0
        %2178 = vadd.xlane.f32.xlu0 %v2177
        %v2179 = vpop.xlane.xlu0 %2178
        %v2180 = vsel %vm1564, %v2128, 0.0
        %2181 = vadd.xlane.f32.xlu0 %v2180
        %v2182 = vpop.xlane.xlu0 %2181
        %v2183 = vsel %vm1564, %v2133, 0.0
        %2184 = vadd.xlane.f32.xlu0 %v2183
        %v2185 = vpop.xlane.xlu0 %2184
        %v2186 = vsel %vm1564, %v2136, 0.0
        %2187 = vadd.xlane.f32.xlu0 %v2186
        %v2188 = vpop.xlane.xlu0 %2187
        %v2189 = vsel %vm1564, %v2141, 0.0
        %2190 = vadd.xlane.f32.xlu0 %v2189
        %v2191 = vpop.xlane.xlu0 %2190
        %v2192 = vsel %vm1564, %v2144, 0.0
        %2193 = vadd.xlane.f32.xlu0 %v2192
        %v2194 = vpop.xlane.xlu0 %2193
        %v2195 = vmul.f32 %v2149, 0.015625
        %v2196 = vmul.f32 %v2152, 0.015625
        %v2197 = vmul.f32 %v2155, 0.015625
        %v2198 = vmul.f32 %v2158, 0.015625
        %v2199 = vmul.f32 %v2161, 0.015625
        %v2200 = vmul.f32 %v2164, 0.015625
        %v2201 = vmul.f32 %v2167, 0.015625
        %v2202 = vmul.f32 %v2170, 0.015625
        %v2203 = vmul.f32 %v2173, 0.015625
        %v2204 = vmul.f32 %v2176, 0.015625
        %v2205 = vmul.f32 %v2179, 0.015625
        %v2206 = vmul.f32 %v2182, 0.015625
        %v2207 = vmul.f32 %v2185, 0.015625
        %v2208 = vmul.f32 %v2188, 0.015625
        %v2209 = vmul.f32 %v2191, 0.015625
        %v2210 = vmul.f32 %v2194, 0.015625
        %v2211 = vsub.f32 %v2085, %v2195
        %v2212 = vsub.f32 %v2088, %v2196
        %v2213 = vsub.f32 %v2093, %v2197
        %v2214 = vsub.f32 %v2096, %v2198
        %v2215 = vsub.f32 %v2101, %v2199
        %v2216 = vsub.f32 %v2104, %v2200
        %v2217 = vsub.f32 %v2109, %v2201
        %v2218 = vsub.f32 %v2112, %v2202
        %v2219 = vsub.f32 %v2117, %v2203
        %v2220 = vsub.f32 %v2120, %v2204
        %v2221 = vsub.f32 %v2125, %v2205
        %v2222 = vsub.f32 %v2128, %v2206
        %v2223 = vsub.f32 %v2133, %v2207
        %v2224 = vsub.f32 %v2136, %v2208
        %v2225 = vsub.f32 %v2141, %v2209
        %v2226 = vsub.f32 %v2144, %v2210
        %v2227 = vmul.f32 %v2211, %v2211
        %v2228 = vmul.f32 %v2212, %v2212
        %v2229 = vmul.f32 %v2213, %v2213
        %v2230 = vmul.f32 %v2214, %v2214
        %v2231 = vmul.f32 %v2215, %v2215
        %v2232 = vmul.f32 %v2216, %v2216
        %v2233 = vmul.f32 %v2217, %v2217
        %v2234 = vmul.f32 %v2218, %v2218
        %v2235 = vmul.f32 %v2219, %v2219
        %v2236 = vmul.f32 %v2220, %v2220
        %v2237 = vmul.f32 %v2221, %v2221
        %v2238 = vmul.f32 %v2222, %v2222
        %v2239 = vmul.f32 %v2223, %v2223
        %v2240 = vmul.f32 %v2224, %v2224
        %v2241 = vmul.f32 %v2225, %v2225
        %v2242 = vmul.f32 %v2226, %v2226
        %v2243 = vsel %vm1564, %v2227, 0.0
        %2244 = vadd.xlane.f32.xlu0 %v2243
        %v2245 = vpop.xlane.xlu0 %2244
        %v2246 = vsel %vm1564, %v2228, 0.0
        %2247 = vadd.xlane.f32.xlu0 %v2246
        %v2248 = vpop.xlane.xlu0 %2247
        %v2249 = vsel %vm1564, %v2229, 0.0
        %2250 = vadd.xlane.f32.xlu0 %v2249
        %v2251 = vpop.xlane.xlu0 %2250
        %v2252 = vsel %vm1564, %v2230, 0.0
        %2253 = vadd.xlane.f32.xlu0 %v2252
        %v2254 = vpop.xlane.xlu0 %2253
        %v2255 = vsel %vm1564, %v2231, 0.0
        %2256 = vadd.xlane.f32.xlu0 %v2255
        %v2257 = vpop.xlane.xlu0 %2256
        %v2258 = vsel %vm1564, %v2232, 0.0
        %2259 = vadd.xlane.f32.xlu0 %v2258
        %v2260 = vpop.xlane.xlu0 %2259
        %v2261 = vsel %vm1564, %v2233, 0.0
        %2262 = vadd.xlane.f32.xlu0 %v2261
        %v2263 = vpop.xlane.xlu0 %2262
        %v2264 = vsel %vm1564, %v2234, 0.0
        %2265 = vadd.xlane.f32.xlu0 %v2264
        %v2266 = vpop.xlane.xlu0 %2265
        %v2267 = vsel %vm1564, %v2235, 0.0
        %2268 = vadd.xlane.f32.xlu0 %v2267
        %v2269 = vpop.xlane.xlu0 %2268
        %v2270 = vsel %vm1564, %v2236, 0.0
        %2271 = vadd.xlane.f32.xlu0 %v2270
        %v2272 = vpop.xlane.xlu0 %2271
        %v2273 = vsel %vm1564, %v2237, 0.0
        %2274 = vadd.xlane.f32.xlu0 %v2273
        %v2275 = vpop.xlane.xlu0 %2274
        %v2276 = vsel %vm1564, %v2238, 0.0
        %2277 = vadd.xlane.f32.xlu0 %v2276
        %v2278 = vpop.xlane.xlu0 %2277
        %v2279 = vsel %vm1564, %v2239, 0.0
        %2280 = vadd.xlane.f32.xlu0 %v2279
        %v2281 = vpop.xlane.xlu0 %2280
        %v2282 = vsel %vm1564, %v2240, 0.0
        %2283 = vadd.xlane.f32.xlu0 %v2282
        %v2284 = vpop.xlane.xlu0 %2283
        %v2285 = vsel %vm1564, %v2241, 0.0
        %2286 = vadd.xlane.f32.xlu0 %v2285
        %v2287 = vpop.xlane.xlu0 %2286
        %v2288 = vsel %vm1564, %v2242, 0.0
        %2289 = vadd.xlane.f32.xlu0 %v2288
        %v2290 = vpop.xlane.xlu0 %2289
        %v2291 = vmul.f32 %v2245, 0.015625
        %v2292 = vmul.f32 %v2248, 0.015625
        %v2293 = vmul.f32 %v2251, 0.015625
        %v2294 = vmul.f32 %v2254, 0.015625
        %v2295 = vmul.f32 %v2257, 0.015625
        %v2296 = vmul.f32 %v2260, 0.015625
        %v2297 = vmul.f32 %v2263, 0.015625
        %v2298 = vmul.f32 %v2266, 0.015625
        %v2299 = vmul.f32 %v2269, 0.015625
        %v2300 = vmul.f32 %v2272, 0.015625
        %v2301 = vmul.f32 %v2275, 0.015625
        %v2302 = vmul.f32 %v2278, 0.015625
        %v2303 = vmul.f32 %v2281, 0.015625
        %v2304 = vmul.f32 %v2284, 0.015625
        %v2305 = vmul.f32 %v2287, 0.015625
        %v2306 = vmul.f32 %v2290, 0.015625
        %v2307 = vadd.f32 %v2291, 1e-05
        %v2308 = vadd.f32 %v2292, 1e-05
        %v2309 = vadd.f32 %v2293, 1e-05
        %v2310 = vadd.f32 %v2294, 1e-05
        %v2311 = vadd.f32 %v2295, 1e-05
        %v2312 = vadd.f32 %v2296, 1e-05
        %v2313 = vadd.f32 %v2297, 1e-05
        %v2314 = vadd.f32 %v2298, 1e-05
        %v2315 = vadd.f32 %v2299, 1e-05
        %v2316 = vadd.f32 %v2300, 1e-05
        %v2317 = vadd.f32 %v2301, 1e-05
        %v2318 = vadd.f32 %v2302, 1e-05
        %v2319 = vadd.f32 %v2303, 1e-05
        %v2320 = vadd.f32 %v2304, 1e-05
        %v2321 = vadd.f32 %v2305, 1e-05
        %v2322 = vadd.f32 %v2306, 1e-05
        %v2323 = vrsqrt.pop %v2307
        %v2324 = vrsqrt.pop %v2308
        %v2325 = vrsqrt.pop %v2309
        %v2326 = vrsqrt.pop %v2310
        %v2327 = vrsqrt.pop %v2311
        %v2328 = vrsqrt.pop %v2312
        %v2329 = vrsqrt.pop %v2313
        %v2330 = vrsqrt.pop %v2314
        %v2331 = vrsqrt.pop %v2315
        %v2332 = vrsqrt.pop %v2316
        %v2333 = vrsqrt.pop %v2317
        %v2334 = vrsqrt.pop %v2318
        %v2335 = vrsqrt.pop %v2319
        %v2336 = vrsqrt.pop %v2320
        %v2337 = vrsqrt.pop %v2321
        %v2338 = vrsqrt.pop %v2322
        %v2339 = vmul.f32 %v2211, %v2323
        %v2340 = vmul.f32 %v2212, %v2324
        %v2341 = vmul.f32 %v2213, %v2325
        %v2342 = vmul.f32 %v2214, %v2326
        %v2343 = vmul.f32 %v2215, %v2327
        %v2344 = vmul.f32 %v2216, %v2328
        %v2345 = vmul.f32 %v2217, %v2329
        %v2346 = vmul.f32 %v2218, %v2330
        %v2347 = vmul.f32 %v2219, %v2331
        %v2348 = vmul.f32 %v2220, %v2332
        %v2349 = vmul.f32 %v2221, %v2333
        %v2350 = vmul.f32 %v2222, %v2334
        %v2351 = vmul.f32 %v2223, %v2335
        %v2352 = vmul.f32 %v2224, %v2336
        %v2353 = vmul.f32 %v2225, %v2337
        %v2354 = vmul.f32 %v2226, %v2338
        %v2356 = vlaneseq
        %v2357 = vshrl.u32 %v2356, 7
        %v2358 = vsub.s32 0, %v2357
        %v2359 = vrot.slane %v2006, %v2358
        %v2361 = vmul.f32 %v2339, %v2359
        %v2362 = vmul.f32 %v2340, %v2359
        %v2363 = vmul.f32 %v2341, %v2359
        %v2364 = vmul.f32 %v2342, %v2359
        %v2365 = vmul.f32 %v2343, %v2359
        %v2366 = vmul.f32 %v2344, %v2359
        %v2367 = vmul.f32 %v2345, %v2359
        %v2368 = vmul.f32 %v2346, %v2359
        %v2369 = vmul.f32 %v2347, %v2359
        %v2370 = vmul.f32 %v2348, %v2359
        %v2371 = vmul.f32 %v2349, %v2359
        %v2372 = vmul.f32 %v2350, %v2359
        %v2373 = vmul.f32 %v2351, %v2359
        %v2374 = vmul.f32 %v2352, %v2359
        %v2375 = vmul.f32 %v2353, %v2359
        %v2376 = vmul.f32 %v2354, %v2359
        %v2378 = vlaneseq
        %v2379 = vshrl.u32 %v2378, 7
        %v2380 = vsub.s32 0, %v2379
        %v2381 = vrot.slane %v2007, %v2380
        %v2383 = vadd.f32 %v2361, %v2381
        %v2384 = vadd.f32 %v2362, %v2381
        %v2385 = vadd.f32 %v2363, %v2381
        %v2386 = vadd.f32 %v2364, %v2381
        %v2387 = vadd.f32 %v2365, %v2381
        %v2388 = vadd.f32 %v2366, %v2381
        %v2389 = vadd.f32 %v2367, %v2381
        %v2390 = vadd.f32 %v2368, %v2381
        %v2391 = vadd.f32 %v2369, %v2381
        %v2392 = vadd.f32 %v2370, %v2381
        %v2393 = vadd.f32 %v2371, %v2381
        %v2394 = vadd.f32 %v2372, %v2381
        %v2395 = vadd.f32 %v2373, %v2381
        %v2396 = vadd.f32 %v2374, %v2381
        %v2397 = vadd.f32 %v2375, %v2381
        %v2398 = vadd.f32 %v2376, %v2381
        %v2399 = vxor.u32 %v2383, 2147483648
        %v2400 = vxor.u32 %v2384, 2147483648
        %v2401 = vxor.u32 %v2385, 2147483648
        %v2402 = vxor.u32 %v2386, 2147483648
        %v2403 = vxor.u32 %v2387, 2147483648
        %v2404 = vxor.u32 %v2388, 2147483648
        %v2405 = vxor.u32 %v2389, 2147483648
        %v2406 = vxor.u32 %v2390, 2147483648
        %v2407 = vxor.u32 %v2391, 2147483648
        %v2408 = vxor.u32 %v2392, 2147483648
        %v2409 = vxor.u32 %v2393, 2147483648
        %v2410 = vxor.u32 %v2394, 2147483648
        %v2411 = vxor.u32 %v2395, 2147483648
        %v2412 = vxor.u32 %v2396, 2147483648
        %v2413 = vxor.u32 %v2397, 2147483648
        %v2414 = vxor.u32 %v2398, 2147483648
        %v2415 = vmul.f32 %v2399, 1.442695
        %v2416 = vpow.pop %v2415
        %v2417 = vmul.f32 %v2400, 1.442695
        %v2418 = vpow.pop %v2417
        %v2419 = vmul.f32 %v2401, 1.442695
        %v2420 = vpow.pop %v2419
        %v2421 = vmul.f32 %v2402, 1.442695
        %v2422 = vpow.pop %v2421
        %v2423 = vmul.f32 %v2403, 1.442695
        %v2424 = vpow.pop %v2423
        %v2425 = vmul.f32 %v2404, 1.442695
        %v2426 = vpow.pop %v2425
        %v2427 = vmul.f32 %v2405, 1.442695
        %v2428 = vpow.pop %v2427
        %v2429 = vmul.f32 %v2406, 1.442695
        %v2430 = vpow.pop %v2429
        %v2431 = vmul.f32 %v2407, 1.442695
        %v2432 = vpow.pop %v2431
        %v2433 = vmul.f32 %v2408, 1.442695
        %v2434 = vpow.pop %v2433
        %v2435 = vmul.f32 %v2409, 1.442695
        %v2436 = vpow.pop %v2435
        %v2437 = vmul.f32 %v2410, 1.442695
        %v2438 = vpow.pop %v2437
        %v2439 = vmul.f32 %v2411, 1.442695
        %v2440 = vpow.pop %v2439
        %v2441 = vmul.f32 %v2412, 1.442695
        %v2442 = vpow.pop %v2441
        %v2443 = vmul.f32 %v2413, 1.442695
        %v2444 = vpow.pop %v2443
        %v2445 = vmul.f32 %v2414, 1.442695
        %v2446 = vpow.pop %v2445
        %v2447 = vadd.f32 %v2416, 1.0
        %v2448 = vadd.f32 %v2418, 1.0
        %v2449 = vadd.f32 %v2420, 1.0
        %v2450 = vadd.f32 %v2422, 1.0
        %v2451 = vadd.f32 %v2424, 1.0
        %v2452 = vadd.f32 %v2426, 1.0
        %v2453 = vadd.f32 %v2428, 1.0
        %v2454 = vadd.f32 %v2430, 1.0
        %v2455 = vadd.f32 %v2432, 1.0
        %v2456 = vadd.f32 %v2434, 1.0
        %v2457 = vadd.f32 %v2436, 1.0
        %v2458 = vadd.f32 %v2438, 1.0
        %v2459 = vadd.f32 %v2440, 1.0
        %v2460 = vadd.f32 %v2442, 1.0
        %v2461 = vadd.f32 %v2444, 1.0
        %v2462 = vadd.f32 %v2446, 1.0
        %v2463 = vrcp.pop %v2447
        %v2464 = vmul.f32 1.0, %v2463
        %v2465 = vrcp.pop %v2448
        %v2466 = vmul.f32 1.0, %v2465
        %v2467 = vrcp.pop %v2449
        %v2468 = vmul.f32 1.0, %v2467
        %v2469 = vrcp.pop %v2450
        %v2470 = vmul.f32 1.0, %v2469
        %v2471 = vrcp.pop %v2451
        %v2472 = vmul.f32 1.0, %v2471
        %v2473 = vrcp.pop %v2452
        %v2474 = vmul.f32 1.0, %v2473
        %v2475 = vrcp.pop %v2453
        %v2476 = vmul.f32 1.0, %v2475
        %v2477 = vrcp.pop %v2454
        %v2478 = vmul.f32 1.0, %v2477
        %v2479 = vrcp.pop %v2455
        %v2480 = vmul.f32 1.0, %v2479
        %v2481 = vrcp.pop %v2456
        %v2482 = vmul.f32 1.0, %v2481
        %v2483 = vrcp.pop %v2457
        %v2484 = vmul.f32 1.0, %v2483
        %v2485 = vrcp.pop %v2458
        %v2486 = vmul.f32 1.0, %v2485
        %v2487 = vrcp.pop %v2459
        %v2488 = vmul.f32 1.0, %v2487
        %v2489 = vrcp.pop %v2460
        %v2490 = vmul.f32 1.0, %v2489
        %v2491 = vrcp.pop %v2461
        %v2492 = vmul.f32 1.0, %v2491
        %v2493 = vrcp.pop %v2462
        %v2494 = vmul.f32 1.0, %v2493
        %2511 = vrot.lane.b32.xlu0 %v2464, 96
        %v2512 = vpop.permute.xlu0 %2511
        %2513 = vrot.lane.b32.xlu0 %v2466, 96
        %v2514 = vpop.permute.xlu0 %2513
        %2515 = vrot.lane.b32.xlu0 %v2468, 96
        %v2516 = vpop.permute.xlu0 %2515
        %2517 = vrot.lane.b32.xlu0 %v2470, 96
        %v2518 = vpop.permute.xlu0 %2517
        %2519 = vrot.lane.b32.xlu0 %v2472, 96
        %v2520 = vpop.permute.xlu0 %2519
        %2521 = vrot.lane.b32.xlu0 %v2474, 96
        %v2522 = vpop.permute.xlu0 %2521
        %2523 = vrot.lane.b32.xlu0 %v2476, 96
        %v2524 = vpop.permute.xlu0 %2523
        %2525 = vrot.lane.b32.xlu0 %v2478, 96
        %v2526 = vpop.permute.xlu0 %2525
        %2527 = vrot.lane.b32.xlu0 %v2480, 96
        %v2528 = vpop.permute.xlu0 %2527
        %2529 = vrot.lane.b32.xlu0 %v2482, 96
        %v2530 = vpop.permute.xlu0 %2529
        %2531 = vrot.lane.b32.xlu0 %v2484, 96
        %v2532 = vpop.permute.xlu0 %2531
        %2533 = vrot.lane.b32.xlu0 %v2486, 96
        %v2534 = vpop.permute.xlu0 %2533
        %2535 = vrot.lane.b32.xlu0 %v2488, 96
        %v2536 = vpop.permute.xlu0 %2535
        %2537 = vrot.lane.b32.xlu0 %v2490, 96
        %v2538 = vpop.permute.xlu0 %2537
        %2539 = vrot.lane.b32.xlu0 %v2492, 96
        %v2540 = vpop.permute.xlu0 %2539
        %2541 = vrot.lane.b32.xlu0 %v2494, 96
        %v2542 = vpop.permute.xlu0 %2541
        %v2559 = vmul.f32 %v2383, %v2512
        %v2560 = vmul.f32 %v2384, %v2514
        %v2561 = vmul.f32 %v2385, %v2516
        %v2562 = vmul.f32 %v2386, %v2518
        %v2563 = vmul.f32 %v2387, %v2520
        %v2564 = vmul.f32 %v2388, %v2522
        %v2565 = vmul.f32 %v2389, %v2524
        %v2566 = vmul.f32 %v2390, %v2526
        %v2567 = vmul.f32 %v2391, %v2528
        %v2568 = vmul.f32 %v2392, %v2530
        %v2569 = vmul.f32 %v2393, %v2532
        %v2570 = vmul.f32 %v2394, %v2534
        %v2571 = vmul.f32 %v2395, %v2536
        %v2572 = vmul.f32 %v2396, %v2538
        %v2573 = vmul.f32 %v2397, %v2540
        %v2574 = vmul.f32 %v2398, %v2542
        %v2575 = vadd.f32 %v1977, %v2559
        %v2576 = vadd.f32 %v1978, %v2560
        %v2577 = vadd.f32 %v1979, %v2561
        %v2578 = vadd.f32 %v1980, %v2562
        %v2579 = vadd.f32 %v1981, %v2563
        %v2580 = vadd.f32 %v1982, %v2564
        %v2581 = vadd.f32 %v1983, %v2565
        %v2582 = vadd.f32 %v1984, %v2566
        %v2583 = vadd.f32 %v1985, %v2567
        %v2584 = vadd.f32 %v1986, %v2568
        %v2585 = vadd.f32 %v1987, %v2569
        %v2586 = vadd.f32 %v1988, %v2570
        %v2587 = vadd.f32 %v1989, %v2571
        %v2588 = vadd.f32 %v1990, %v2572
        %v2589 = vadd.f32 %v1991, %v2573
        %v2590 = vadd.f32 %v1992, %v2574
        %v2591 = vmul.f32 %v2575, 0.70710677
        %v2592 = vmul.f32 %v2576, 0.70710677
        %v2593 = vmul.f32 %v2577, 0.70710677
        %v2594 = vmul.f32 %v2578, 0.70710677
        %v2595 = vmul.f32 %v2579, 0.70710677
        %v2596 = vmul.f32 %v2580, 0.70710677
        %v2597 = vmul.f32 %v2581, 0.70710677
        %v2598 = vmul.f32 %v2582, 0.70710677
        %v2599 = vmul.f32 %v2583, 0.70710677
        %v2600 = vmul.f32 %v2584, 0.70710677
        %v2601 = vmul.f32 %v2585, 0.70710677
        %v2602 = vmul.f32 %v2586, 0.70710677
        %v2603 = vmul.f32 %v2587, 0.70710677
        %v2604 = vmul.f32 %v2588, 0.70710677
        %v2605 = vmul.f32 %v2589, 0.70710677
        %v2606 = vmul.f32 %v2590, 0.70710677
        %v2607 = vpack.c.bf16 %v2592, %v2591
        %v2608 = vpack.c.bf16 %v2594, %v2593
        %v2609 = vpack.c.bf16 %v2596, %v2595
        %v2610 = vpack.c.bf16 %v2598, %v2597
        %v2611 = vpack.c.bf16 %v2600, %v2599
        %v2612 = vpack.c.bf16 %v2602, %v2601
        %v2613 = vpack.c.bf16 %v2604, %v2603
        %v2614 = vpack.c.bf16 %v2606, %v2605
        %s2615 = scalar_lea.vmem %s11, 16
        %v2616 = vld [vmem:[%s2615] sm:$0xf]
        %v2617 = vld [vmem:[%s2615 + $0x4] sm:$0xf]
        %v2618 = vld [vmem:[%s2615 + $0x8] sm:$0xf]
        %v2619 = vld [vmem:[%s2615 + $0xc] sm:$0xf]
        %s2620 = scalar_lea.vmem %s12, 1
        %v2621 = vld [vmem:[%s2620] sm:$0x1]
        %s2622 = scalar_lea.vmem %s13, 1
        %v2623 = vld [vmem:[%s2622] sm:$0x1]
        %s2624 = scalar_lea.vmem %s14, 1
        %v2625 = vld [vmem:[%s2624] sm:$0x1]
        %v2627 = vlaneseq
        %v2628 = vshrl.u32 %v2627, 7
        %v2629 = vsub.s32 0, %v2628
        %v2630 = vrot.slane %v2621, %v2629
        %v2636 = vunpack.c.l.b16 %v2616
        %v2637 = vunpack.c.l.b16 %v2617
        %v2638 = vunpack.c.l.b16 %v2618
        %v2639 = vunpack.c.l.b16 %v2619
        %v2640 = vpack.c.b16 %v2637, %v2636
        %v2641 = vpack.c.b16 %v2639, %v2638
        %v2645 = vsel %vm776, %v2607, 0
        %v2648 = vsel %vm776, %v2608, 0
        %v2651 = vsel %vm776, %v2609, 0
        %v2654 = vsel %vm776, %v2610, 0
        %v2657 = vsel %vm776, %v2611, 0
        %v2660 = vsel %vm776, %v2612, 0
        %v2663 = vsel %vm776, %v2613, 0
        %v2666 = vsel %vm776, %v2614, 0
        %2668 = vmatprep.subr.bf16.mxu0 0
        %2669 = vmatpush1.bf16.msra.mxu0 0
        %2670 = vmatprep.subr.bf16.mxu0 0
        %2671 = vmatpush1.bf16.msra.mxu0 0
        %2672 = vmatprep.subr.bf16.mxu0 0
        %2673 = vmatpush1.bf16.msra.mxu0 0
        %2674 = vmatprep.subr.bf16.mxu0 0
        %2675 = vmatpush1.bf16.msra.mxu0 0
        %2676 = vmatprep.subr.bf16.mxu0 0
        %2677 = vmatpush1.bf16.msra.mxu0 0
        %2678 = vmatprep.subr.bf16.mxu0 0
        %2679 = vmatpush1.bf16.msra.mxu0 0
        %2680 = vmatprep.subr.bf16.mxu0 0
        %2681 = vmatpush1.bf16.msra.mxu0 %v2641
        %2682 = vmatprep.subr.bf16.mxu0 0
        %2683 = vmatpush1.bf16.msra.mxu0 %v2640
        %2684 = vmatprep.subr.bf16.mxu0 0
        %2685 = vmatpush2.bf16.msra.mxu0 0
        %2686 = vmatprep.subr.bf16.mxu0 0
        %2687 = vmatpush2.bf16.msra.mxu0 0
        %2688 = vmatprep.subr.bf16.mxu0 0
        %2689 = vmatpush2.bf16.msra.mxu0 0
        %2690 = vmatprep.subr.bf16.mxu0 0
        %2691 = vmatpush2.bf16.msra.mxu0 0
        %2692 = vmatprep.subr.bf16.mxu0 0
        %2693 = vmatpush2.bf16.msra.mxu0 0
        %2694 = vmatprep.subr.bf16.mxu0 0
        %2695 = vmatpush2.bf16.msra.mxu0 0
        %2696 = vmatprep.subr.bf16.mxu0 0
        %2697 = vmatpush2.bf16.msra.mxu0 0
        %2698 = vmatprep.subr.bf16.mxu0 0
        %2699 = vmatpush2.bf16.msra.mxu0 0
        %2700 = vmatprep.mubr.bf16.mxu0 0
        %2701 = vmatmul.mubr.bf16.gmra.mxu0 %v2645
        %v2702 = vpop.f32.mrf.mxu0
        %v2703 = vadd.f32 %v2630, %v2702
        %v2704 = vpop.f32.mrf.mxu0
        %v2705 = vpop.f32.mrf.mxu0
        %v2706 = vadd.f32 %v2630, %v2705
        %v2707 = vpop.f32.mrf.mxu0
        %2708 = vmatprep.mubr.bf16.mxu0 0
        %2709 = vmatmul.mubr.bf16.gmra.mxu0 %v2648
        %v2710 = vpop.f32.mrf.mxu0
        %v2711 = vadd.f32 %v2630, %v2710
        %v2712 = vpop.f32.mrf.mxu0
        %v2713 = vpop.f32.mrf.mxu0
        %v2714 = vadd.f32 %v2630, %v2713
        %v2715 = vpop.f32.mrf.mxu0
        %2716 = vmatprep.mubr.bf16.mxu0 0
        %2717 = vmatmul.mubr.bf16.gmra.mxu0 %v2651
        %v2718 = vpop.f32.mrf.mxu0
        %v2719 = vadd.f32 %v2630, %v2718
        %v2720 = vpop.f32.mrf.mxu0
        %v2721 = vpop.f32.mrf.mxu0
        %v2722 = vadd.f32 %v2630, %v2721
        %v2723 = vpop.f32.mrf.mxu0
        %2724 = vmatprep.mubr.bf16.mxu0 0
        %2725 = vmatmul.mubr.bf16.gmra.mxu0 %v2654
        %v2726 = vpop.f32.mrf.mxu0
        %v2727 = vadd.f32 %v2630, %v2726
        %v2728 = vpop.f32.mrf.mxu0
        %v2729 = vpop.f32.mrf.mxu0
        %v2730 = vadd.f32 %v2630, %v2729
        %v2731 = vpop.f32.mrf.mxu0
        %2732 = vmatprep.mubr.bf16.mxu0 0
        %2733 = vmatmul.mubr.bf16.gmra.mxu0 %v2657
        %v2734 = vpop.f32.mrf.mxu0
        %v2735 = vadd.f32 %v2630, %v2734
        %v2736 = vpop.f32.mrf.mxu0
        %v2737 = vpop.f32.mrf.mxu0
        %v2738 = vadd.f32 %v2630, %v2737
        %v2739 = vpop.f32.mrf.mxu0
        %2740 = vmatprep.mubr.bf16.mxu0 0
        %2741 = vmatmul.mubr.bf16.gmra.mxu0 %v2660
        %v2742 = vpop.f32.mrf.mxu0
        %v2743 = vadd.f32 %v2630, %v2742
        %v2744 = vpop.f32.mrf.mxu0
        %v2745 = vpop.f32.mrf.mxu0
        %v2746 = vadd.f32 %v2630, %v2745
        %v2747 = vpop.f32.mrf.mxu0
        %2748 = vmatprep.mubr.bf16.mxu0 0
        %2749 = vmatmul.mubr.bf16.gmra.mxu0 %v2663
        %v2750 = vpop.f32.mrf.mxu0
        %v2751 = vadd.f32 %v2630, %v2750
        %v2752 = vpop.f32.mrf.mxu0
        %v2753 = vpop.f32.mrf.mxu0
        %v2754 = vadd.f32 %v2630, %v2753
        %v2755 = vpop.f32.mrf.mxu0
        %2756 = vmatprep.mubr.bf16.mxu0 0
        %2757 = vmatmul.mubr.bf16.gmra.mxu0 %v2666
        %v2758 = vpop.f32.mrf.mxu0
        %v2759 = vadd.f32 %v2630, %v2758
        %v2760 = vpop.f32.mrf.mxu0
        %v2761 = vpop.f32.mrf.mxu0
        %v2762 = vadd.f32 %v2630, %v2761
        %v2763 = vpop.f32.mrf.mxu0
        %2764 = vdwg.mxu0
        %v2765 = vsel %vm1564, %v2703, 0.0
        %2766 = vadd.xlane.f32.xlu0 %v2765
        %v2767 = vpop.xlane.xlu0 %2766
        %v2768 = vsel %vm1564, %v2706, 0.0
        %2769 = vadd.xlane.f32.xlu0 %v2768
        %v2770 = vpop.xlane.xlu0 %2769
        %v2771 = vsel %vm1564, %v2711, 0.0
        %2772 = vadd.xlane.f32.xlu0 %v2771
        %v2773 = vpop.xlane.xlu0 %2772
        %v2774 = vsel %vm1564, %v2714, 0.0
        %2775 = vadd.xlane.f32.xlu0 %v2774
        %v2776 = vpop.xlane.xlu0 %2775
        %v2777 = vsel %vm1564, %v2719, 0.0
        %2778 = vadd.xlane.f32.xlu0 %v2777
        %v2779 = vpop.xlane.xlu0 %2778
        %v2780 = vsel %vm1564, %v2722, 0.0
        %2781 = vadd.xlane.f32.xlu0 %v2780
        %v2782 = vpop.xlane.xlu0 %2781
        %v2783 = vsel %vm1564, %v2727, 0.0
        %2784 = vadd.xlane.f32.xlu0 %v2783
        %v2785 = vpop.xlane.xlu0 %2784
        %v2786 = vsel %vm1564, %v2730, 0.0
        %2787 = vadd.xlane.f32.xlu0 %v2786
        %v2788 = vpop.xlane.xlu0 %2787
        %v2789 = vsel %vm1564, %v2735, 0.0
        %2790 = vadd.xlane.f32.xlu0 %v2789
        %v2791 = vpop.xlane.xlu0 %2790
        %v2792 = vsel %vm1564, %v2738, 0.0
        %2793 = vadd.xlane.f32.xlu0 %v2792
        %v2794 = vpop.xlane.xlu0 %2793
        %v2795 = vsel %vm1564, %v2743, 0.0
        %2796 = vadd.xlane.f32.xlu0 %v2795
        %v2797 = vpop.xlane.xlu0 %2796
        %v2798 = vsel %vm1564, %v2746, 0.0
        %2799 = vadd.xlane.f32.xlu0 %v2798
        %v2800 = vpop.xlane.xlu0 %2799
        %v2801 = vsel %vm1564, %v2751, 0.0
        %2802 = vadd.xlane.f32.xlu0 %v2801
        %v2803 = vpop.xlane.xlu0 %2802
        %v2804 = vsel %vm1564, %v2754, 0.0
        %2805 = vadd.xlane.f32.xlu0 %v2804
        %v2806 = vpop.xlane.xlu0 %2805
        %v2807 = vsel %vm1564, %v2759, 0.0
        %2808 = vadd.xlane.f32.xlu0 %v2807
        %v2809 = vpop.xlane.xlu0 %2808
        %v2810 = vsel %vm1564, %v2762, 0.0
        %2811 = vadd.xlane.f32.xlu0 %v2810
        %v2812 = vpop.xlane.xlu0 %2811
        %v2813 = vmul.f32 %v2767, 0.015625
        %v2814 = vmul.f32 %v2770, 0.015625
        %v2815 = vmul.f32 %v2773, 0.015625
        %v2816 = vmul.f32 %v2776, 0.015625
        %v2817 = vmul.f32 %v2779, 0.015625
        %v2818 = vmul.f32 %v2782, 0.015625
        %v2819 = vmul.f32 %v2785, 0.015625
        %v2820 = vmul.f32 %v2788, 0.015625
        %v2821 = vmul.f32 %v2791, 0.015625
        %v2822 = vmul.f32 %v2794, 0.015625
        %v2823 = vmul.f32 %v2797, 0.015625
        %v2824 = vmul.f32 %v2800, 0.015625
        %v2825 = vmul.f32 %v2803, 0.015625
        %v2826 = vmul.f32 %v2806, 0.015625
        %v2827 = vmul.f32 %v2809, 0.015625
        %v2828 = vmul.f32 %v2812, 0.015625
        %v2829 = vsub.f32 %v2703, %v2813
        %v2830 = vsub.f32 %v2706, %v2814
        %v2831 = vsub.f32 %v2711, %v2815
        %v2832 = vsub.f32 %v2714, %v2816
        %v2833 = vsub.f32 %v2719, %v2817
        %v2834 = vsub.f32 %v2722, %v2818
        %v2835 = vsub.f32 %v2727, %v2819
        %v2836 = vsub.f32 %v2730, %v2820
        %v2837 = vsub.f32 %v2735, %v2821
        %v2838 = vsub.f32 %v2738, %v2822
        %v2839 = vsub.f32 %v2743, %v2823
        %v2840 = vsub.f32 %v2746, %v2824
        %v2841 = vsub.f32 %v2751, %v2825
        %v2842 = vsub.f32 %v2754, %v2826
        %v2843 = vsub.f32 %v2759, %v2827
        %v2844 = vsub.f32 %v2762, %v2828
        %v2845 = vmul.f32 %v2829, %v2829
        %v2846 = vmul.f32 %v2830, %v2830
        %v2847 = vmul.f32 %v2831, %v2831
        %v2848 = vmul.f32 %v2832, %v2832
        %v2849 = vmul.f32 %v2833, %v2833
        %v2850 = vmul.f32 %v2834, %v2834
        %v2851 = vmul.f32 %v2835, %v2835
        %v2852 = vmul.f32 %v2836, %v2836
        %v2853 = vmul.f32 %v2837, %v2837
        %v2854 = vmul.f32 %v2838, %v2838
        %v2855 = vmul.f32 %v2839, %v2839
        %v2856 = vmul.f32 %v2840, %v2840
        %v2857 = vmul.f32 %v2841, %v2841
        %v2858 = vmul.f32 %v2842, %v2842
        %v2859 = vmul.f32 %v2843, %v2843
        %v2860 = vmul.f32 %v2844, %v2844
        %v2861 = vsel %vm1564, %v2845, 0.0
        %2862 = vadd.xlane.f32.xlu0 %v2861
        %v2863 = vpop.xlane.xlu0 %2862
        %v2864 = vsel %vm1564, %v2846, 0.0
        %2865 = vadd.xlane.f32.xlu0 %v2864
        %v2866 = vpop.xlane.xlu0 %2865
        %v2867 = vsel %vm1564, %v2847, 0.0
        %2868 = vadd.xlane.f32.xlu0 %v2867
        %v2869 = vpop.xlane.xlu0 %2868
        %v2870 = vsel %vm1564, %v2848, 0.0
        %2871 = vadd.xlane.f32.xlu0 %v2870
        %v2872 = vpop.xlane.xlu0 %2871
        %v2873 = vsel %vm1564, %v2849, 0.0
        %2874 = vadd.xlane.f32.xlu0 %v2873
        %v2875 = vpop.xlane.xlu0 %2874
        %v2876 = vsel %vm1564, %v2850, 0.0
        %2877 = vadd.xlane.f32.xlu0 %v2876
        %v2878 = vpop.xlane.xlu0 %2877
        %v2879 = vsel %vm1564, %v2851, 0.0
        %2880 = vadd.xlane.f32.xlu0 %v2879
        %v2881 = vpop.xlane.xlu0 %2880
        %v2882 = vsel %vm1564, %v2852, 0.0
        %2883 = vadd.xlane.f32.xlu0 %v2882
        %v2884 = vpop.xlane.xlu0 %2883
        %v2885 = vsel %vm1564, %v2853, 0.0
        %2886 = vadd.xlane.f32.xlu0 %v2885
        %v2887 = vpop.xlane.xlu0 %2886
        %v2888 = vsel %vm1564, %v2854, 0.0
        %2889 = vadd.xlane.f32.xlu0 %v2888
        %v2890 = vpop.xlane.xlu0 %2889
        %v2891 = vsel %vm1564, %v2855, 0.0
        %2892 = vadd.xlane.f32.xlu0 %v2891
        %v2893 = vpop.xlane.xlu0 %2892
        %v2894 = vsel %vm1564, %v2856, 0.0
        %2895 = vadd.xlane.f32.xlu0 %v2894
        %v2896 = vpop.xlane.xlu0 %2895
        %v2897 = vsel %vm1564, %v2857, 0.0
        %2898 = vadd.xlane.f32.xlu0 %v2897
        %v2899 = vpop.xlane.xlu0 %2898
        %v2900 = vsel %vm1564, %v2858, 0.0
        %2901 = vadd.xlane.f32.xlu0 %v2900
        %v2902 = vpop.xlane.xlu0 %2901
        %v2903 = vsel %vm1564, %v2859, 0.0
        %2904 = vadd.xlane.f32.xlu0 %v2903
        %v2905 = vpop.xlane.xlu0 %2904
        %v2906 = vsel %vm1564, %v2860, 0.0
        %2907 = vadd.xlane.f32.xlu0 %v2906
        %v2908 = vpop.xlane.xlu0 %2907
        %v2909 = vmul.f32 %v2863, 0.015625
        %v2910 = vmul.f32 %v2866, 0.015625
        %v2911 = vmul.f32 %v2869, 0.015625
        %v2912 = vmul.f32 %v2872, 0.015625
        %v2913 = vmul.f32 %v2875, 0.015625
        %v2914 = vmul.f32 %v2878, 0.015625
        %v2915 = vmul.f32 %v2881, 0.015625
        %v2916 = vmul.f32 %v2884, 0.015625
        %v2917 = vmul.f32 %v2887, 0.015625
        %v2918 = vmul.f32 %v2890, 0.015625
        %v2919 = vmul.f32 %v2893, 0.015625
        %v2920 = vmul.f32 %v2896, 0.015625
        %v2921 = vmul.f32 %v2899, 0.015625
        %v2922 = vmul.f32 %v2902, 0.015625
        %v2923 = vmul.f32 %v2905, 0.015625
        %v2924 = vmul.f32 %v2908, 0.015625
        %v2925 = vadd.f32 %v2909, 1e-05
        %v2926 = vadd.f32 %v2910, 1e-05
        %v2927 = vadd.f32 %v2911, 1e-05
        %v2928 = vadd.f32 %v2912, 1e-05
        %v2929 = vadd.f32 %v2913, 1e-05
        %v2930 = vadd.f32 %v2914, 1e-05
        %v2931 = vadd.f32 %v2915, 1e-05
        %v2932 = vadd.f32 %v2916, 1e-05
        %v2933 = vadd.f32 %v2917, 1e-05
        %v2934 = vadd.f32 %v2918, 1e-05
        %v2935 = vadd.f32 %v2919, 1e-05
        %v2936 = vadd.f32 %v2920, 1e-05
        %v2937 = vadd.f32 %v2921, 1e-05
        %v2938 = vadd.f32 %v2922, 1e-05
        %v2939 = vadd.f32 %v2923, 1e-05
        %v2940 = vadd.f32 %v2924, 1e-05
        %v2941 = vrsqrt.pop %v2925
        %v2942 = vrsqrt.pop %v2926
        %v2943 = vrsqrt.pop %v2927
        %v2944 = vrsqrt.pop %v2928
        %v2945 = vrsqrt.pop %v2929
        %v2946 = vrsqrt.pop %v2930
        %v2947 = vrsqrt.pop %v2931
        %v2948 = vrsqrt.pop %v2932
        %v2949 = vrsqrt.pop %v2933
        %v2950 = vrsqrt.pop %v2934
        %v2951 = vrsqrt.pop %v2935
        %v2952 = vrsqrt.pop %v2936
        %v2953 = vrsqrt.pop %v2937
        %v2954 = vrsqrt.pop %v2938
        %v2955 = vrsqrt.pop %v2939
        %v2956 = vrsqrt.pop %v2940
        %v2957 = vmul.f32 %v2829, %v2941
        %v2958 = vmul.f32 %v2830, %v2942
        %v2959 = vmul.f32 %v2831, %v2943
        %v2960 = vmul.f32 %v2832, %v2944
        %v2961 = vmul.f32 %v2833, %v2945
        %v2962 = vmul.f32 %v2834, %v2946
        %v2963 = vmul.f32 %v2835, %v2947
        %v2964 = vmul.f32 %v2836, %v2948
        %v2965 = vmul.f32 %v2837, %v2949
        %v2966 = vmul.f32 %v2838, %v2950
        %v2967 = vmul.f32 %v2839, %v2951
        %v2968 = vmul.f32 %v2840, %v2952
        %v2969 = vmul.f32 %v2841, %v2953
        %v2970 = vmul.f32 %v2842, %v2954
        %v2971 = vmul.f32 %v2843, %v2955
        %v2972 = vmul.f32 %v2844, %v2956
        %v2974 = vlaneseq
        %v2975 = vshrl.u32 %v2974, 7
        %v2976 = vsub.s32 0, %v2975
        %v2977 = vrot.slane %v2623, %v2976
        %v2979 = vmul.f32 %v2957, %v2977
        %v2980 = vmul.f32 %v2958, %v2977
        %v2981 = vmul.f32 %v2959, %v2977
        %v2982 = vmul.f32 %v2960, %v2977
        %v2983 = vmul.f32 %v2961, %v2977
        %v2984 = vmul.f32 %v2962, %v2977
        %v2985 = vmul.f32 %v2963, %v2977
        %v2986 = vmul.f32 %v2964, %v2977
        %v2987 = vmul.f32 %v2965, %v2977
        %v2988 = vmul.f32 %v2966, %v2977
        %v2989 = vmul.f32 %v2967, %v2977
        %v2990 = vmul.f32 %v2968, %v2977
        %v2991 = vmul.f32 %v2969, %v2977
        %v2992 = vmul.f32 %v2970, %v2977
        %v2993 = vmul.f32 %v2971, %v2977
        %v2994 = vmul.f32 %v2972, %v2977
        %v2996 = vlaneseq
        %v2997 = vshrl.u32 %v2996, 7
        %v2998 = vsub.s32 0, %v2997
        %v2999 = vrot.slane %v2625, %v2998
        %v3001 = vadd.f32 %v2979, %v2999
        %v3002 = vadd.f32 %v2980, %v2999
        %v3003 = vadd.f32 %v2981, %v2999
        %v3004 = vadd.f32 %v2982, %v2999
        %v3005 = vadd.f32 %v2983, %v2999
        %v3006 = vadd.f32 %v2984, %v2999
        %v3007 = vadd.f32 %v2985, %v2999
        %v3008 = vadd.f32 %v2986, %v2999
        %v3009 = vadd.f32 %v2987, %v2999
        %v3010 = vadd.f32 %v2988, %v2999
        %v3011 = vadd.f32 %v2989, %v2999
        %v3012 = vadd.f32 %v2990, %v2999
        %v3013 = vadd.f32 %v2991, %v2999
        %v3014 = vadd.f32 %v2992, %v2999
        %v3015 = vadd.f32 %v2993, %v2999
        %v3016 = vadd.f32 %v2994, %v2999
        %v3017 = vxor.u32 %v3001, 2147483648
        %v3018 = vxor.u32 %v3002, 2147483648
        %v3019 = vxor.u32 %v3003, 2147483648
        %v3020 = vxor.u32 %v3004, 2147483648
        %v3021 = vxor.u32 %v3005, 2147483648
        %v3022 = vxor.u32 %v3006, 2147483648
        %v3023 = vxor.u32 %v3007, 2147483648
        %v3024 = vxor.u32 %v3008, 2147483648
        %v3025 = vxor.u32 %v3009, 2147483648
        %v3026 = vxor.u32 %v3010, 2147483648
        %v3027 = vxor.u32 %v3011, 2147483648
        %v3028 = vxor.u32 %v3012, 2147483648
        %v3029 = vxor.u32 %v3013, 2147483648
        %v3030 = vxor.u32 %v3014, 2147483648
        %v3031 = vxor.u32 %v3015, 2147483648
        %v3032 = vxor.u32 %v3016, 2147483648
        %v3033 = vmul.f32 %v3017, 1.442695
        %v3034 = vpow.pop %v3033
        %v3035 = vmul.f32 %v3018, 1.442695
        %v3036 = vpow.pop %v3035
        %v3037 = vmul.f32 %v3019, 1.442695
        %v3038 = vpow.pop %v3037
        %v3039 = vmul.f32 %v3020, 1.442695
        %v3040 = vpow.pop %v3039
        %v3041 = vmul.f32 %v3021, 1.442695
        %v3042 = vpow.pop %v3041
        %v3043 = vmul.f32 %v3022, 1.442695
        %v3044 = vpow.pop %v3043
        %v3045 = vmul.f32 %v3023, 1.442695
        %v3046 = vpow.pop %v3045
        %v3047 = vmul.f32 %v3024, 1.442695
        %v3048 = vpow.pop %v3047
        %v3049 = vmul.f32 %v3025, 1.442695
        %v3050 = vpow.pop %v3049
        %v3051 = vmul.f32 %v3026, 1.442695
        %v3052 = vpow.pop %v3051
        %v3053 = vmul.f32 %v3027, 1.442695
        %v3054 = vpow.pop %v3053
        %v3055 = vmul.f32 %v3028, 1.442695
        %v3056 = vpow.pop %v3055
        %v3057 = vmul.f32 %v3029, 1.442695
        %v3058 = vpow.pop %v3057
        %v3059 = vmul.f32 %v3030, 1.442695
        %v3060 = vpow.pop %v3059
        %v3061 = vmul.f32 %v3031, 1.442695
        %v3062 = vpow.pop %v3061
        %v3063 = vmul.f32 %v3032, 1.442695
        %v3064 = vpow.pop %v3063
        %v3065 = vadd.f32 %v3034, 1.0
        %v3066 = vadd.f32 %v3036, 1.0
        %v3067 = vadd.f32 %v3038, 1.0
        %v3068 = vadd.f32 %v3040, 1.0
        %v3069 = vadd.f32 %v3042, 1.0
        %v3070 = vadd.f32 %v3044, 1.0
        %v3071 = vadd.f32 %v3046, 1.0
        %v3072 = vadd.f32 %v3048, 1.0
        %v3073 = vadd.f32 %v3050, 1.0
        %v3074 = vadd.f32 %v3052, 1.0
        %v3075 = vadd.f32 %v3054, 1.0
        %v3076 = vadd.f32 %v3056, 1.0
        %v3077 = vadd.f32 %v3058, 1.0
        %v3078 = vadd.f32 %v3060, 1.0
        %v3079 = vadd.f32 %v3062, 1.0
        %v3080 = vadd.f32 %v3064, 1.0
        %v3081 = vrcp.pop %v3065
        %v3082 = vmul.f32 1.0, %v3081
        %v3083 = vrcp.pop %v3066
        %v3084 = vmul.f32 1.0, %v3083
        %v3085 = vrcp.pop %v3067
        %v3086 = vmul.f32 1.0, %v3085
        %v3087 = vrcp.pop %v3068
        %v3088 = vmul.f32 1.0, %v3087
        %v3089 = vrcp.pop %v3069
        %v3090 = vmul.f32 1.0, %v3089
        %v3091 = vrcp.pop %v3070
        %v3092 = vmul.f32 1.0, %v3091
        %v3093 = vrcp.pop %v3071
        %v3094 = vmul.f32 1.0, %v3093
        %v3095 = vrcp.pop %v3072
        %v3096 = vmul.f32 1.0, %v3095
        %v3097 = vrcp.pop %v3073
        %v3098 = vmul.f32 1.0, %v3097
        %v3099 = vrcp.pop %v3074
        %v3100 = vmul.f32 1.0, %v3099
        %v3101 = vrcp.pop %v3075
        %v3102 = vmul.f32 1.0, %v3101
        %v3103 = vrcp.pop %v3076
        %v3104 = vmul.f32 1.0, %v3103
        %v3105 = vrcp.pop %v3077
        %v3106 = vmul.f32 1.0, %v3105
        %v3107 = vrcp.pop %v3078
        %v3108 = vmul.f32 1.0, %v3107
        %v3109 = vrcp.pop %v3079
        %v3110 = vmul.f32 1.0, %v3109
        %v3111 = vrcp.pop %v3080
        %v3112 = vmul.f32 1.0, %v3111
        %3129 = vrot.lane.b32.xlu0 %v3082, 96
        %v3130 = vpop.permute.xlu0 %3129
        %3131 = vrot.lane.b32.xlu0 %v3084, 96
        %v3132 = vpop.permute.xlu0 %3131
        %3133 = vrot.lane.b32.xlu0 %v3086, 96
        %v3134 = vpop.permute.xlu0 %3133
        %3135 = vrot.lane.b32.xlu0 %v3088, 96
        %v3136 = vpop.permute.xlu0 %3135
        %3137 = vrot.lane.b32.xlu0 %v3090, 96
        %v3138 = vpop.permute.xlu0 %3137
        %3139 = vrot.lane.b32.xlu0 %v3092, 96
        %v3140 = vpop.permute.xlu0 %3139
        %3141 = vrot.lane.b32.xlu0 %v3094, 96
        %v3142 = vpop.permute.xlu0 %3141
        %3143 = vrot.lane.b32.xlu0 %v3096, 96
        %v3144 = vpop.permute.xlu0 %3143
        %3145 = vrot.lane.b32.xlu0 %v3098, 96
        %v3146 = vpop.permute.xlu0 %3145
        %3147 = vrot.lane.b32.xlu0 %v3100, 96
        %v3148 = vpop.permute.xlu0 %3147
        %3149 = vrot.lane.b32.xlu0 %v3102, 96
        %v3150 = vpop.permute.xlu0 %3149
        %3151 = vrot.lane.b32.xlu0 %v3104, 96
        %v3152 = vpop.permute.xlu0 %3151
        %3153 = vrot.lane.b32.xlu0 %v3106, 96
        %v3154 = vpop.permute.xlu0 %3153
        %3155 = vrot.lane.b32.xlu0 %v3108, 96
        %v3156 = vpop.permute.xlu0 %3155
        %3157 = vrot.lane.b32.xlu0 %v3110, 96
        %v3158 = vpop.permute.xlu0 %3157
        %3159 = vrot.lane.b32.xlu0 %v3112, 96
        %v3160 = vpop.permute.xlu0 %3159
        %v3177 = vmul.f32 %v3001, %v3130
        %v3178 = vmul.f32 %v3002, %v3132
        %v3179 = vmul.f32 %v3003, %v3134
        %v3180 = vmul.f32 %v3004, %v3136
        %v3181 = vmul.f32 %v3005, %v3138
        %v3182 = vmul.f32 %v3006, %v3140
        %v3183 = vmul.f32 %v3007, %v3142
        %v3184 = vmul.f32 %v3008, %v3144
        %v3185 = vmul.f32 %v3009, %v3146
        %v3186 = vmul.f32 %v3010, %v3148
        %v3187 = vmul.f32 %v3011, %v3150
        %v3188 = vmul.f32 %v3012, %v3152
        %v3189 = vmul.f32 %v3013, %v3154
        %v3190 = vmul.f32 %v3014, %v3156
        %v3191 = vmul.f32 %v3015, %v3158
        %v3192 = vmul.f32 %v3016, %v3160
        %v3193 = vadd.f32 %v2591, %v3177
        %v3194 = vadd.f32 %v2592, %v3178
        %v3195 = vadd.f32 %v2593, %v3179
        %v3196 = vadd.f32 %v2594, %v3180
        %v3197 = vadd.f32 %v2595, %v3181
        %v3198 = vadd.f32 %v2596, %v3182
        %v3199 = vadd.f32 %v2597, %v3183
        %v3200 = vadd.f32 %v2598, %v3184
        %v3201 = vadd.f32 %v2599, %v3185
        %v3202 = vadd.f32 %v2600, %v3186
        %v3203 = vadd.f32 %v2601, %v3187
        %v3204 = vadd.f32 %v2602, %v3188
        %v3205 = vadd.f32 %v2603, %v3189
        %v3206 = vadd.f32 %v2604, %v3190
        %v3207 = vadd.f32 %v2605, %v3191
        %v3208 = vadd.f32 %v2606, %v3192
        %v3209 = vmul.f32 %v3193, 0.70710677
        %v3210 = vmul.f32 %v3194, 0.70710677
        %v3211 = vmul.f32 %v3195, 0.70710677
        %v3212 = vmul.f32 %v3196, 0.70710677
        %v3213 = vmul.f32 %v3197, 0.70710677
        %v3214 = vmul.f32 %v3198, 0.70710677
        %v3215 = vmul.f32 %v3199, 0.70710677
        %v3216 = vmul.f32 %v3200, 0.70710677
        %v3217 = vmul.f32 %v3201, 0.70710677
        %v3218 = vmul.f32 %v3202, 0.70710677
        %v3219 = vmul.f32 %v3203, 0.70710677
        %v3220 = vmul.f32 %v3204, 0.70710677
        %v3221 = vmul.f32 %v3205, 0.70710677
        %v3222 = vmul.f32 %v3206, 0.70710677
        %v3223 = vmul.f32 %v3207, 0.70710677
        %v3224 = vmul.f32 %v3208, 0.70710677
        %v3225 = vpack.c.bf16 %v3210, %v3209
        %v3226 = vpack.c.bf16 %v3212, %v3211
        %v3227 = vpack.c.bf16 %v3214, %v3213
        %v3228 = vpack.c.bf16 %v3216, %v3215
        %v3229 = vpack.c.bf16 %v3218, %v3217
        %v3230 = vpack.c.bf16 %v3220, %v3219
        %v3231 = vpack.c.bf16 %v3222, %v3221
        %v3232 = vpack.c.bf16 %v3224, %v3223
        %s3233 = scalar_lea.vmem %s11, 32
        %v3234 = vld [vmem:[%s3233] sm:$0xf]
        %v3235 = vld [vmem:[%s3233 + $0x4] sm:$0xf]
        %v3236 = vld [vmem:[%s3233 + $0x8] sm:$0xf]
        %v3237 = vld [vmem:[%s3233 + $0xc] sm:$0xf]
        %s3238 = scalar_lea.vmem %s12, 2
        %v3239 = vld [vmem:[%s3238] sm:$0x1]
        %s3240 = scalar_lea.vmem %s13, 2
        %v3241 = vld [vmem:[%s3240] sm:$0x1]
        %s3242 = scalar_lea.vmem %s14, 2
        %v3243 = vld [vmem:[%s3242] sm:$0x1]
        %v3245 = vlaneseq
        %v3246 = vshrl.u32 %v3245, 7
        %v3247 = vsub.s32 0, %v3246
        %v3248 = vrot.slane %v3239, %v3247
        %v3254 = vunpack.c.l.b16 %v3234
        %v3255 = vunpack.c.l.b16 %v3235
        %v3256 = vunpack.c.l.b16 %v3236
        %v3257 = vunpack.c.l.b16 %v3237
        %v3258 = vpack.c.b16 %v3255, %v3254
        %v3259 = vpack.c.b16 %v3257, %v3256
        %v3263 = vsel %vm776, %v3225, 0
        %v3266 = vsel %vm776, %v3226, 0
        %v3269 = vsel %vm776, %v3227, 0
        %v3272 = vsel %vm776, %v3228, 0
        %v3275 = vsel %vm776, %v3229, 0
        %v3278 = vsel %vm776, %v3230, 0
        %v3281 = vsel %vm776, %v3231, 0
        %v3284 = vsel %vm776, %v3232, 0
        %3286 = vmatprep.subr.bf16.mxu0 0
        %3287 = vmatpush1.bf16.msra.mxu0 0
        %3288 = vmatprep.subr.bf16.mxu0 0
        %3289 = vmatpush1.bf16.msra.mxu0 0
        %3290 = vmatprep.subr.bf16.mxu0 0
        %3291 = vmatpush1.bf16.msra.mxu0 0
        %3292 = vmatprep.subr.bf16.mxu0 0
        %3293 = vmatpush1.bf16.msra.mxu0 0
        %3294 = vmatprep.subr.bf16.mxu0 0
        %3295 = vmatpush1.bf16.msra.mxu0 0
        %3296 = vmatprep.subr.bf16.mxu0 0
        %3297 = vmatpush1.bf16.msra.mxu0 0
        %3298 = vmatprep.subr.bf16.mxu0 0
        %3299 = vmatpush1.bf16.msra.mxu0 %v3259
        %3300 = vmatprep.subr.bf16.mxu0 0
        %3301 = vmatpush1.bf16.msra.mxu0 %v3258
        %3302 = vmatprep.subr.bf16.mxu0 0
        %3303 = vmatpush2.bf16.msra.mxu0 0
        %3304 = vmatprep.subr.bf16.mxu0 0
        %3305 = vmatpush2.bf16.msra.mxu0 0
        %3306 = vmatprep.subr.bf16.mxu0 0
        %3307 = vmatpush2.bf16.msra.mxu0 0
        %3308 = vmatprep.subr.bf16.mxu0 0
        %3309 = vmatpush2.bf16.msra.mxu0 0
        %3310 = vmatprep.subr.bf16.mxu0 0
        %3311 = vmatpush2.bf16.msra.mxu0 0
        %3312 = vmatprep.subr.bf16.mxu0 0
        %3313 = vmatpush2.bf16.msra.mxu0 0
        %3314 = vmatprep.subr.bf16.mxu0 0
        %3315 = vmatpush2.bf16.msra.mxu0 0
        %3316 = vmatprep.subr.bf16.mxu0 0
        %3317 = vmatpush2.bf16.msra.mxu0 0
        %3318 = vmatprep.mubr.bf16.mxu0 0
        %3319 = vmatmul.mubr.bf16.gmra.mxu0 %v3263
        %v3320 = vpop.f32.mrf.mxu0
        %v3321 = vadd.f32 %v3248, %v3320
        %v3322 = vpop.f32.mrf.mxu0
        %v3323 = vpop.f32.mrf.mxu0
        %v3324 = vadd.f32 %v3248, %v3323
        %v3325 = vpop.f32.mrf.mxu0
        %3326 = vmatprep.mubr.bf16.mxu0 0
        %3327 = vmatmul.mubr.bf16.gmra.mxu0 %v3266
        %v3328 = vpop.f32.mrf.mxu0
        %v3329 = vadd.f32 %v3248, %v3328
        %v3330 = vpop.f32.mrf.mxu0
        %v3331 = vpop.f32.mrf.mxu0
        %v3332 = vadd.f32 %v3248, %v3331
        %v3333 = vpop.f32.mrf.mxu0
        %3334 = vmatprep.mubr.bf16.mxu0 0
        %3335 = vmatmul.mubr.bf16.gmra.mxu0 %v3269
        %v3336 = vpop.f32.mrf.mxu0
        %v3337 = vadd.f32 %v3248, %v3336
        %v3338 = vpop.f32.mrf.mxu0
        %v3339 = vpop.f32.mrf.mxu0
        %v3340 = vadd.f32 %v3248, %v3339
        %v3341 = vpop.f32.mrf.mxu0
        %3342 = vmatprep.mubr.bf16.mxu0 0
        %3343 = vmatmul.mubr.bf16.gmra.mxu0 %v3272
        %v3344 = vpop.f32.mrf.mxu0
        %v3345 = vadd.f32 %v3248, %v3344
        %v3346 = vpop.f32.mrf.mxu0
        %v3347 = vpop.f32.mrf.mxu0
        %v3348 = vadd.f32 %v3248, %v3347
        %v3349 = vpop.f32.mrf.mxu0
        %3350 = vmatprep.mubr.bf16.mxu0 0
        %3351 = vmatmul.mubr.bf16.gmra.mxu0 %v3275
        %v3352 = vpop.f32.mrf.mxu0
        %v3353 = vadd.f32 %v3248, %v3352
        %v3354 = vpop.f32.mrf.mxu0
        %v3355 = vpop.f32.mrf.mxu0
        %v3356 = vadd.f32 %v3248, %v3355
        %v3357 = vpop.f32.mrf.mxu0
        %3358 = vmatprep.mubr.bf16.mxu0 0
        %3359 = vmatmul.mubr.bf16.gmra.mxu0 %v3278
        %v3360 = vpop.f32.mrf.mxu0
        %v3361 = vadd.f32 %v3248, %v3360
        %v3362 = vpop.f32.mrf.mxu0
        %v3363 = vpop.f32.mrf.mxu0
        %v3364 = vadd.f32 %v3248, %v3363
        %v3365 = vpop.f32.mrf.mxu0
        %3366 = vmatprep.mubr.bf16.mxu0 0
        %3367 = vmatmul.mubr.bf16.gmra.mxu0 %v3281
        %v3368 = vpop.f32.mrf.mxu0
        %v3369 = vadd.f32 %v3248, %v3368
        %v3370 = vpop.f32.mrf.mxu0
        %v3371 = vpop.f32.mrf.mxu0
        %v3372 = vadd.f32 %v3248, %v3371
        %v3373 = vpop.f32.mrf.mxu0
        %3374 = vmatprep.mubr.bf16.mxu0 0
        %3375 = vmatmul.mubr.bf16.gmra.mxu0 %v3284
        %v3376 = vpop.f32.mrf.mxu0
        %v3377 = vadd.f32 %v3248, %v3376
        %v3378 = vpop.f32.mrf.mxu0
        %v3379 = vpop.f32.mrf.mxu0
        %v3380 = vadd.f32 %v3248, %v3379
        %v3381 = vpop.f32.mrf.mxu0
        %3382 = vdwg.mxu0
        %v3383 = vsel %vm1564, %v3321, 0.0
        %3384 = vadd.xlane.f32.xlu0 %v3383
        %v3385 = vpop.xlane.xlu0 %3384
        %v3386 = vsel %vm1564, %v3324, 0.0
        %3387 = vadd.xlane.f32.xlu0 %v3386
        %v3388 = vpop.xlane.xlu0 %3387
        %v3389 = vsel %vm1564, %v3329, 0.0
        %3390 = vadd.xlane.f32.xlu0 %v3389
        %v3391 = vpop.xlane.xlu0 %3390
        %v3392 = vsel %vm1564, %v3332, 0.0
        %3393 = vadd.xlane.f32.xlu0 %v3392
        %v3394 = vpop.xlane.xlu0 %3393
        %v3395 = vsel %vm1564, %v3337, 0.0
        %3396 = vadd.xlane.f32.xlu0 %v3395
        %v3397 = vpop.xlane.xlu0 %3396
        %v3398 = vsel %vm1564, %v3340, 0.0
        %3399 = vadd.xlane.f32.xlu0 %v3398
        %v3400 = vpop.xlane.xlu0 %3399
        %v3401 = vsel %vm1564, %v3345, 0.0
        %3402 = vadd.xlane.f32.xlu0 %v3401
        %v3403 = vpop.xlane.xlu0 %3402
        %v3404 = vsel %vm1564, %v3348, 0.0
        %3405 = vadd.xlane.f32.xlu0 %v3404
        %v3406 = vpop.xlane.xlu0 %3405
        %v3407 = vsel %vm1564, %v3353, 0.0
        %3408 = vadd.xlane.f32.xlu0 %v3407
        %v3409 = vpop.xlane.xlu0 %3408
        %v3410 = vsel %vm1564, %v3356, 0.0
        %3411 = vadd.xlane.f32.xlu0 %v3410
        %v3412 = vpop.xlane.xlu0 %3411
        %v3413 = vsel %vm1564, %v3361, 0.0
        %3414 = vadd.xlane.f32.xlu0 %v3413
        %v3415 = vpop.xlane.xlu0 %3414
        %v3416 = vsel %vm1564, %v3364, 0.0
        %3417 = vadd.xlane.f32.xlu0 %v3416
        %v3418 = vpop.xlane.xlu0 %3417
        %v3419 = vsel %vm1564, %v3369, 0.0
        %3420 = vadd.xlane.f32.xlu0 %v3419
        %v3421 = vpop.xlane.xlu0 %3420
        %v3422 = vsel %vm1564, %v3372, 0.0
        %3423 = vadd.xlane.f32.xlu0 %v3422
        %v3424 = vpop.xlane.xlu0 %3423
        %v3425 = vsel %vm1564, %v3377, 0.0
        %3426 = vadd.xlane.f32.xlu0 %v3425
        %v3427 = vpop.xlane.xlu0 %3426
        %v3428 = vsel %vm1564, %v3380, 0.0
        %3429 = vadd.xlane.f32.xlu0 %v3428
        %v3430 = vpop.xlane.xlu0 %3429
        %v3431 = vmul.f32 %v3385, 0.015625
        %v3432 = vmul.f32 %v3388, 0.015625
        %v3433 = vmul.f32 %v3391, 0.015625
        %v3434 = vmul.f32 %v3394, 0.015625
        %v3435 = vmul.f32 %v3397, 0.015625
        %v3436 = vmul.f32 %v3400, 0.015625
        %v3437 = vmul.f32 %v3403, 0.015625
        %v3438 = vmul.f32 %v3406, 0.015625
        %v3439 = vmul.f32 %v3409, 0.015625
        %v3440 = vmul.f32 %v3412, 0.015625
        %v3441 = vmul.f32 %v3415, 0.015625
        %v3442 = vmul.f32 %v3418, 0.015625
        %v3443 = vmul.f32 %v3421, 0.015625
        %v3444 = vmul.f32 %v3424, 0.015625
        %v3445 = vmul.f32 %v3427, 0.015625
        %v3446 = vmul.f32 %v3430, 0.015625
        %v3447 = vsub.f32 %v3321, %v3431
        %v3448 = vsub.f32 %v3324, %v3432
        %v3449 = vsub.f32 %v3329, %v3433
        %v3450 = vsub.f32 %v3332, %v3434
        %v3451 = vsub.f32 %v3337, %v3435
        %v3452 = vsub.f32 %v3340, %v3436
        %v3453 = vsub.f32 %v3345, %v3437
        %v3454 = vsub.f32 %v3348, %v3438
        %v3455 = vsub.f32 %v3353, %v3439
        %v3456 = vsub.f32 %v3356, %v3440
        %v3457 = vsub.f32 %v3361, %v3441
        %v3458 = vsub.f32 %v3364, %v3442
        %v3459 = vsub.f32 %v3369, %v3443
        %v3460 = vsub.f32 %v3372, %v3444
        %v3461 = vsub.f32 %v3377, %v3445
        %v3462 = vsub.f32 %v3380, %v3446
        %v3463 = vmul.f32 %v3447, %v3447
        %v3464 = vmul.f32 %v3448, %v3448
        %v3465 = vmul.f32 %v3449, %v3449
        %v3466 = vmul.f32 %v3450, %v3450
        %v3467 = vmul.f32 %v3451, %v3451
        %v3468 = vmul.f32 %v3452, %v3452
        %v3469 = vmul.f32 %v3453, %v3453
        %v3470 = vmul.f32 %v3454, %v3454
        %v3471 = vmul.f32 %v3455, %v3455
        %v3472 = vmul.f32 %v3456, %v3456
        %v3473 = vmul.f32 %v3457, %v3457
        %v3474 = vmul.f32 %v3458, %v3458
        %v3475 = vmul.f32 %v3459, %v3459
        %v3476 = vmul.f32 %v3460, %v3460
        %v3477 = vmul.f32 %v3461, %v3461
        %v3478 = vmul.f32 %v3462, %v3462
        %v3479 = vsel %vm1564, %v3463, 0.0
        %3480 = vadd.xlane.f32.xlu0 %v3479
        %v3481 = vpop.xlane.xlu0 %3480
        %v3482 = vsel %vm1564, %v3464, 0.0
        %3483 = vadd.xlane.f32.xlu0 %v3482
        %v3484 = vpop.xlane.xlu0 %3483
        %v3485 = vsel %vm1564, %v3465, 0.0
        %3486 = vadd.xlane.f32.xlu0 %v3485
        %v3487 = vpop.xlane.xlu0 %3486
        %v3488 = vsel %vm1564, %v3466, 0.0
        %3489 = vadd.xlane.f32.xlu0 %v3488
        %v3490 = vpop.xlane.xlu0 %3489
        %v3491 = vsel %vm1564, %v3467, 0.0
        %3492 = vadd.xlane.f32.xlu0 %v3491
        %v3493 = vpop.xlane.xlu0 %3492
        %v3494 = vsel %vm1564, %v3468, 0.0
        %3495 = vadd.xlane.f32.xlu0 %v3494
        %v3496 = vpop.xlane.xlu0 %3495
        %v3497 = vsel %vm1564, %v3469, 0.0
        %3498 = vadd.xlane.f32.xlu0 %v3497
        %v3499 = vpop.xlane.xlu0 %3498
        %v3500 = vsel %vm1564, %v3470, 0.0
        %3501 = vadd.xlane.f32.xlu0 %v3500
        %v3502 = vpop.xlane.xlu0 %3501
        %v3503 = vsel %vm1564, %v3471, 0.0
        %3504 = vadd.xlane.f32.xlu0 %v3503
        %v3505 = vpop.xlane.xlu0 %3504
        %v3506 = vsel %vm1564, %v3472, 0.0
        %3507 = vadd.xlane.f32.xlu0 %v3506
        %v3508 = vpop.xlane.xlu0 %3507
        %v3509 = vsel %vm1564, %v3473, 0.0
        %3510 = vadd.xlane.f32.xlu0 %v3509
        %v3511 = vpop.xlane.xlu0 %3510
        %v3512 = vsel %vm1564, %v3474, 0.0
        %3513 = vadd.xlane.f32.xlu0 %v3512
        %v3514 = vpop.xlane.xlu0 %3513
        %v3515 = vsel %vm1564, %v3475, 0.0
        %3516 = vadd.xlane.f32.xlu0 %v3515
        %v3517 = vpop.xlane.xlu0 %3516
        %v3518 = vsel %vm1564, %v3476, 0.0
        %3519 = vadd.xlane.f32.xlu0 %v3518
        %v3520 = vpop.xlane.xlu0 %3519
        %v3521 = vsel %vm1564, %v3477, 0.0
        %3522 = vadd.xlane.f32.xlu0 %v3521
        %v3523 = vpop.xlane.xlu0 %3522
        %v3524 = vsel %vm1564, %v3478, 0.0
        %3525 = vadd.xlane.f32.xlu0 %v3524
        %v3526 = vpop.xlane.xlu0 %3525
        %v3527 = vmul.f32 %v3481, 0.015625
        %v3528 = vmul.f32 %v3484, 0.015625
        %v3529 = vmul.f32 %v3487, 0.015625
        %v3530 = vmul.f32 %v3490, 0.015625
        %v3531 = vmul.f32 %v3493, 0.015625
        %v3532 = vmul.f32 %v3496, 0.015625
        %v3533 = vmul.f32 %v3499, 0.015625
        %v3534 = vmul.f32 %v3502, 0.015625
        %v3535 = vmul.f32 %v3505, 0.015625
        %v3536 = vmul.f32 %v3508, 0.015625
        %v3537 = vmul.f32 %v3511, 0.015625
        %v3538 = vmul.f32 %v3514, 0.015625
        %v3539 = vmul.f32 %v3517, 0.015625
        %v3540 = vmul.f32 %v3520, 0.015625
        %v3541 = vmul.f32 %v3523, 0.015625
        %v3542 = vmul.f32 %v3526, 0.015625
        %v3543 = vadd.f32 %v3527, 1e-05
        %v3544 = vadd.f32 %v3528, 1e-05
        %v3545 = vadd.f32 %v3529, 1e-05
        %v3546 = vadd.f32 %v3530, 1e-05
        %v3547 = vadd.f32 %v3531, 1e-05
        %v3548 = vadd.f32 %v3532, 1e-05
        %v3549 = vadd.f32 %v3533, 1e-05
        %v3550 = vadd.f32 %v3534, 1e-05
        %v3551 = vadd.f32 %v3535, 1e-05
        %v3552 = vadd.f32 %v3536, 1e-05
        %v3553 = vadd.f32 %v3537, 1e-05
        %v3554 = vadd.f32 %v3538, 1e-05
        %v3555 = vadd.f32 %v3539, 1e-05
        %v3556 = vadd.f32 %v3540, 1e-05
        %v3557 = vadd.f32 %v3541, 1e-05
        %v3558 = vadd.f32 %v3542, 1e-05
        %v3559 = vrsqrt.pop %v3543
        %v3560 = vrsqrt.pop %v3544
        %v3561 = vrsqrt.pop %v3545
        %v3562 = vrsqrt.pop %v3546
        %v3563 = vrsqrt.pop %v3547
        %v3564 = vrsqrt.pop %v3548
        %v3565 = vrsqrt.pop %v3549
        %v3566 = vrsqrt.pop %v3550
        %v3567 = vrsqrt.pop %v3551
        %v3568 = vrsqrt.pop %v3552
        %v3569 = vrsqrt.pop %v3553
        %v3570 = vrsqrt.pop %v3554
        %v3571 = vrsqrt.pop %v3555
        %v3572 = vrsqrt.pop %v3556
        %v3573 = vrsqrt.pop %v3557
        %v3574 = vrsqrt.pop %v3558
        %v3575 = vmul.f32 %v3447, %v3559
        %v3576 = vmul.f32 %v3448, %v3560
        %v3577 = vmul.f32 %v3449, %v3561
        %v3578 = vmul.f32 %v3450, %v3562
        %v3579 = vmul.f32 %v3451, %v3563
        %v3580 = vmul.f32 %v3452, %v3564
        %v3581 = vmul.f32 %v3453, %v3565
        %v3582 = vmul.f32 %v3454, %v3566
        %v3583 = vmul.f32 %v3455, %v3567
        %v3584 = vmul.f32 %v3456, %v3568
        %v3585 = vmul.f32 %v3457, %v3569
        %v3586 = vmul.f32 %v3458, %v3570
        %v3587 = vmul.f32 %v3459, %v3571
        %v3588 = vmul.f32 %v3460, %v3572
        %v3589 = vmul.f32 %v3461, %v3573
        %v3590 = vmul.f32 %v3462, %v3574
        %v3592 = vlaneseq
        %v3593 = vshrl.u32 %v3592, 7
        %v3594 = vsub.s32 0, %v3593
        %v3595 = vrot.slane %v3241, %v3594
        %v3597 = vmul.f32 %v3575, %v3595
        %v3598 = vmul.f32 %v3576, %v3595
        %v3599 = vmul.f32 %v3577, %v3595
        %v3600 = vmul.f32 %v3578, %v3595
        %v3601 = vmul.f32 %v3579, %v3595
        %v3602 = vmul.f32 %v3580, %v3595
        %v3603 = vmul.f32 %v3581, %v3595
        %v3604 = vmul.f32 %v3582, %v3595
        %v3605 = vmul.f32 %v3583, %v3595
        %v3606 = vmul.f32 %v3584, %v3595
        %v3607 = vmul.f32 %v3585, %v3595
        %v3608 = vmul.f32 %v3586, %v3595
        %v3609 = vmul.f32 %v3587, %v3595
        %v3610 = vmul.f32 %v3588, %v3595
        %v3611 = vmul.f32 %v3589, %v3595
        %v3612 = vmul.f32 %v3590, %v3595
        %v3614 = vlaneseq
        %v3615 = vshrl.u32 %v3614, 7
        %v3616 = vsub.s32 0, %v3615
        %v3617 = vrot.slane %v3243, %v3616
        %v3619 = vadd.f32 %v3597, %v3617
        %v3620 = vadd.f32 %v3598, %v3617
        %v3621 = vadd.f32 %v3599, %v3617
        %v3622 = vadd.f32 %v3600, %v3617
        %v3623 = vadd.f32 %v3601, %v3617
        %v3624 = vadd.f32 %v3602, %v3617
        %v3625 = vadd.f32 %v3603, %v3617
        %v3626 = vadd.f32 %v3604, %v3617
        %v3627 = vadd.f32 %v3605, %v3617
        %v3628 = vadd.f32 %v3606, %v3617
        %v3629 = vadd.f32 %v3607, %v3617
        %v3630 = vadd.f32 %v3608, %v3617
        %v3631 = vadd.f32 %v3609, %v3617
        %v3632 = vadd.f32 %v3610, %v3617
        %v3633 = vadd.f32 %v3611, %v3617
        %v3634 = vadd.f32 %v3612, %v3617
        %v3635 = vxor.u32 %v3619, 2147483648
        %v3636 = vxor.u32 %v3620, 2147483648
        %v3637 = vxor.u32 %v3621, 2147483648
        %v3638 = vxor.u32 %v3622, 2147483648
        %v3639 = vxor.u32 %v3623, 2147483648
        %v3640 = vxor.u32 %v3624, 2147483648
        %v3641 = vxor.u32 %v3625, 2147483648
        %v3642 = vxor.u32 %v3626, 2147483648
        %v3643 = vxor.u32 %v3627, 2147483648
        %v3644 = vxor.u32 %v3628, 2147483648
        %v3645 = vxor.u32 %v3629, 2147483648
        %v3646 = vxor.u32 %v3630, 2147483648
        %v3647 = vxor.u32 %v3631, 2147483648
        %v3648 = vxor.u32 %v3632, 2147483648
        %v3649 = vxor.u32 %v3633, 2147483648
        %v3650 = vxor.u32 %v3634, 2147483648
        %v3651 = vmul.f32 %v3635, 1.442695
        %v3652 = vpow.pop %v3651
        %v3653 = vmul.f32 %v3636, 1.442695
        %v3654 = vpow.pop %v3653
        %v3655 = vmul.f32 %v3637, 1.442695
        %v3656 = vpow.pop %v3655
        %v3657 = vmul.f32 %v3638, 1.442695
        %v3658 = vpow.pop %v3657
        %v3659 = vmul.f32 %v3639, 1.442695
        %v3660 = vpow.pop %v3659
        %v3661 = vmul.f32 %v3640, 1.442695
        %v3662 = vpow.pop %v3661
        %v3663 = vmul.f32 %v3641, 1.442695
        %v3664 = vpow.pop %v3663
        %v3665 = vmul.f32 %v3642, 1.442695
        %v3666 = vpow.pop %v3665
        %v3667 = vmul.f32 %v3643, 1.442695
        %v3668 = vpow.pop %v3667
        %v3669 = vmul.f32 %v3644, 1.442695
        %v3670 = vpow.pop %v3669
        %v3671 = vmul.f32 %v3645, 1.442695
        %v3672 = vpow.pop %v3671
        %v3673 = vmul.f32 %v3646, 1.442695
        %v3674 = vpow.pop %v3673
        %v3675 = vmul.f32 %v3647, 1.442695
        %v3676 = vpow.pop %v3675
        %v3677 = vmul.f32 %v3648, 1.442695
        %v3678 = vpow.pop %v3677
        %v3679 = vmul.f32 %v3649, 1.442695
        %v3680 = vpow.pop %v3679
        %v3681 = vmul.f32 %v3650, 1.442695
        %v3682 = vpow.pop %v3681
        %v3683 = vadd.f32 %v3652, 1.0
        %v3684 = vadd.f32 %v3654, 1.0
        %v3685 = vadd.f32 %v3656, 1.0
        %v3686 = vadd.f32 %v3658, 1.0
        %v3687 = vadd.f32 %v3660, 1.0
        %v3688 = vadd.f32 %v3662, 1.0
        %v3689 = vadd.f32 %v3664, 1.0
        %v3690 = vadd.f32 %v3666, 1.0
        %v3691 = vadd.f32 %v3668, 1.0
        %v3692 = vadd.f32 %v3670, 1.0
        %v3693 = vadd.f32 %v3672, 1.0
        %v3694 = vadd.f32 %v3674, 1.0
        %v3695 = vadd.f32 %v3676, 1.0
        %v3696 = vadd.f32 %v3678, 1.0
        %v3697 = vadd.f32 %v3680, 1.0
        %v3698 = vadd.f32 %v3682, 1.0
        %v3699 = vrcp.pop %v3683
        %v3700 = vmul.f32 1.0, %v3699
        %v3701 = vrcp.pop %v3684
        %v3702 = vmul.f32 1.0, %v3701
        %v3703 = vrcp.pop %v3685
        %v3704 = vmul.f32 1.0, %v3703
        %v3705 = vrcp.pop %v3686
        %v3706 = vmul.f32 1.0, %v3705
        %v3707 = vrcp.pop %v3687
        %v3708 = vmul.f32 1.0, %v3707
        %v3709 = vrcp.pop %v3688
        %v3710 = vmul.f32 1.0, %v3709
        %v3711 = vrcp.pop %v3689
        %v3712 = vmul.f32 1.0, %v3711
        %v3713 = vrcp.pop %v3690
        %v3714 = vmul.f32 1.0, %v3713
        %v3715 = vrcp.pop %v3691
        %v3716 = vmul.f32 1.0, %v3715
        %v3717 = vrcp.pop %v3692
        %v3718 = vmul.f32 1.0, %v3717
        %v3719 = vrcp.pop %v3693
        %v3720 = vmul.f32 1.0, %v3719
        %v3721 = vrcp.pop %v3694
        %v3722 = vmul.f32 1.0, %v3721
        %v3723 = vrcp.pop %v3695
        %v3724 = vmul.f32 1.0, %v3723
        %v3725 = vrcp.pop %v3696
        %v3726 = vmul.f32 1.0, %v3725
        %v3727 = vrcp.pop %v3697
        %v3728 = vmul.f32 1.0, %v3727
        %v3729 = vrcp.pop %v3698
        %v3730 = vmul.f32 1.0, %v3729
        %3747 = vrot.lane.b32.xlu0 %v3700, 96
        %v3748 = vpop.permute.xlu0 %3747
        %3749 = vrot.lane.b32.xlu0 %v3702, 96
        %v3750 = vpop.permute.xlu0 %3749
        %3751 = vrot.lane.b32.xlu0 %v3704, 96
        %v3752 = vpop.permute.xlu0 %3751
        %3753 = vrot.lane.b32.xlu0 %v3706, 96
        %v3754 = vpop.permute.xlu0 %3753
        %3755 = vrot.lane.b32.xlu0 %v3708, 96
        %v3756 = vpop.permute.xlu0 %3755
        %3757 = vrot.lane.b32.xlu0 %v3710, 96
        %v3758 = vpop.permute.xlu0 %3757
        %3759 = vrot.lane.b32.xlu0 %v3712, 96
        %v3760 = vpop.permute.xlu0 %3759
        %3761 = vrot.lane.b32.xlu0 %v3714, 96
        %v3762 = vpop.permute.xlu0 %3761
        %3763 = vrot.lane.b32.xlu0 %v3716, 96
        %v3764 = vpop.permute.xlu0 %3763
        %3765 = vrot.lane.b32.xlu0 %v3718, 96
        %v3766 = vpop.permute.xlu0 %3765
        %3767 = vrot.lane.b32.xlu0 %v3720, 96
        %v3768 = vpop.permute.xlu0 %3767
        %3769 = vrot.lane.b32.xlu0 %v3722, 96
        %v3770 = vpop.permute.xlu0 %3769
        %3771 = vrot.lane.b32.xlu0 %v3724, 96
        %v3772 = vpop.permute.xlu0 %3771
        %3773 = vrot.lane.b32.xlu0 %v3726, 96
        %v3774 = vpop.permute.xlu0 %3773
        %3775 = vrot.lane.b32.xlu0 %v3728, 96
        %v3776 = vpop.permute.xlu0 %3775
        %3777 = vrot.lane.b32.xlu0 %v3730, 96
        %v3778 = vpop.permute.xlu0 %3777
        %v3795 = vmul.f32 %v3619, %v3748
        %v3796 = vmul.f32 %v3620, %v3750
        %v3797 = vmul.f32 %v3621, %v3752
        %v3798 = vmul.f32 %v3622, %v3754
        %v3799 = vmul.f32 %v3623, %v3756
        %v3800 = vmul.f32 %v3624, %v3758
        %v3801 = vmul.f32 %v3625, %v3760
        %v3802 = vmul.f32 %v3626, %v3762
        %v3803 = vmul.f32 %v3627, %v3764
        %v3804 = vmul.f32 %v3628, %v3766
        %v3805 = vmul.f32 %v3629, %v3768
        %v3806 = vmul.f32 %v3630, %v3770
        %v3807 = vmul.f32 %v3631, %v3772
        %v3808 = vmul.f32 %v3632, %v3774
        %v3809 = vmul.f32 %v3633, %v3776
        %v3810 = vmul.f32 %v3634, %v3778
        %v3811 = vadd.f32 %v3209, %v3795
        %v3812 = vadd.f32 %v3210, %v3796
        %v3813 = vadd.f32 %v3211, %v3797
        %v3814 = vadd.f32 %v3212, %v3798
        %v3815 = vadd.f32 %v3213, %v3799
        %v3816 = vadd.f32 %v3214, %v3800
        %v3817 = vadd.f32 %v3215, %v3801
        %v3818 = vadd.f32 %v3216, %v3802
        %v3819 = vadd.f32 %v3217, %v3803
        %v3820 = vadd.f32 %v3218, %v3804
        %v3821 = vadd.f32 %v3219, %v3805
        %v3822 = vadd.f32 %v3220, %v3806
        %v3823 = vadd.f32 %v3221, %v3807
        %v3824 = vadd.f32 %v3222, %v3808
        %v3825 = vadd.f32 %v3223, %v3809
        %v3826 = vadd.f32 %v3224, %v3810
        %v3827 = vmul.f32 %v3811, 0.70710677
        %v3828 = vmul.f32 %v3812, 0.70710677
        %v3829 = vmul.f32 %v3813, 0.70710677
        %v3830 = vmul.f32 %v3814, 0.70710677
        %v3831 = vmul.f32 %v3815, 0.70710677
        %v3832 = vmul.f32 %v3816, 0.70710677
        %v3833 = vmul.f32 %v3817, 0.70710677
        %v3834 = vmul.f32 %v3818, 0.70710677
        %v3835 = vmul.f32 %v3819, 0.70710677
        %v3836 = vmul.f32 %v3820, 0.70710677
        %v3837 = vmul.f32 %v3821, 0.70710677
        %v3838 = vmul.f32 %v3822, 0.70710677
        %v3839 = vmul.f32 %v3823, 0.70710677
        %v3840 = vmul.f32 %v3824, 0.70710677
        %v3841 = vmul.f32 %v3825, 0.70710677
        %v3842 = vmul.f32 %v3826, 0.70710677
        %v3843 = vpack.c.bf16 %v3828, %v3827
        %v3844 = vpack.c.bf16 %v3830, %v3829
        %v3845 = vpack.c.bf16 %v3832, %v3831
        %v3846 = vpack.c.bf16 %v3834, %v3833
        %v3847 = vpack.c.bf16 %v3836, %v3835
        %v3848 = vpack.c.bf16 %v3838, %v3837
        %v3849 = vpack.c.bf16 %v3840, %v3839
        %v3850 = vpack.c.bf16 %v3842, %v3841
        %v3859 = vunpack.c.l.b16 %v3843
        %v3860 = vunpack.c.h.b16 %v3843
        %v3861 = vunpack.c.l.b16 %v3844
        %v3862 = vunpack.c.h.b16 %v3844
        %v3863 = vunpack.c.l.b16 %v3845
        %v3864 = vunpack.c.h.b16 %v3845
        %v3865 = vunpack.c.l.b16 %v3846
        %v3866 = vunpack.c.h.b16 %v3846
        %v3867 = vunpack.c.l.b16 %v3847
        %v3868 = vunpack.c.h.b16 %v3847
        %v3869 = vunpack.c.l.b16 %v3848
        %v3870 = vunpack.c.h.b16 %v3848
        %v3871 = vunpack.c.l.b16 %v3849
        %v3872 = vunpack.c.h.b16 %v3849
        %v3873 = vunpack.c.l.b16 %v3850
        %v3874 = vunpack.c.h.b16 %v3850
        %v3875 = vpack.c.b16 %v3859, %v3859
        %v3876 = vpack.c.b16 %v3860, %v3860
        %v3877 = vpack.c.b16 %v3861, %v3861
        %v3878 = vpack.c.b16 %v3862, %v3862
        %v3879 = vpack.c.b16 %v3863, %v3863
        %v3880 = vpack.c.b16 %v3864, %v3864
        %v3881 = vpack.c.b16 %v3865, %v3865
        %v3882 = vpack.c.b16 %v3866, %v3866
        %v3883 = vpack.c.b16 %v3867, %v3867
        %v3884 = vpack.c.b16 %v3868, %v3868
        %v3885 = vpack.c.b16 %v3869, %v3869
        %v3886 = vpack.c.b16 %v3870, %v3870
        %v3887 = vpack.c.b16 %v3871, %v3871
        %v3888 = vpack.c.b16 %v3872, %v3872
        %v3889 = vpack.c.b16 %v3873, %v3873
        %v3890 = vpack.c.b16 %v3874, %v3874
        %vm3907 = vcmask 257024
        %3908 = vst.msk [vmem:[%s578] sm:$0xf] %vm3907, %v3875
        %3909 = vst.msk [vmem:[%s578 + $0x4] sm:$0xf] %vm3907, %v3876
        %3910 = vst.msk [vmem:[%s578 + $0x8] sm:$0xf] %vm3907, %v3877
        %3911 = vst.msk [vmem:[%s578 + $0xc] sm:$0xf] %vm3907, %v3878
        %3912 = vst.msk [vmem:[%s578 + $0x10] sm:$0xf] %vm3907, %v3879
        %3913 = vst.msk [vmem:[%s578 + $0x14] sm:$0xf] %vm3907, %v3880
        %3914 = vst.msk [vmem:[%s578 + $0x18] sm:$0xf] %vm3907, %v3881
        %3915 = vst.msk [vmem:[%s578 + $0x1c] sm:$0xf] %vm3907, %v3882
        %3916 = vst.msk [vmem:[%s578 + $0x20] sm:$0xf] %vm3907, %v3883
        %3917 = vst.msk [vmem:[%s578 + $0x24] sm:$0xf] %vm3907, %v3884
        %3918 = vst.msk [vmem:[%s578 + $0x28] sm:$0xf] %vm3907, %v3885
        %3919 = vst.msk [vmem:[%s578 + $0x2c] sm:$0xf] %vm3907, %v3886
        %3920 = vst.msk [vmem:[%s578 + $0x30] sm:$0xf] %vm3907, %v3887
        %3921 = vst.msk [vmem:[%s578 + $0x34] sm:$0xf] %vm3907, %v3888
        %3922 = vst.msk [vmem:[%s578 + $0x38] sm:$0xf] %vm3907, %v3889
        %3923 = vst.msk [vmem:[%s578 + $0x3c] sm:$0xf] %vm3907, %v3890
        %s3924 = smul.u32 16, %s31
        %p3925 = scmp.lt.s32.totalorder %s3924, 31
        %s3926 = scalar_select %p3925, %s3924, 31
        %s3927 = smul.addr %s3926, 4
        %s3928 = scalar_lea.vmem %s15, %s3927
        %s3929 = sand.u32 %s395, 1
        %s3930 = scalar_lea.sflag [#allocation3], %s3929
        %s3931 = sand.u32 %s395, 1
        %s3932 = smul.addr %s3931, 8
        %s3933 = scalar_lea.vmem [#allocation2], %s3932
        // Predicated region
        $region81: #{tpu_custom_call.1} parent=79 // pred_check
          %p3934 = pneg %p379
        $region82: #{tpu_custom_call.1} parent=79 // pred_check_branch
          %3936 = sbr.rel (%p3934) target = $region84
        $region83: #{tpu_custom_call.1} parent=79 // pred_region
          %s3937 = smul.u32 16, %s31
        $region84: #{tpu_custom_call.1} parent=79 // pred_fallthru
          _
        // Predicated region
        $region85: #{tpu_custom_call.1} parent=79 // pred_check
          %p3938 = pneg %p405
        $region86: #{tpu_custom_call.1} parent=79 // pred_check_branch
          %3940 = sbr.rel (%p3938) target = $region88
        $region87: #{tpu_custom_call.1} parent=79 // pred_region
          %s3942 = ssub.s32 128, 128
          %3943 = vsyncadd %s3930, %s3942
          %s3944 = smul.addr %s31, 128
          %s3945 = scalar_lea.hbm %s16, %s3944
          %s3947 = sshll.u32 %s3933, 4
          %s3948 = int_to_ptr.vmem [resolvable:$true] %s3947
          %3950 = dma.vmem_to_hbm [thread:$0]  %s3948, 128, %s3945, %s3930
        $region88: #{tpu_custom_call.1} parent=79 // pred_fallthru
          _
      $region80: #{tpu_custom_call.1} parent=5 // pred_fallthru
        _
      %p3951 = scmp.le.s32.totalorder 2, %s26
      // Predicated region
      $region89: #{tpu_custom_call.1} parent=5 // pred_check
        %p3952 = pneg %p3951
      $region90: #{tpu_custom_call.1} parent=5 // pred_check_branch
        %3954 = sbr.rel (%p3952) target = $region92
      $region91: #{tpu_custom_call.1} parent=5 // pred_region
        %s3955 = ssub.s32 %s26, 2
        // Predicated region
        $region93: #{tpu_custom_call.1} parent=91 // pred_check
          %p3956 = pneg %p385
        $region94: #{tpu_custom_call.1} parent=91 // pred_check_branch
          %3958 = sbr.rel (%p3956) target = $region96
        $region95: #{tpu_custom_call.1} parent=91 // pred_region
          %s3959 = smul.u32 16, %s32
          %p3960 = scmp.lt.s32.totalorder %s3959, 31
          %s3961 = scalar_select %p3960, %s3959, 31
          %s3962 = smul.addr %s3961, 4
          %s3963 = scalar_lea.vmem %s15, %s3962
        $region96: #{tpu_custom_call.1} parent=91 // pred_fallthru
          _
        // Predicated region
        $region97: #{tpu_custom_call.1} parent=91 // pred_check
          %p3964 = pneg %p411
        $region98: #{tpu_custom_call.1} parent=91 // pred_check_branch
          %3966 = sbr.rel (%p3964) target = $region100
        $region99: #{tpu_custom_call.1} parent=91 // pred_region
          %s3967 = sand.u32 %s396, 1
          %s3968 = scalar_lea.sflag [#allocation3], %s3967
          %s3969 = sand.u32 %s396, 1
          %s3970 = smul.addr %s3969, 8
          %s3971 = scalar_lea.vmem [#allocation2], %s3970
          %3972 = dma.done %s3968, 128
        $region100: #{tpu_custom_call.1} parent=91 // pred_fallthru
          _
      $region92: #{tpu_custom_call.1} parent=5 // pred_fallthru
        _
    $region6: #{tpu_custom_call.1} parent=1 // loop_footer
      %s30 = sadd.s32 1, %s26
    $region7: #{tpu_custom_call.1} parent=1 // loop_footer_branch
      %25 = sbr.rel target = $region3
    $region8: #{tpu_custom_call.1} parent=1 // loop_exit
      _
    %3973 = vsyncpa [#allocation3], 1
    %s3974 = scalar_lea.sflag [#allocation3], 1
    %3975 = vsyncpa %s3974, 1

</llo_original>
